<compile_context>
chip_gen: v6e
topology: v6e:2x2x1
jax: 0.10.0
libtpu: 0.0.40
codegen_flags: <defaults>
</compile_context>

<pallas_src>
import functools

import jax
import jax.numpy as jnp
from jax.experimental import pallas as pl
from jax.experimental.pallas import tpu as pltpu


# ----------------------------------------------------------------------------
# Simple kernels (stem conv and classifier head)
# ----------------------------------------------------------------------------

def _pw_affine_kernel(x_ref, w_ref, scale_ref, shift_ref, o_ref, *, relu):
    # x: (P, Cin), w: (Cin, Cout), scale/shift: (1, Cout).  1x1 conv == matmul
    # over pixels, fused BN (+ReLU).
    y = jnp.dot(x_ref[...], w_ref[...], preferred_element_type=jnp.float32)
    y = y * scale_ref[...] + shift_ref[...]
    if relu:
        y = jnp.maximum(y, 0.0)
    o_ref[...] = y.astype(o_ref.dtype)


def _pool_linear_kernel(x_ref, w_ref, b_ref, o_ref):
    # x: (N, HW, C); global average pool over HW then linear classifier.
    pooled = jnp.mean(x_ref[...], axis=1)  # (N, C)
    o_ref[...] = (jnp.dot(pooled, w_ref[...], preferred_element_type=jnp.float32)
                  + b_ref[...]).astype(o_ref.dtype)


# ----------------------------------------------------------------------------
# Fused Bottleneck kernels (one pallas_call per block)
# ----------------------------------------------------------------------------

def _bottleneck_s1_kernel(x2d_ref, x4d_ref, w1_ref, s1_ref, b1_ref,
                          w2_ref, s2_ref, b2_ref, w3_ref, s3_ref, b3_ref,
                          out_ref, t1_ref, xpad_ref, t2_ref,
                          *, n, h, w, cin, mid, cout):
    del cin
    # --- pw1 (shuffle folded into w1 columns) + BN + ReLU ------------------
    t1 = jnp.dot(x2d_ref[...], w1_ref[...], preferred_element_type=jnp.float32)
    t1_ref[...] = jnp.maximum(t1 * s1_ref[...] + b1_ref[...], 0.0)

    # --- 3x3 depthwise (stride 1) + BN + ReLU, zero halo built in VMEM -----
    xpad_ref[...] = jnp.zeros(xpad_ref.shape, xpad_ref.dtype)
    for i in range(n):
        for r in range(h):
            base = (i * h + r) * w
            xpad_ref[i, r + 1, 1:w + 1, :] = t1_ref[base:base + w, :]

    w2 = w2_ref[...]  # hoisted filter load
    acc = jnp.zeros((n, h, w, mid), jnp.float32)
    for dh in range(3):
        for dw in range(3):
            acc = acc + (xpad_ref[:, dh:dh + h, dw:dw + w, :]
                         * w2[dh:dh + 1, dw:dw + 1, :])
    t2_ref[...] = jnp.maximum(acc * s2_ref[...] + b2_ref[...], 0.0)

    # --- pw3 + BN, residual add + ReLU, written row by row ------------------
    w3 = w3_ref[...]
    s3 = s3_ref[...]
    b3 = b3_ref[...]
    for i in range(n):
        for r in range(h):
            t3 = jnp.dot(t2_ref[i, r], w3, preferred_element_type=jnp.float32)
            t3 = t3 * s3 + b3
            out_ref[i, r] = jnp.maximum(t3 + x4d_ref[i, r], 0.0).astype(out_ref.dtype)


def _bottleneck_s2_kernel(x2d_ref, x4d_ref, w1_ref, s1_ref, b1_ref,
                          w2_ref, s2_ref, b2_ref, w3_ref, s3_ref, b3_ref,
                          out_ref,
                          t1_ref,
                          q1_ee, q1_eo, q1_oe, q1_oo,
                          qx_ee, qx_eo, qx_oe, qx_oo,
                          t2_ref, pool_ref,
                          *, n, h, w, cin, mid, cout):
    del cout
    ho, wo = h // 2, w // 2

    # --- pw1 (shuffle folded into w1 columns) + BN + ReLU -------------------
    t1 = jnp.dot(x2d_ref[...], w1_ref[...], preferred_element_type=jnp.float32)
    t1_ref[...] = jnp.maximum(t1 * s1_ref[...] + b1_ref[...], 0.0)

    q1 = {("E", "E"): q1_ee, ("E", "O"): q1_eo, ("O", "E"): q1_oe, ("O", "O"): q1_oo}
    qx = {("E", "E"): qx_ee, ("E", "O"): qx_eo, ("O", "E"): qx_oe, ("O", "O"): qx_oo}
    for q in (*q1.values(), *qx.values()):
        q[...] = jnp.zeros(q.shape, q.dtype)

    # Scatter pw1 output into per-parity, zero-haloed quadrant scratches.
    # The block input was quadrant-permuted in the wrapper (even rows/cols
    # first), so everything here is a contiguous slice.
    for i in range(n):
        for r in range(h):
            rp = "E" if r < ho else "O"
            a = r % ho
            base = (i * h + r) * w
            q1[(rp, "E")][i, a + 1, 1:wo + 1, :] = t1_ref[base:base + wo, :]
            q1[(rp, "O")][i, a + 1, 1:wo + 1, :] = t1_ref[base + wo:base + w, :]

    # Shortcut-path quadrants come straight from the (permuted) input ref.
    for p, rp in enumerate(("E", "O")):
        for qidx, cp in enumerate(("E", "O")):
            qx[(rp, cp)][:, 1:ho + 1, 1:wo + 1, :] = (
                x4d_ref[:, p * ho:(p + 1) * ho, qidx * wo:(qidx + 1) * wo, :])

    # --- 3x3 depthwise conv, stride 2, computed only at strided outputs -----
    w2 = w2_ref[...]  # hoisted filter load
    acc = jnp.zeros((n, ho, wo, mid), jnp.float32)
    for dh in range(3):
        rp = "O" if dh % 2 == 0 else "E"
        rs = (dh + 1) // 2
        for dw in range(3):
            cp = "O" if dw % 2 == 0 else "E"
            cs = (dw + 1) // 2
            acc = acc + (q1[(rp, cp)][:, rs:rs + ho, cs:cs + wo, :]
                         * w2[dh:dh + 1, dw:dw + 1, :])
    t2_ref[...] = jnp.maximum(acc * s2_ref[...] + b2_ref[...], 0.0)

    # --- shortcut: AvgPool2d(3, stride=2, pad=1) (count_include_pad) + ReLU --
    pool = jnp.zeros((n, ho, wo, cin), jnp.float32)
    for dh in range(3):
        rp = "O" if dh % 2 == 0 else "E"
        rs = (dh + 1) // 2
        for dw in range(3):
            cp = "O" if dw % 2 == 0 else "E"
            cs = (dw + 1) // 2
            pool = pool + qx[(rp, cp)][:, rs:rs + ho, cs:cs + wo, :]
    pool_ref[...] = jnp.maximum(pool * (1.0 / 9.0), 0.0)

    # --- pw3 + BN + ReLU, concat with shortcut in-register, one store/row ---
    w3 = w3_ref[...]
    s3 = s3_ref[...]
    b3 = b3_ref[...]
    for i in range(n):
        for a in range(ho):
            t3 = jnp.dot(t2_ref[i, a], w3, preferred_element_type=jnp.float32)
            t3 = jnp.maximum(t3 * s3 + b3, 0.0)
            out_ref[i, a] = jnp.concatenate(
                [t3, pool_ref[i, a]], axis=-1).astype(out_ref.dtype)


# ----------------------------------------------------------------------------
# Wrappers
# ----------------------------------------------------------------------------

def bottleneck_forward(x_nhwc, p):
    n, h, w, cin = x_nhwc.shape
    mid = p["w2"].shape[-1]
    cout = p["w3"].shape[-1]
    weights = (p["w1"], p["s1"], p["b1"], p["w2"], p["s2"], p["b2"],
               p["w3"], p["s3"], p["b3"])

    if p["stride"] == 1:
        assert cin == cout, "stride-1 bottleneck requires in_planes == out_planes"
        kern = functools.partial(_bottleneck_s1_kernel,
                                 n=n, h=h, w=w, cin=cin, mid=mid, cout=cout)
        return pl.pallas_call(
            kern,
            out_shape=jax.ShapeDtypeStruct((n, h, w, cout), jnp.float32),
            scratch_shapes=[
                pltpu.VMEM((n * h * w, mid), jnp.float32),        # pw1 output
                pltpu.VMEM((n, h + 2, w + 2, mid), jnp.float32),  # zero-halo dw in
                pltpu.VMEM((n, h, w, mid), jnp.float32),          # dw output
            ],
        )(x_nhwc.reshape(n * h * w, cin), x_nhwc, *weights)

    # stride == 2: quadrant-permute once in XLA (even rows/cols first) so the
    # strided conv / avg-pool use contiguous slices only.
    ho, wo = h // 2, w // 2
    xq = (x_nhwc.reshape(n, ho, 2, wo, 2, cin)
          .transpose(0, 2, 1, 4, 3, 5)
          .reshape(n, h, w, cin))
    kern = functools.partial(_bottleneck_s2_kernel,
                             n=n, h=h, w=w, cin=cin, mid=mid, cout=cout)
    scratch = (
        [pltpu.VMEM((n * h * w, mid), jnp.float32)]                              # pw1 out
        + [pltpu.VMEM((n, ho + 1, wo + 1, mid), jnp.float32) for _ in range(4)]  # t1 quads
        + [pltpu.VMEM((n, ho + 1, wo + 1, cin), jnp.float32) for _ in range(4)]  # x quads
        + [pltpu.VMEM((n, ho, wo, mid), jnp.float32),                            # dw out
           pltpu.VMEM((n, ho, wo, cin), jnp.float32)]                            # pool out
    )
    return pl.pallas_call(
        kern,
        out_shape=jax.ShapeDtypeStruct((n, ho, wo, cout + cin), jnp.float32),
        scratch_shapes=scratch,
    )(xq.reshape(n * h * w, cin), xq, *weights)


# ----------------------------------------------------------------------------
# Deterministic parameter construction (BN folded; shuffle folded into w1)
# ----------------------------------------------------------------------------

def make_bn(key, c, eps=1e-5):
    k1, k2, k3, k4 = jax.random.split(key, 4)
    gamma = 1.0 + 0.1 * jax.random.normal(k1, (c,), jnp.float32)
    beta = 0.1 * jax.random.normal(k2, (c,), jnp.float32)
    mean = 0.1 * jax.random.normal(k3, (c,), jnp.float32)
    var = 0.5 + 0.5 * jnp.abs(jax.random.normal(k4, (c,), jnp.float32))
    scale = gamma / jnp.sqrt(var + eps)
    shift = beta - mean * scale
    return scale, shift


def make_grouped_pw_weight(key, cin, cout, groups):
    # PyTorch grouped 1x1 conv -> block-diagonal (Cin, Cout) matmul weight.
    cin_g, cout_g = cin // groups, cout // groups
    w = jnp.zeros((cin, cout), jnp.float32)
    keys = jax.random.split(key, groups)
    std = (2.0 / cin_g) ** 0.5
    for i in range(groups):
        wg = std * jax.random.normal(keys[i], (cin_g, cout_g), jnp.float32)
        w = w.at[i * cin_g:(i + 1) * cin_g, i * cout_g:(i + 1) * cout_g].set(wg)
    return w


def init_bottleneck(key, in_planes, out_planes, stride, groups):
    g = 1 if in_planes == 24 else groups
    mid = out_planes // 4
    ks = jax.random.split(key, 6)
    w1 = make_grouped_pw_weight(ks[0], in_planes, mid, g)
    s1, b1 = make_bn(ks[1], mid)
    # Fold ShuffleBlock(groups=g): a static permutation of the mid channels, so
    # permute w1 columns and bn1 scale/shift -- the runtime shuffle disappears.
    perm = jnp.arange(mid).reshape(g, mid // g).T.reshape(-1)
    w1, s1, b1 = w1[:, perm], s1[perm], b1[perm]
    s2, b2 = make_bn(ks[3], mid)
    s3, b3 = make_bn(ks[5], out_planes)
    return {
        "stride": stride,
        "w1": w1, "s1": s1.reshape(1, mid), "b1": b1.reshape(1, mid),
        "w2": 0.3 * jax.random.normal(ks[2], (3, 3, mid), jnp.float32),
        "s2": s2.reshape(1, 1, 1, mid), "b2": b2.reshape(1, 1, 1, mid),
        "w3": make_grouped_pw_weight(ks[4], mid, out_planes, groups),
        "s3": s3.reshape(1, out_planes), "b3": b3.reshape(1, out_planes),
    }


def init_shufflenet(key, cfg):
    out_planes, num_blocks, groups = cfg["out_planes"], cfg["num_blocks"], cfg["groups"]
    ks = jax.random.split(key, 5)
    s, b = make_bn(ks[1], 24)
    params = {
        "conv1_w": make_grouped_pw_weight(ks[0], 3, 24, 1),
        "s_conv1": s.reshape(1, 24), "b_conv1": b.reshape(1, 24),
        "linear_w": 0.1 * jax.random.normal(ks[3], (out_planes[2], 10), jnp.float32),
        "linear_b": 0.1 * jax.random.normal(ks[4], (1, 10), jnp.float32),
    }
    blocks = []
    in_planes = 24
    bkeys = jax.random.split(ks[2], sum(num_blocks))
    bi = 0
    for lout, nb in zip(out_planes, num_blocks):
        for i in range(nb):
            if i == 0:
                blocks.append(init_bottleneck(bkeys[bi], in_planes, lout - in_planes, 2, groups))
            else:
                blocks.append(init_bottleneck(bkeys[bi], in_planes, lout, 1, groups))
            in_planes = lout
            bi += 1
    params["blocks"] = blocks
    return params


# ----------------------------------------------------------------------------
# Forward pass
# ----------------------------------------------------------------------------

def shufflenet_forward(x_nchw, params):
    x = jnp.transpose(x_nchw, (0, 2, 3, 1)).astype(jnp.float32)  # NCHW -> NHWC
    n, h, w, _ = x.shape
    out = pl.pallas_call(
        functools.partial(_pw_affine_kernel, relu=True),
        out_shape=jax.ShapeDtypeStruct((n * h * w, 24), jnp.float32),
    )(x.reshape(n * h * w, 3), params["conv1_w"], params["s_conv1"], params["b_conv1"])
    out = out.reshape(n, h, w, 24)

    for bp in params["blocks"]:
        out = bottleneck_forward(out, bp)

    n2, h2, w2, c2 = out.shape
    assert h2 == 4 and w2 == 4, "F.avg_pool2d(out, 4) expects a 4x4 feature map"
    logits = pl.pallas_call(
        _pool_linear_kernel,
        out_shape=jax.ShapeDtypeStruct((n2, 10), jnp.float32),
    )(out.reshape(n2, h2 * w2, c2), params["linear_w"], params["linear_b"])
    return logits


# ----------------------------------------------------------------------------

if __name__ == "__main__":
    cfg = {"out_planes": [48, 96, 192], "num_blocks": [1, 2, 1], "groups": 2}
    key = jax.random.PRNGKey(0)
    kx, kp = jax.random.split(key)
    x = jax.random.normal(kx, (2, 3, 32, 32), jnp.float32)  # NCHW like PyTorch
    params = init_shufflenet(kp, cfg)

    logits = shufflenet_forward(x, params)
    jax.block_until_ready(logits)
    assert logits.shape == (2, 10)
    assert bool(jnp.all(jnp.isfinite(logits)))
    print("KERNEL_OK")
</pallas_src>

<mosaic_0001>
module attributes {stable_mosaic.version = 11 : i64} {
  func.func @_pw_affine_kernel(%arg0: memref<2048x3xf32, #tpu.memory_space<vmem>>, %arg1: memref<3x24xf32, #tpu.memory_space<vmem>>, %arg2: memref<1x24xf32, #tpu.memory_space<vmem>>, %arg3: memref<1x24xf32, #tpu.memory_space<vmem>>, %arg4: memref<2048x24xf32, #tpu.memory_space<vmem>>) attributes {dimension_semantics = [], scalar_prefetch = 0 : i64, scratch_operands = 0 : i64, tpu.core_type = #tpu.core_type<tc>} {
    %c0 = arith.constant 0 : index
    %c0_0 = arith.constant 0 : index
    %0 = vector.load %arg0[%c0, %c0_0] : memref<2048x3xf32, #tpu.memory_space<vmem>>, vector<2048x3xf32>
    %c0_1 = arith.constant 0 : index
    %c0_2 = arith.constant 0 : index
    %1 = vector.load %arg1[%c0_1, %c0_2] : memref<3x24xf32, #tpu.memory_space<vmem>>, vector<3x24xf32>
    %cst = arith.constant dense<0.000000e+00> : vector<2048x24xf32>
    %2 = tpu.matmul %0, %1, %cst {dimension_numbers = #tpu.dot_dimension_numbers<[1], [0], [0], [1], [0, 0, 1, 1], [], []>} : vector<2048x3xf32>, vector<3x24xf32>, vector<2048x24xf32> -> vector<2048x24xf32>
    %c0_3 = arith.constant 0 : index
    %c0_4 = arith.constant 0 : index
    %3 = vector.load %arg2[%c0_3, %c0_4] : memref<1x24xf32, #tpu.memory_space<vmem>>, vector<1x24xf32>
    %4 = vector.broadcast %3 : vector<1x24xf32> to vector<2048x24xf32>
    %5 = arith.mulf %2, %4 : vector<2048x24xf32>
    %c0_5 = arith.constant 0 : index
    %c0_6 = arith.constant 0 : index
    %6 = vector.load %arg3[%c0_5, %c0_6] : memref<1x24xf32, #tpu.memory_space<vmem>>, vector<1x24xf32>
    %7 = vector.broadcast %6 : vector<1x24xf32> to vector<2048x24xf32>
    %8 = arith.addf %5, %7 : vector<2048x24xf32>
    %cst_7 = arith.constant 0.000000e+00 : f32
    %9 = vector.broadcast %cst_7 : f32 to vector<2048x24xf32>
    %10 = arith.maximumf %8, %9 : vector<2048x24xf32>
    %c0_8 = arith.constant 0 : index
    %c0_9 = arith.constant 0 : index
    %11 = vector.load %arg4[%c0_8, %c0_9] : memref<2048x24xf32, #tpu.memory_space<vmem>>, vector<2048x24xf32>
    tpu.vector_store %arg4[%c0_8, %c0_9], %10 {strides = array<i32>} : memref<2048x24xf32, #tpu.memory_space<vmem>>, vector<2048x24xf32>,
    return
  }
}

</mosaic_0001>

<llo_original>
// kernel: tpu_custom_call.1
$region0: #{tpu_custom_call.1}
  #allocation0 [shape = 'u32[]', space=smem, size = 0x4, offset = 0x4, fixed_abs, tag = 'smem constant byte address 0x4 - core index']
  #allocation1 [shape = 'u32[144,128]{1,0:T(1,128)}', space=vmem, size = 0x12000, scoped, tag = 'internal scratch']
  %s0 = inlined_call_operand.vmem [shape: f32[2048,3], index: 0, kind: input, shape index: {}]
  %s1 = inlined_call_operand.vmem [shape: f32[3,24], index: 1, kind: input, shape index: {}]
  %s2 = inlined_call_operand.vmem [shape: f32[1,24], index: 2, kind: input, shape index: {}]
  %s3 = inlined_call_operand.vmem [shape: f32[1,24], index: 3, kind: input, shape index: {}]
  %s4 = inlined_call_operand.vmem [shape: f32[2048,24], index: 4, kind: output, shape index: {}]
  %s5 = sld [smem:[#allocation0]]
  $region26: #{tpu_custom_call.1} parent=0
    _
  %s7 = ssub.s32 1, %s5
  %s8 = scalar_select 0, %s7, %s5
  // Predicated region
  $region2: #{tpu_custom_call.1} parent=0 // pred_check
    _
  $region3: #{tpu_custom_call.1} parent=0 // pred_check_branch
    %10 = sbr.rel (0) target = $region5
  $region4: #{tpu_custom_call.1} parent=0 // pred_region
    _
  $region5: #{tpu_custom_call.1} parent=0 // pred_fallthru
    _
  // Predicated region
  $region6: #{tpu_custom_call.1} parent=0 // pred_check
    _
  $region7: #{tpu_custom_call.1} parent=0 // pred_check_branch
    %12 = sbr.rel (0) target = $region9
  $region8: #{tpu_custom_call.1} parent=0 // pred_region
    _
  $region9: #{tpu_custom_call.1} parent=0 // pred_fallthru
    _
  // Predicated region
  $region10: #{tpu_custom_call.1} parent=0 // pred_check
    _
  $region11: #{tpu_custom_call.1} parent=0 // pred_check_branch
    %14 = sbr.rel (0) target = $region13
  $region12: #{tpu_custom_call.1} parent=0 // pred_region
    _
  $region13: #{tpu_custom_call.1} parent=0 // pred_fallthru
    _
  // Predicated region
  $region14: #{tpu_custom_call.1} parent=0 // pred_check
    _
  $region15: #{tpu_custom_call.1} parent=0 // pred_check_branch
    %16 = sbr.rel (0) target = $region17
  $region16: #{tpu_custom_call.1} parent=0 // pred_region
    _
  $region17: #{tpu_custom_call.1} parent=0 // pred_fallthru
    _
  %v17 = vld [vmem:[%s0] sm:$0xff]
  %v18 = vld [vmem:[%s0 + $0x8] sm:$0xff]
  %v19 = vld [vmem:[%s0 + $0x10] sm:$0xff]
  %v20 = vld [vmem:[%s0 + $0x18] sm:$0xff]
  %v21 = vld [vmem:[%s0 + $0x20] sm:$0xff]
  %v22 = vld [vmem:[%s0 + $0x28] sm:$0xff]
  %v23 = vld [vmem:[%s0 + $0x30] sm:$0xff]
  %v24 = vld [vmem:[%s0 + $0x38] sm:$0xff]
  %v25 = vld [vmem:[%s0 + $0x40] sm:$0xff]
  %v26 = vld [vmem:[%s0 + $0x48] sm:$0xff]
  %v27 = vld [vmem:[%s0 + $0x50] sm:$0xff]
  %v28 = vld [vmem:[%s0 + $0x58] sm:$0xff]
  %v29 = vld [vmem:[%s0 + $0x60] sm:$0xff]
  %v30 = vld [vmem:[%s0 + $0x68] sm:$0xff]
  %v31 = vld [vmem:[%s0 + $0x70] sm:$0xff]
  %v32 = vld [vmem:[%s0 + $0x78] sm:$0xff]
  %v33 = vld [vmem:[%s0 + $0x80] sm:$0xff]
  %v34 = vld [vmem:[%s0 + $0x88] sm:$0xff]
  %v35 = vld [vmem:[%s0 + $0x90] sm:$0xff]
  %v36 = vld [vmem:[%s0 + $0x98] sm:$0xff]
  %v37 = vld [vmem:[%s0 + $0xa0] sm:$0xff]
  %v38 = vld [vmem:[%s0 + $0xa8] sm:$0xff]
  %v39 = vld [vmem:[%s0 + $0xb0] sm:$0xff]
  %v40 = vld [vmem:[%s0 + $0xb8] sm:$0xff]
  %v41 = vld [vmem:[%s0 + $0xc0] sm:$0xff]
  %v42 = vld [vmem:[%s0 + $0xc8] sm:$0xff]
  %v43 = vld [vmem:[%s0 + $0xd0] sm:$0xff]
  %v44 = vld [vmem:[%s0 + $0xd8] sm:$0xff]
  %v45 = vld [vmem:[%s0 + $0xe0] sm:$0xff]
  %v46 = vld [vmem:[%s0 + $0xe8] sm:$0xff]
  %v47 = vld [vmem:[%s0 + $0xf0] sm:$0xff]
  %v48 = vld [vmem:[%s0 + $0xf8] sm:$0xff]
  %v49 = vld [vmem:[%s0 + $0x100] sm:$0xff]
  %v50 = vld [vmem:[%s0 + $0x108] sm:$0xff]
  %v51 = vld [vmem:[%s0 + $0x110] sm:$0xff]
  %v52 = vld [vmem:[%s0 + $0x118] sm:$0xff]
  %v53 = vld [vmem:[%s0 + $0x120] sm:$0xff]
  %v54 = vld [vmem:[%s0 + $0x128] sm:$0xff]
  %v55 = vld [vmem:[%s0 + $0x130] sm:$0xff]
  %v56 = vld [vmem:[%s0 + $0x138] sm:$0xff]
  %v57 = vld [vmem:[%s0 + $0x140] sm:$0xff]
  %v58 = vld [vmem:[%s0 + $0x148] sm:$0xff]
  %v59 = vld [vmem:[%s0 + $0x150] sm:$0xff]
  %v60 = vld [vmem:[%s0 + $0x158] sm:$0xff]
  %v61 = vld [vmem:[%s0 + $0x160] sm:$0xff]
  %v62 = vld [vmem:[%s0 + $0x168] sm:$0xff]
  %v63 = vld [vmem:[%s0 + $0x170] sm:$0xff]
  %v64 = vld [vmem:[%s0 + $0x178] sm:$0xff]
  %v65 = vld [vmem:[%s0 + $0x180] sm:$0xff]
  %v66 = vld [vmem:[%s0 + $0x188] sm:$0xff]
  %v67 = vld [vmem:[%s0 + $0x190] sm:$0xff]
  %v68 = vld [vmem:[%s0 + $0x198] sm:$0xff]
  %v69 = vld [vmem:[%s0 + $0x1a0] sm:$0xff]
  %v70 = vld [vmem:[%s0 + $0x1a8] sm:$0xff]
  %v71 = vld [vmem:[%s0 + $0x1b0] sm:$0xff]
  %v72 = vld [vmem:[%s0 + $0x1b8] sm:$0xff]
  %v73 = vld [vmem:[%s0 + $0x1c0] sm:$0xff]
  %v74 = vld [vmem:[%s0 + $0x1c8] sm:$0xff]
  %v75 = vld [vmem:[%s0 + $0x1d0] sm:$0xff]
  %v76 = vld [vmem:[%s0 + $0x1d8] sm:$0xff]
  %v77 = vld [vmem:[%s0 + $0x1e0] sm:$0xff]
  %v78 = vld [vmem:[%s0 + $0x1e8] sm:$0xff]
  %v79 = vld [vmem:[%s0 + $0x1f0] sm:$0xff]
  %v80 = vld [vmem:[%s0 + $0x1f8] sm:$0xff]
  %v81 = vld [vmem:[%s0 + $0x200] sm:$0xff]
  %v82 = vld [vmem:[%s0 + $0x208] sm:$0xff]
  %v83 = vld [vmem:[%s0 + $0x210] sm:$0xff]
  %v84 = vld [vmem:[%s0 + $0x218] sm:$0xff]
  %v85 = vld [vmem:[%s0 + $0x220] sm:$0xff]
  %v86 = vld [vmem:[%s0 + $0x228] sm:$0xff]
  %v87 = vld [vmem:[%s0 + $0x230] sm:$0xff]
  %v88 = vld [vmem:[%s0 + $0x238] sm:$0xff]
  %v89 = vld [vmem:[%s0 + $0x240] sm:$0xff]
  %v90 = vld [vmem:[%s0 + $0x248] sm:$0xff]
  %v91 = vld [vmem:[%s0 + $0x250] sm:$0xff]
  %v92 = vld [vmem:[%s0 + $0x258] sm:$0xff]
  %v93 = vld [vmem:[%s0 + $0x260] sm:$0xff]
  %v94 = vld [vmem:[%s0 + $0x268] sm:$0xff]
  %v95 = vld [vmem:[%s0 + $0x270] sm:$0xff]
  %v96 = vld [vmem:[%s0 + $0x278] sm:$0xff]
  %v97 = vld [vmem:[%s0 + $0x280] sm:$0xff]
  %v98 = vld [vmem:[%s0 + $0x288] sm:$0xff]
  %v99 = vld [vmem:[%s0 + $0x290] sm:$0xff]
  %v100 = vld [vmem:[%s0 + $0x298] sm:$0xff]
  %v101 = vld [vmem:[%s0 + $0x2a0] sm:$0xff]
  %v102 = vld [vmem:[%s0 + $0x2a8] sm:$0xff]
  %v103 = vld [vmem:[%s0 + $0x2b0] sm:$0xff]
  %v104 = vld [vmem:[%s0 + $0x2b8] sm:$0xff]
  %v105 = vld [vmem:[%s0 + $0x2c0] sm:$0xff]
  %v106 = vld [vmem:[%s0 + $0x2c8] sm:$0xff]
  %v107 = vld [vmem:[%s0 + $0x2d0] sm:$0xff]
  %v108 = vld [vmem:[%s0 + $0x2d8] sm:$0xff]
  %v109 = vld [vmem:[%s0 + $0x2e0] sm:$0xff]
  %v110 = vld [vmem:[%s0 + $0x2e8] sm:$0xff]
  %v111 = vld [vmem:[%s0 + $0x2f0] sm:$0xff]
  %v112 = vld [vmem:[%s0 + $0x2f8] sm:$0xff]
  %v113 = vld [vmem:[%s0 + $0x300] sm:$0xff]
  %v114 = vld [vmem:[%s0 + $0x308] sm:$0xff]
  %v115 = vld [vmem:[%s0 + $0x310] sm:$0xff]
  %v116 = vld [vmem:[%s0 + $0x318] sm:$0xff]
  %v117 = vld [vmem:[%s0 + $0x320] sm:$0xff]
  %v118 = vld [vmem:[%s0 + $0x328] sm:$0xff]
  %v119 = vld [vmem:[%s0 + $0x330] sm:$0xff]
  %v120 = vld [vmem:[%s0 + $0x338] sm:$0xff]
  %v121 = vld [vmem:[%s0 + $0x340] sm:$0xff]
  %v122 = vld [vmem:[%s0 + $0x348] sm:$0xff]
  %v123 = vld [vmem:[%s0 + $0x350] sm:$0xff]
  %v124 = vld [vmem:[%s0 + $0x358] sm:$0xff]
  %v125 = vld [vmem:[%s0 + $0x360] sm:$0xff]
  %v126 = vld [vmem:[%s0 + $0x368] sm:$0xff]
  %v127 = vld [vmem:[%s0 + $0x370] sm:$0xff]
  %v128 = vld [vmem:[%s0 + $0x378] sm:$0xff]
  %v129 = vld [vmem:[%s0 + $0x380] sm:$0xff]
  %v130 = vld [vmem:[%s0 + $0x388] sm:$0xff]
  %v131 = vld [vmem:[%s0 + $0x390] sm:$0xff]
  %v132 = vld [vmem:[%s0 + $0x398] sm:$0xff]
  %v133 = vld [vmem:[%s0 + $0x3a0] sm:$0xff]
  %v134 = vld [vmem:[%s0 + $0x3a8] sm:$0xff]
  %v135 = vld [vmem:[%s0 + $0x3b0] sm:$0xff]
  %v136 = vld [vmem:[%s0 + $0x3b8] sm:$0xff]
  %v137 = vld [vmem:[%s0 + $0x3c0] sm:$0xff]
  %v138 = vld [vmem:[%s0 + $0x3c8] sm:$0xff]
  %v139 = vld [vmem:[%s0 + $0x3d0] sm:$0xff]
  %v140 = vld [vmem:[%s0 + $0x3d8] sm:$0xff]
  %v141 = vld [vmem:[%s0 + $0x3e0] sm:$0xff]
  %v142 = vld [vmem:[%s0 + $0x3e8] sm:$0xff]
  %v143 = vld [vmem:[%s0 + $0x3f0] sm:$0xff]
  %v144 = vld [vmem:[%s0 + $0x3f8] sm:$0xff]
  %v145 = vld [vmem:[%s0 + $0x400] sm:$0xff]
  %v146 = vld [vmem:[%s0 + $0x408] sm:$0xff]
  %v147 = vld [vmem:[%s0 + $0x410] sm:$0xff]
  %v148 = vld [vmem:[%s0 + $0x418] sm:$0xff]
  %v149 = vld [vmem:[%s0 + $0x420] sm:$0xff]
  %v150 = vld [vmem:[%s0 + $0x428] sm:$0xff]
  %v151 = vld [vmem:[%s0 + $0x430] sm:$0xff]
  %v152 = vld [vmem:[%s0 + $0x438] sm:$0xff]
  %v153 = vld [vmem:[%s0 + $0x440] sm:$0xff]
  %v154 = vld [vmem:[%s0 + $0x448] sm:$0xff]
  %v155 = vld [vmem:[%s0 + $0x450] sm:$0xff]
  %v156 = vld [vmem:[%s0 + $0x458] sm:$0xff]
  %v157 = vld [vmem:[%s0 + $0x460] sm:$0xff]
  %v158 = vld [vmem:[%s0 + $0x468] sm:$0xff]
  %v159 = vld [vmem:[%s0 + $0x470] sm:$0xff]
  %v160 = vld [vmem:[%s0 + $0x478] sm:$0xff]
  %v161 = vld [vmem:[%s0 + $0x480] sm:$0xff]
  %v162 = vld [vmem:[%s0 + $0x488] sm:$0xff]
  %v163 = vld [vmem:[%s0 + $0x490] sm:$0xff]
  %v164 = vld [vmem:[%s0 + $0x498] sm:$0xff]
  %v165 = vld [vmem:[%s0 + $0x4a0] sm:$0xff]
  %v166 = vld [vmem:[%s0 + $0x4a8] sm:$0xff]
  %v167 = vld [vmem:[%s0 + $0x4b0] sm:$0xff]
  %v168 = vld [vmem:[%s0 + $0x4b8] sm:$0xff]
  %v169 = vld [vmem:[%s0 + $0x4c0] sm:$0xff]
  %v170 = vld [vmem:[%s0 + $0x4c8] sm:$0xff]
  %v171 = vld [vmem:[%s0 + $0x4d0] sm:$0xff]
  %v172 = vld [vmem:[%s0 + $0x4d8] sm:$0xff]
  %v173 = vld [vmem:[%s0 + $0x4e0] sm:$0xff]
  %v174 = vld [vmem:[%s0 + $0x4e8] sm:$0xff]
  %v175 = vld [vmem:[%s0 + $0x4f0] sm:$0xff]
  %v176 = vld [vmem:[%s0 + $0x4f8] sm:$0xff]
  %v177 = vld [vmem:[%s0 + $0x500] sm:$0xff]
  %v178 = vld [vmem:[%s0 + $0x508] sm:$0xff]
  %v179 = vld [vmem:[%s0 + $0x510] sm:$0xff]
  %v180 = vld [vmem:[%s0 + $0x518] sm:$0xff]
  %v181 = vld [vmem:[%s0 + $0x520] sm:$0xff]
  %v182 = vld [vmem:[%s0 + $0x528] sm:$0xff]
  %v183 = vld [vmem:[%s0 + $0x530] sm:$0xff]
  %v184 = vld [vmem:[%s0 + $0x538] sm:$0xff]
  %v185 = vld [vmem:[%s0 + $0x540] sm:$0xff]
  %v186 = vld [vmem:[%s0 + $0x548] sm:$0xff]
  %v187 = vld [vmem:[%s0 + $0x550] sm:$0xff]
  %v188 = vld [vmem:[%s0 + $0x558] sm:$0xff]
  %v189 = vld [vmem:[%s0 + $0x560] sm:$0xff]
  %v190 = vld [vmem:[%s0 + $0x568] sm:$0xff]
  %v191 = vld [vmem:[%s0 + $0x570] sm:$0xff]
  %v192 = vld [vmem:[%s0 + $0x578] sm:$0xff]
  %v193 = vld [vmem:[%s0 + $0x580] sm:$0xff]
  %v194 = vld [vmem:[%s0 + $0x588] sm:$0xff]
  %v195 = vld [vmem:[%s0 + $0x590] sm:$0xff]
  %v196 = vld [vmem:[%s0 + $0x598] sm:$0xff]
  %v197 = vld [vmem:[%s0 + $0x5a0] sm:$0xff]
  %v198 = vld [vmem:[%s0 + $0x5a8] sm:$0xff]
  %v199 = vld [vmem:[%s0 + $0x5b0] sm:$0xff]
  %v200 = vld [vmem:[%s0 + $0x5b8] sm:$0xff]
  %v201 = vld [vmem:[%s0 + $0x5c0] sm:$0xff]
  %v202 = vld [vmem:[%s0 + $0x5c8] sm:$0xff]
  %v203 = vld [vmem:[%s0 + $0x5d0] sm:$0xff]
  %v204 = vld [vmem:[%s0 + $0x5d8] sm:$0xff]
  %v205 = vld [vmem:[%s0 + $0x5e0] sm:$0xff]
  %v206 = vld [vmem:[%s0 + $0x5e8] sm:$0xff]
  %v207 = vld [vmem:[%s0 + $0x5f0] sm:$0xff]
  %v208 = vld [vmem:[%s0 + $0x5f8] sm:$0xff]
  %v209 = vld [vmem:[%s0 + $0x600] sm:$0xff]
  %v210 = vld [vmem:[%s0 + $0x608] sm:$0xff]
  %v211 = vld [vmem:[%s0 + $0x610] sm:$0xff]
  %v212 = vld [vmem:[%s0 + $0x618] sm:$0xff]
  %v213 = vld [vmem:[%s0 + $0x620] sm:$0xff]
  %v214 = vld [vmem:[%s0 + $0x628] sm:$0xff]
  %v215 = vld [vmem:[%s0 + $0x630] sm:$0xff]
  %v216 = vld [vmem:[%s0 + $0x638] sm:$0xff]
  %v217 = vld [vmem:[%s0 + $0x640] sm:$0xff]
  %v218 = vld [vmem:[%s0 + $0x648] sm:$0xff]
  %v219 = vld [vmem:[%s0 + $0x650] sm:$0xff]
  %v220 = vld [vmem:[%s0 + $0x658] sm:$0xff]
  %v221 = vld [vmem:[%s0 + $0x660] sm:$0xff]
  %v222 = vld [vmem:[%s0 + $0x668] sm:$0xff]
  %v223 = vld [vmem:[%s0 + $0x670] sm:$0xff]
  %v224 = vld [vmem:[%s0 + $0x678] sm:$0xff]
  %v225 = vld [vmem:[%s0 + $0x680] sm:$0xff]
  %v226 = vld [vmem:[%s0 + $0x688] sm:$0xff]
  %v227 = vld [vmem:[%s0 + $0x690] sm:$0xff]
  %v228 = vld [vmem:[%s0 + $0x698] sm:$0xff]
  %v229 = vld [vmem:[%s0 + $0x6a0] sm:$0xff]
  %v230 = vld [vmem:[%s0 + $0x6a8] sm:$0xff]
  %v231 = vld [vmem:[%s0 + $0x6b0] sm:$0xff]
  %v232 = vld [vmem:[%s0 + $0x6b8] sm:$0xff]
  %v233 = vld [vmem:[%s0 + $0x6c0] sm:$0xff]
  %v234 = vld [vmem:[%s0 + $0x6c8] sm:$0xff]
  %v235 = vld [vmem:[%s0 + $0x6d0] sm:$0xff]
  %v236 = vld [vmem:[%s0 + $0x6d8] sm:$0xff]
  %v237 = vld [vmem:[%s0 + $0x6e0] sm:$0xff]
  %v238 = vld [vmem:[%s0 + $0x6e8] sm:$0xff]
  %v239 = vld [vmem:[%s0 + $0x6f0] sm:$0xff]
  %v240 = vld [vmem:[%s0 + $0x6f8] sm:$0xff]
  %v241 = vld [vmem:[%s0 + $0x700] sm:$0xff]
  %v242 = vld [vmem:[%s0 + $0x708] sm:$0xff]
  %v243 = vld [vmem:[%s0 + $0x710] sm:$0xff]
  %v244 = vld [vmem:[%s0 + $0x718] sm:$0xff]
  %v245 = vld [vmem:[%s0 + $0x720] sm:$0xff]
  %v246 = vld [vmem:[%s0 + $0x728] sm:$0xff]
  %v247 = vld [vmem:[%s0 + $0x730] sm:$0xff]
  %v248 = vld [vmem:[%s0 + $0x738] sm:$0xff]
  %v249 = vld [vmem:[%s0 + $0x740] sm:$0xff]
  %v250 = vld [vmem:[%s0 + $0x748] sm:$0xff]
  %v251 = vld [vmem:[%s0 + $0x750] sm:$0xff]
  %v252 = vld [vmem:[%s0 + $0x758] sm:$0xff]
  %v253 = vld [vmem:[%s0 + $0x760] sm:$0xff]
  %v254 = vld [vmem:[%s0 + $0x768] sm:$0xff]
  %v255 = vld [vmem:[%s0 + $0x770] sm:$0xff]
  %v256 = vld [vmem:[%s0 + $0x778] sm:$0xff]
  %v257 = vld [vmem:[%s0 + $0x780] sm:$0xff]
  %v258 = vld [vmem:[%s0 + $0x788] sm:$0xff]
  %v259 = vld [vmem:[%s0 + $0x790] sm:$0xff]
  %v260 = vld [vmem:[%s0 + $0x798] sm:$0xff]
  %v261 = vld [vmem:[%s0 + $0x7a0] sm:$0xff]
  %v262 = vld [vmem:[%s0 + $0x7a8] sm:$0xff]
  %v263 = vld [vmem:[%s0 + $0x7b0] sm:$0xff]
  %v264 = vld [vmem:[%s0 + $0x7b8] sm:$0xff]
  %v265 = vld [vmem:[%s0 + $0x7c0] sm:$0xff]
  %v266 = vld [vmem:[%s0 + $0x7c8] sm:$0xff]
  %v267 = vld [vmem:[%s0 + $0x7d0] sm:$0xff]
  %v268 = vld [vmem:[%s0 + $0x7d8] sm:$0xff]
  %v269 = vld [vmem:[%s0 + $0x7e0] sm:$0xff]
  %v270 = vld [vmem:[%s0 + $0x7e8] sm:$0xff]
  %v271 = vld [vmem:[%s0 + $0x7f0] sm:$0xff]
  %v272 = vld [vmem:[%s0 + $0x7f8] sm:$0xff]
  %v273 = vld [vmem:[%s1] sm:$0x7]
  %vm274 = vcmask 23552
  %v276 = vsel %vm274, %v17, 0
  %v279 = vsel %vm274, %v18, 0
  %v282 = vsel %vm274, %v19, 0
  %v285 = vsel %vm274, %v20, 0
  %v288 = vsel %vm274, %v21, 0
  %v291 = vsel %vm274, %v22, 0
  %v294 = vsel %vm274, %v23, 0
  %v297 = vsel %vm274, %v24, 0
  %v300 = vsel %vm274, %v25, 0
  %v303 = vsel %vm274, %v26, 0
  %v306 = vsel %vm274, %v27, 0
  %v309 = vsel %vm274, %v28, 0
  %v312 = vsel %vm274, %v29, 0
  %v315 = vsel %vm274, %v30, 0
  %v318 = vsel %vm274, %v31, 0
  %v321 = vsel %vm274, %v32, 0
  %v324 = vsel %vm274, %v33, 0
  %v327 = vsel %vm274, %v34, 0
  %v330 = vsel %vm274, %v35, 0
  %v333 = vsel %vm274, %v36, 0
  %v336 = vsel %vm274, %v37, 0
  %v339 = vsel %vm274, %v38, 0
  %v342 = vsel %vm274, %v39, 0
  %v345 = vsel %vm274, %v40, 0
  %v348 = vsel %vm274, %v41, 0
  %v351 = vsel %vm274, %v42, 0
  %v354 = vsel %vm274, %v43, 0
  %v357 = vsel %vm274, %v44, 0
  %v360 = vsel %vm274, %v45, 0
  %v363 = vsel %vm274, %v46, 0
  %v366 = vsel %vm274, %v47, 0
  %v369 = vsel %vm274, %v48, 0
  %v372 = vsel %vm274, %v49, 0
  %v375 = vsel %vm274, %v50, 0
  %v378 = vsel %vm274, %v51, 0
  %v381 = vsel %vm274, %v52, 0
  %v384 = vsel %vm274, %v53, 0
  %v387 = vsel %vm274, %v54, 0
  %v390 = vsel %vm274, %v55, 0
  %v393 = vsel %vm274, %v56, 0
  %v396 = vsel %vm274, %v57, 0
  %v399 = vsel %vm274, %v58, 0
  %v402 = vsel %vm274, %v59, 0
  %v405 = vsel %vm274, %v60, 0
  %v408 = vsel %vm274, %v61, 0
  %v411 = vsel %vm274, %v62, 0
  %v414 = vsel %vm274, %v63, 0
  %v417 = vsel %vm274, %v64, 0
  %v420 = vsel %vm274, %v65, 0
  %v423 = vsel %vm274, %v66, 0
  %v426 = vsel %vm274, %v67, 0
  %v429 = vsel %vm274, %v68, 0
  %v432 = vsel %vm274, %v69, 0
  %v435 = vsel %vm274, %v70, 0
  %v438 = vsel %vm274, %v71, 0
  %v441 = vsel %vm274, %v72, 0
  %v444 = vsel %vm274, %v73, 0
  %v447 = vsel %vm274, %v74, 0
  %v450 = vsel %vm274, %v75, 0
  %v453 = vsel %vm274, %v76, 0
  %v456 = vsel %vm274, %v77, 0
  %v459 = vsel %vm274, %v78, 0
  %v462 = vsel %vm274, %v79, 0
  %v465 = vsel %vm274, %v80, 0
  %v468 = vsel %vm274, %v81, 0
  %v471 = vsel %vm274, %v82, 0
  %v474 = vsel %vm274, %v83, 0
  %v477 = vsel %vm274, %v84, 0
  %v480 = vsel %vm274, %v85, 0
  %v483 = vsel %vm274, %v86, 0
  %v486 = vsel %vm274, %v87, 0
  %v489 = vsel %vm274, %v88, 0
  %v492 = vsel %vm274, %v89, 0
  %v495 = vsel %vm274, %v90, 0
  %v498 = vsel %vm274, %v91, 0
  %v501 = vsel %vm274, %v92, 0
  %v504 = vsel %vm274, %v93, 0
  %v507 = vsel %vm274, %v94, 0
  %v510 = vsel %vm274, %v95, 0
  %v513 = vsel %vm274, %v96, 0
  %v516 = vsel %vm274, %v97, 0
  %v519 = vsel %vm274, %v98, 0
  %v522 = vsel %vm274, %v99, 0
  %v525 = vsel %vm274, %v100, 0
  %v528 = vsel %vm274, %v101, 0
  %v531 = vsel %vm274, %v102, 0
  %v534 = vsel %vm274, %v103, 0
  %v537 = vsel %vm274, %v104, 0
  %v540 = vsel %vm274, %v105, 0
  %v543 = vsel %vm274, %v106, 0
  %v546 = vsel %vm274, %v107, 0
  %v549 = vsel %vm274, %v108, 0
  %v552 = vsel %vm274, %v109, 0
  %v555 = vsel %vm274, %v110, 0
  %v558 = vsel %vm274, %v111, 0
  %v561 = vsel %vm274, %v112, 0
  %v564 = vsel %vm274, %v113, 0
  %v567 = vsel %vm274, %v114, 0
  %v570 = vsel %vm274, %v115, 0
  %v573 = vsel %vm274, %v116, 0
  %v576 = vsel %vm274, %v117, 0
  %v579 = vsel %vm274, %v118, 0
  %v582 = vsel %vm274, %v119, 0
  %v585 = vsel %vm274, %v120, 0
  %v588 = vsel %vm274, %v121, 0
  %v591 = vsel %vm274, %v122, 0
  %v594 = vsel %vm274, %v123, 0
  %v597 = vsel %vm274, %v124, 0
  %v600 = vsel %vm274, %v125, 0
  %v603 = vsel %vm274, %v126, 0
  %v606 = vsel %vm274, %v127, 0
  %v609 = vsel %vm274, %v128, 0
  %v612 = vsel %vm274, %v129, 0
  %v615 = vsel %vm274, %v130, 0
  %v618 = vsel %vm274, %v131, 0
  %v621 = vsel %vm274, %v132, 0
  %v624 = vsel %vm274, %v133, 0
  %v627 = vsel %vm274, %v134, 0
  %v630 = vsel %vm274, %v135, 0
  %v633 = vsel %vm274, %v136, 0
  %v636 = vsel %vm274, %v137, 0
  %v639 = vsel %vm274, %v138, 0
  %v642 = vsel %vm274, %v139, 0
  %v645 = vsel %vm274, %v140, 0
  %v648 = vsel %vm274, %v141, 0
  %v651 = vsel %vm274, %v142, 0
  %v654 = vsel %vm274, %v143, 0
  %v657 = vsel %vm274, %v144, 0
  %v660 = vsel %vm274, %v145, 0
  %v663 = vsel %vm274, %v146, 0
  %v666 = vsel %vm274, %v147, 0
  %v669 = vsel %vm274, %v148, 0
  %v672 = vsel %vm274, %v149, 0
  %v675 = vsel %vm274, %v150, 0
  %v678 = vsel %vm274, %v151, 0
  %v681 = vsel %vm274, %v152, 0
  %v684 = vsel %vm274, %v153, 0
  %v687 = vsel %vm274, %v154, 0
  %v690 = vsel %vm274, %v155, 0
  %v693 = vsel %vm274, %v156, 0
  %v696 = vsel %vm274, %v157, 0
  %v699 = vsel %vm274, %v158, 0
  %v702 = vsel %vm274, %v159, 0
  %v705 = vsel %vm274, %v160, 0
  %v708 = vsel %vm274, %v161, 0
  %v711 = vsel %vm274, %v162, 0
  %v714 = vsel %vm274, %v163, 0
  %v717 = vsel %vm274, %v164, 0
  %v720 = vsel %vm274, %v165, 0
  %v723 = vsel %vm274, %v166, 0
  %v726 = vsel %vm274, %v167, 0
  %v729 = vsel %vm274, %v168, 0
  %v732 = vsel %vm274, %v169, 0
  %v735 = vsel %vm274, %v170, 0
  %v738 = vsel %vm274, %v171, 0
  %v741 = vsel %vm274, %v172, 0
  %v744 = vsel %vm274, %v173, 0
  %v747 = vsel %vm274, %v174, 0
  %v750 = vsel %vm274, %v175, 0
  %v753 = vsel %vm274, %v176, 0
  %v756 = vsel %vm274, %v177, 0
  %v759 = vsel %vm274, %v178, 0
  %v762 = vsel %vm274, %v179, 0
  %v765 = vsel %vm274, %v180, 0
  %v768 = vsel %vm274, %v181, 0
  %v771 = vsel %vm274, %v182, 0
  %v774 = vsel %vm274, %v183, 0
  %v777 = vsel %vm274, %v184, 0
  %v780 = vsel %vm274, %v185, 0
  %v783 = vsel %vm274, %v186, 0
  %v786 = vsel %vm274, %v187, 0
  %v789 = vsel %vm274, %v188, 0
  %v792 = vsel %vm274, %v189, 0
  %v795 = vsel %vm274, %v190, 0
  %v798 = vsel %vm274, %v191, 0
  %v801 = vsel %vm274, %v192, 0
  %v804 = vsel %vm274, %v193, 0
  %v807 = vsel %vm274, %v194, 0
  %v810 = vsel %vm274, %v195, 0
  %v813 = vsel %vm274, %v196, 0
  %v816 = vsel %vm274, %v197, 0
  %v819 = vsel %vm274, %v198, 0
  %v822 = vsel %vm274, %v199, 0
  %v825 = vsel %vm274, %v200, 0
  %v828 = vsel %vm274, %v201, 0
  %v831 = vsel %vm274, %v202, 0
  %v834 = vsel %vm274, %v203, 0
  %v837 = vsel %vm274, %v204, 0
  %v840 = vsel %vm274, %v205, 0
  %v843 = vsel %vm274, %v206, 0
  %v846 = vsel %vm274, %v207, 0
  %v849 = vsel %vm274, %v208, 0
  %v852 = vsel %vm274, %v209, 0
  %v855 = vsel %vm274, %v210, 0
  %v858 = vsel %vm274, %v211, 0
  %v861 = vsel %vm274, %v212, 0
  %v864 = vsel %vm274, %v213, 0
  %v867 = vsel %vm274, %v214, 0
  %v870 = vsel %vm274, %v215, 0
  %v873 = vsel %vm274, %v216, 0
  %v876 = vsel %vm274, %v217, 0
  %v879 = vsel %vm274, %v218, 0
  %v882 = vsel %vm274, %v219, 0
  %v885 = vsel %vm274, %v220, 0
  %v888 = vsel %vm274, %v221, 0
  %v891 = vsel %vm274, %v222, 0
  %v894 = vsel %vm274, %v223, 0
  %v897 = vsel %vm274, %v224, 0
  %v900 = vsel %vm274, %v225, 0
  %v903 = vsel %vm274, %v226, 0
  %v906 = vsel %vm274, %v227, 0
  %v909 = vsel %vm274, %v228, 0
  %v912 = vsel %vm274, %v229, 0
  %v915 = vsel %vm274, %v230, 0
  %v918 = vsel %vm274, %v231, 0
  %v921 = vsel %vm274, %v232, 0
  %v924 = vsel %vm274, %v233, 0
  %v927 = vsel %vm274, %v234, 0
  %v930 = vsel %vm274, %v235, 0
  %v933 = vsel %vm274, %v236, 0
  %v936 = vsel %vm274, %v237, 0
  %v939 = vsel %vm274, %v238, 0
  %v942 = vsel %vm274, %v239, 0
  %v945 = vsel %vm274, %v240, 0
  %v948 = vsel %vm274, %v241, 0
  %v951 = vsel %vm274, %v242, 0
  %v954 = vsel %vm274, %v243, 0
  %v957 = vsel %vm274, %v244, 0
  %v960 = vsel %vm274, %v245, 0
  %v963 = vsel %vm274, %v246, 0
  %v966 = vsel %vm274, %v247, 0
  %v969 = vsel %vm274, %v248, 0
  %v972 = vsel %vm274, %v249, 0
  %v975 = vsel %vm274, %v250, 0
  %v978 = vsel %vm274, %v251, 0
  %v981 = vsel %vm274, %v252, 0
  %v984 = vsel %vm274, %v253, 0
  %v987 = vsel %vm274, %v254, 0
  %v990 = vsel %vm274, %v255, 0
  %v993 = vsel %vm274, %v256, 0
  %v996 = vsel %vm274, %v257, 0
  %v999 = vsel %vm274, %v258, 0
  %v1002 = vsel %vm274, %v259, 0
  %v1005 = vsel %vm274, %v260, 0
  %v1008 = vsel %vm274, %v261, 0
  %v1011 = vsel %vm274, %v262, 0
  %v1014 = vsel %vm274, %v263, 0
  %v1017 = vsel %vm274, %v264, 0
  %v1020 = vsel %vm274, %v265, 0
  %v1023 = vsel %vm274, %v266, 0
  %v1026 = vsel %vm274, %v267, 0
  %v1029 = vsel %vm274, %v268, 0
  %v1032 = vsel %vm274, %v269, 0
  %v1035 = vsel %vm274, %v270, 0
  %v1038 = vsel %vm274, %v271, 0
  %v1041 = vsel %vm274, %v272, 0
  %vm1043 = vcmask 1042432
  %v1045 = vsel %vm1043, %v273, 0
  %1047 = vmatprep.subr.mxu0 0.0
  %1048 = vmatpush1.msra.mxu0 0.0
  %1049 = vmatprep.subr.mxu0 0.0
  %1050 = vmatpush1.msra.mxu0 0.0
  %1051 = vmatprep.subr.mxu0 0.0
  %1052 = vmatpush1.msra.mxu0 0.0
  %1053 = vmatprep.subr.mxu0 0.0
  %1054 = vmatpush1.msra.mxu0 0.0
  %1055 = vmatprep.subr.mxu0 0.0
  %1056 = vmatpush1.msra.mxu0 0.0
  %1057 = vmatprep.subr.mxu0 0.0
  %1058 = vmatpush1.msra.mxu0 0.0
  %1059 = vmatprep.subr.mxu0 0.0
  %1060 = vmatpush1.msra.mxu0 0.0
  %1061 = vmatprep.subr.mxu0 0.0
  %1062 = vmatpush1.msra.mxu0 0.0
  %1063 = vmatprep.subr.mxu0 0.0
  %1064 = vmatpush1.msra.mxu0 0.0
  %1065 = vmatprep.subr.mxu0 0.0
  %1066 = vmatpush1.msra.mxu0 0.0
  %1067 = vmatprep.subr.mxu0 0.0
  %1068 = vmatpush1.msra.mxu0 0.0
  %1069 = vmatprep.subr.mxu0 0.0
  %1070 = vmatpush1.msra.mxu0 0.0
  %1071 = vmatprep.subr.mxu0 0.0
  %1072 = vmatpush1.msra.mxu0 0.0
  %1073 = vmatprep.subr.mxu0 0.0
  %1074 = vmatpush1.msra.mxu0 0.0
  %1075 = vmatprep.subr.mxu0 0.0
  %1076 = vmatpush1.msra.mxu0 0.0
  %1077 = vmatprep.subr.mxu0 0.0
  %1078 = vmatpush1.msra.mxu0 %v1045
  %1079 = vmatprep.subr.mxu0 0.0
  %1080 = vmatpush2.msra.mxu0 0.0
  %1081 = vmatprep.subr.mxu0 0.0
  %1082 = vmatpush2.msra.mxu0 0.0
  %1083 = vmatprep.subr.mxu0 0.0
  %1084 = vmatpush2.msra.mxu0 0.0
  %1085 = vmatprep.subr.mxu0 0.0
  %1086 = vmatpush2.msra.mxu0 0.0
  %1087 = vmatprep.subr.mxu0 0.0
  %1088 = vmatpush2.msra.mxu0 0.0
  %1089 = vmatprep.subr.mxu0 0.0
  %1090 = vmatpush2.msra.mxu0 0.0
  %1091 = vmatprep.subr.mxu0 0.0
  %1092 = vmatpush2.msra.mxu0 0.0
  %1093 = vmatprep.subr.mxu0 0.0
  %1094 = vmatpush2.msra.mxu0 0.0
  %1095 = vmatprep.subr.mxu0 0.0
  %1096 = vmatpush2.msra.mxu0 0.0
  %1097 = vmatprep.subr.mxu0 0.0
  %1098 = vmatpush2.msra.mxu0 0.0
  %1099 = vmatprep.subr.mxu0 0.0
  %1100 = vmatpush2.msra.mxu0 0.0
  %1101 = vmatprep.subr.mxu0 0.0
  %1102 = vmatpush2.msra.mxu0 0.0
  %1103 = vmatprep.subr.mxu0 0.0
  %1104 = vmatpush2.msra.mxu0 0.0
  %1105 = vmatprep.subr.mxu0 0.0
  %1106 = vmatpush2.msra.mxu0 0.0
  %1107 = vmatprep.subr.mxu0 0.0
  %1108 = vmatpush2.msra.mxu0 0.0
  %1109 = vmatprep.subr.mxu0 0.0
  %1110 = vmatpush2.msra.mxu0 0.0
  %1111 = vmatprep.mubr.f32.mxu0 0.0
  %1112 = vmatmul.mubr.f32.gmra.mxu0 %v276
  %v1113 = vpop.f32.mrf.mxu0
  %v1114 = vadd.f32 0.0, %v1113
  %v1115 = vpop.f32.mrf.mxu0
  %1116 = vmatprep.mubr.f32.mxu0 0.0
  %1117 = vmatmul.mubr.f32.gmra.mxu0 %v279
  %v1118 = vpop.f32.mrf.mxu0
  %v1119 = vadd.f32 0.0, %v1118
  %v1120 = vpop.f32.mrf.mxu0
  %1121 = vmatprep.mubr.f32.mxu0 0.0
  %1122 = vmatmul.mubr.f32.gmra.mxu0 %v282
  %v1123 = vpop.f32.mrf.mxu0
  %v1124 = vadd.f32 0.0, %v1123
  %v1125 = vpop.f32.mrf.mxu0
  %1126 = vmatprep.mubr.f32.mxu0 0.0
  %1127 = vmatmul.mubr.f32.gmra.mxu0 %v285
  %v1128 = vpop.f32.mrf.mxu0
  %v1129 = vadd.f32 0.0, %v1128
  %v1130 = vpop.f32.mrf.mxu0
  %1131 = vmatprep.mubr.f32.mxu0 0.0
  %1132 = vmatmul.mubr.f32.gmra.mxu0 %v288
  %v1133 = vpop.f32.mrf.mxu0
  %v1134 = vadd.f32 0.0, %v1133
  %v1135 = vpop.f32.mrf.mxu0
  %1136 = vmatprep.mubr.f32.mxu0 0.0
  %1137 = vmatmul.mubr.f32.gmra.mxu0 %v291
  %v1138 = vpop.f32.mrf.mxu0
  %v1139 = vadd.f32 0.0, %v1138
  %v1140 = vpop.f32.mrf.mxu0
  %1141 = vmatprep.mubr.f32.mxu0 0.0
  %1142 = vmatmul.mubr.f32.gmra.mxu0 %v294
  %v1143 = vpop.f32.mrf.mxu0
  %v1144 = vadd.f32 0.0, %v1143
  %v1145 = vpop.f32.mrf.mxu0
  %1146 = vmatprep.mubr.f32.mxu0 0.0
  %1147 = vmatmul.mubr.f32.gmra.mxu0 %v297
  %v1148 = vpop.f32.mrf.mxu0
  %v1149 = vadd.f32 0.0, %v1148
  %v1150 = vpop.f32.mrf.mxu0
  %1151 = vmatprep.mubr.f32.mxu0 0.0
  %1152 = vmatmul.mubr.f32.gmra.mxu0 %v300
  %v1153 = vpop.f32.mrf.mxu0
  %v1154 = vadd.f32 0.0, %v1153
  %v1155 = vpop.f32.mrf.mxu0
  %1156 = vmatprep.mubr.f32.mxu0 0.0
  %1157 = vmatmul.mubr.f32.gmra.mxu0 %v303
  %v1158 = vpop.f32.mrf.mxu0
  %v1159 = vadd.f32 0.0, %v1158
  %v1160 = vpop.f32.mrf.mxu0
  %1161 = vmatprep.mubr.f32.mxu0 0.0
  %1162 = vmatmul.mubr.f32.gmra.mxu0 %v306
  %v1163 = vpop.f32.mrf.mxu0
  %v1164 = vadd.f32 0.0, %v1163
  %v1165 = vpop.f32.mrf.mxu0
  %1166 = vmatprep.mubr.f32.mxu0 0.0
  %1167 = vmatmul.mubr.f32.gmra.mxu0 %v309
  %v1168 = vpop.f32.mrf.mxu0
  %v1169 = vadd.f32 0.0, %v1168
  %v1170 = vpop.f32.mrf.mxu0
  %1171 = vmatprep.mubr.f32.mxu0 0.0
  %1172 = vmatmul.mubr.f32.gmra.mxu0 %v312
  %v1173 = vpop.f32.mrf.mxu0
  %v1174 = vadd.f32 0.0, %v1173
  %v1175 = vpop.f32.mrf.mxu0
  %1176 = vmatprep.mubr.f32.mxu0 0.0
  %1177 = vmatmul.mubr.f32.gmra.mxu0 %v315
  %v1178 = vpop.f32.mrf.mxu0
  %v1179 = vadd.f32 0.0, %v1178
  %v1180 = vpop.f32.mrf.mxu0
  %1181 = vmatprep.mubr.f32.mxu0 0.0
  %1182 = vmatmul.mubr.f32.gmra.mxu0 %v318
  %v1183 = vpop.f32.mrf.mxu0
  %v1184 = vadd.f32 0.0, %v1183
  %v1185 = vpop.f32.mrf.mxu0
  %1186 = vmatprep.mubr.f32.mxu0 0.0
  %1187 = vmatmul.mubr.f32.gmra.mxu0 %v321
  %v1188 = vpop.f32.mrf.mxu0
  %v1189 = vadd.f32 0.0, %v1188
  %v1190 = vpop.f32.mrf.mxu0
  %1191 = vmatprep.mubr.f32.mxu0 0.0
  %1192 = vmatmul.mubr.f32.gmra.mxu0 %v324
  %v1193 = vpop.f32.mrf.mxu0
  %v1194 = vadd.f32 0.0, %v1193
  %v1195 = vpop.f32.mrf.mxu0
  %1196 = vmatprep.mubr.f32.mxu0 0.0
  %1197 = vmatmul.mubr.f32.gmra.mxu0 %v327
  %v1198 = vpop.f32.mrf.mxu0
  %v1199 = vadd.f32 0.0, %v1198
  %v1200 = vpop.f32.mrf.mxu0
  %1201 = vmatprep.mubr.f32.mxu0 0.0
  %1202 = vmatmul.mubr.f32.gmra.mxu0 %v330
  %v1203 = vpop.f32.mrf.mxu0
  %v1204 = vadd.f32 0.0, %v1203
  %v1205 = vpop.f32.mrf.mxu0
  %1206 = vmatprep.mubr.f32.mxu0 0.0
  %1207 = vmatmul.mubr.f32.gmra.mxu0 %v333
  %v1208 = vpop.f32.mrf.mxu0
  %v1209 = vadd.f32 0.0, %v1208
  %v1210 = vpop.f32.mrf.mxu0
  %1211 = vmatprep.mubr.f32.mxu0 0.0
  %1212 = vmatmul.mubr.f32.gmra.mxu0 %v336
  %v1213 = vpop.f32.mrf.mxu0
  %v1214 = vadd.f32 0.0, %v1213
  %v1215 = vpop.f32.mrf.mxu0
  %1216 = vmatprep.mubr.f32.mxu0 0.0
  %1217 = vmatmul.mubr.f32.gmra.mxu0 %v339
  %v1218 = vpop.f32.mrf.mxu0
  %v1219 = vadd.f32 0.0, %v1218
  %v1220 = vpop.f32.mrf.mxu0
  %1221 = vmatprep.mubr.f32.mxu0 0.0
  %1222 = vmatmul.mubr.f32.gmra.mxu0 %v342
  %v1223 = vpop.f32.mrf.mxu0
  %v1224 = vadd.f32 0.0, %v1223
  %v1225 = vpop.f32.mrf.mxu0
  %1226 = vmatprep.mubr.f32.mxu0 0.0
  %1227 = vmatmul.mubr.f32.gmra.mxu0 %v345
  %v1228 = vpop.f32.mrf.mxu0
  %v1229 = vadd.f32 0.0, %v1228
  %v1230 = vpop.f32.mrf.mxu0
  %1231 = vmatprep.mubr.f32.mxu0 0.0
  %1232 = vmatmul.mubr.f32.gmra.mxu0 %v348
  %v1233 = vpop.f32.mrf.mxu0
  %v1234 = vadd.f32 0.0, %v1233
  %v1235 = vpop.f32.mrf.mxu0
  %1236 = vmatprep.mubr.f32.mxu0 0.0
  %1237 = vmatmul.mubr.f32.gmra.mxu0 %v351
  %v1238 = vpop.f32.mrf.mxu0
  %v1239 = vadd.f32 0.0, %v1238
  %v1240 = vpop.f32.mrf.mxu0
  %1241 = vmatprep.mubr.f32.mxu0 0.0
  %1242 = vmatmul.mubr.f32.gmra.mxu0 %v354
  %v1243 = vpop.f32.mrf.mxu0
  %v1244 = vadd.f32 0.0, %v1243
  %v1245 = vpop.f32.mrf.mxu0
  %1246 = vmatprep.mubr.f32.mxu0 0.0
  %1247 = vmatmul.mubr.f32.gmra.mxu0 %v357
  %v1248 = vpop.f32.mrf.mxu0
  %v1249 = vadd.f32 0.0, %v1248
  %v1250 = vpop.f32.mrf.mxu0
  %1251 = vmatprep.mubr.f32.mxu0 0.0
  %1252 = vmatmul.mubr.f32.gmra.mxu0 %v360
  %v1253 = vpop.f32.mrf.mxu0
  %v1254 = vadd.f32 0.0, %v1253
  %v1255 = vpop.f32.mrf.mxu0
  %1256 = vmatprep.mubr.f32.mxu0 0.0
  %1257 = vmatmul.mubr.f32.gmra.mxu0 %v363
  %v1258 = vpop.f32.mrf.mxu0
  %v1259 = vadd.f32 0.0, %v1258
  %v1260 = vpop.f32.mrf.mxu0
  %1261 = vmatprep.mubr.f32.mxu0 0.0
  %1262 = vmatmul.mubr.f32.gmra.mxu0 %v366
  %v1263 = vpop.f32.mrf.mxu0
  %v1264 = vadd.f32 0.0, %v1263
  %v1265 = vpop.f32.mrf.mxu0
  %1266 = vmatprep.mubr.f32.mxu0 0.0
  %1267 = vmatmul.mubr.f32.gmra.mxu0 %v369
  %v1268 = vpop.f32.mrf.mxu0
  %v1269 = vadd.f32 0.0, %v1268
  %v1270 = vpop.f32.mrf.mxu0
  %1271 = vmatprep.mubr.f32.mxu0 0.0
  %1272 = vmatmul.mubr.f32.gmra.mxu0 %v372
  %v1273 = vpop.f32.mrf.mxu0
  %v1274 = vadd.f32 0.0, %v1273
  %v1275 = vpop.f32.mrf.mxu0
  %1276 = vmatprep.mubr.f32.mxu0 0.0
  %1277 = vmatmul.mubr.f32.gmra.mxu0 %v375
  %v1278 = vpop.f32.mrf.mxu0
  %v1279 = vadd.f32 0.0, %v1278
  %v1280 = vpop.f32.mrf.mxu0
  %1281 = vmatprep.mubr.f32.mxu0 0.0
  %1282 = vmatmul.mubr.f32.gmra.mxu0 %v378
  %v1283 = vpop.f32.mrf.mxu0
  %v1284 = vadd.f32 0.0, %v1283
  %v1285 = vpop.f32.mrf.mxu0
  %1286 = vmatprep.mubr.f32.mxu0 0.0
  %1287 = vmatmul.mubr.f32.gmra.mxu0 %v381
  %v1288 = vpop.f32.mrf.mxu0
  %v1289 = vadd.f32 0.0, %v1288
  %v1290 = vpop.f32.mrf.mxu0
  %1291 = vmatprep.mubr.f32.mxu0 0.0
  %1292 = vmatmul.mubr.f32.gmra.mxu0 %v384
  %v1293 = vpop.f32.mrf.mxu0
  %v1294 = vadd.f32 0.0, %v1293
  %v1295 = vpop.f32.mrf.mxu0
  %1296 = vmatprep.mubr.f32.mxu0 0.0
  %1297 = vmatmul.mubr.f32.gmra.mxu0 %v387
  %v1298 = vpop.f32.mrf.mxu0
  %v1299 = vadd.f32 0.0, %v1298
  %v1300 = vpop.f32.mrf.mxu0
  %1301 = vmatprep.mubr.f32.mxu0 0.0
  %1302 = vmatmul.mubr.f32.gmra.mxu0 %v390
  %v1303 = vpop.f32.mrf.mxu0
  %v1304 = vadd.f32 0.0, %v1303
  %v1305 = vpop.f32.mrf.mxu0
  %1306 = vmatprep.mubr.f32.mxu0 0.0
  %1307 = vmatmul.mubr.f32.gmra.mxu0 %v393
  %v1308 = vpop.f32.mrf.mxu0
  %v1309 = vadd.f32 0.0, %v1308
  %v1310 = vpop.f32.mrf.mxu0
  %1311 = vmatprep.mubr.f32.mxu0 0.0
  %1312 = vmatmul.mubr.f32.gmra.mxu0 %v396
  %v1313 = vpop.f32.mrf.mxu0
  %v1314 = vadd.f32 0.0, %v1313
  %v1315 = vpop.f32.mrf.mxu0
  %1316 = vmatprep.mubr.f32.mxu0 0.0
  %1317 = vmatmul.mubr.f32.gmra.mxu0 %v399
  %v1318 = vpop.f32.mrf.mxu0
  %v1319 = vadd.f32 0.0, %v1318
  %v1320 = vpop.f32.mrf.mxu0
  %1321 = vmatprep.mubr.f32.mxu0 0.0
  %1322 = vmatmul.mubr.f32.gmra.mxu0 %v402
  %v1323 = vpop.f32.mrf.mxu0
  %v1324 = vadd.f32 0.0, %v1323
  %v1325 = vpop.f32.mrf.mxu0
  %1326 = vmatprep.mubr.f32.mxu0 0.0
  %1327 = vmatmul.mubr.f32.gmra.mxu0 %v405
  %v1328 = vpop.f32.mrf.mxu0
  %v1329 = vadd.f32 0.0, %v1328
  %v1330 = vpop.f32.mrf.mxu0
  %1331 = vmatprep.mubr.f32.mxu0 0.0
  %1332 = vmatmul.mubr.f32.gmra.mxu0 %v408
  %v1333 = vpop.f32.mrf.mxu0
  %v1334 = vadd.f32 0.0, %v1333
  %v1335 = vpop.f32.mrf.mxu0
  %1336 = vmatprep.mubr.f32.mxu0 0.0
  %1337 = vmatmul.mubr.f32.gmra.mxu0 %v411
  %v1338 = vpop.f32.mrf.mxu0
  %v1339 = vadd.f32 0.0, %v1338
  %v1340 = vpop.f32.mrf.mxu0
  %1341 = vmatprep.mubr.f32.mxu0 0.0
  %1342 = vmatmul.mubr.f32.gmra.mxu0 %v414
  %v1343 = vpop.f32.mrf.mxu0
  %v1344 = vadd.f32 0.0, %v1343
  %v1345 = vpop.f32.mrf.mxu0
  %1346 = vmatprep.mubr.f32.mxu0 0.0
  %1347 = vmatmul.mubr.f32.gmra.mxu0 %v417
  %v1348 = vpop.f32.mrf.mxu0
  %v1349 = vadd.f32 0.0, %v1348
  %v1350 = vpop.f32.mrf.mxu0
  %1351 = vmatprep.mubr.f32.mxu0 0.0
  %1352 = vmatmul.mubr.f32.gmra.mxu0 %v420
  %v1353 = vpop.f32.mrf.mxu0
  %v1354 = vadd.f32 0.0, %v1353
  %v1355 = vpop.f32.mrf.mxu0
  %1356 = vmatprep.mubr.f32.mxu0 0.0
  %1357 = vmatmul.mubr.f32.gmra.mxu0 %v423
  %v1358 = vpop.f32.mrf.mxu0
  %v1359 = vadd.f32 0.0, %v1358
  %v1360 = vpop.f32.mrf.mxu0
  %1361 = vmatprep.mubr.f32.mxu0 0.0
  %1362 = vmatmul.mubr.f32.gmra.mxu0 %v426
  %v1363 = vpop.f32.mrf.mxu0
  %v1364 = vadd.f32 0.0, %v1363
  %v1365 = vpop.f32.mrf.mxu0
  %1366 = vmatprep.mubr.f32.mxu0 0.0
  %1367 = vmatmul.mubr.f32.gmra.mxu0 %v429
  %v1368 = vpop.f32.mrf.mxu0
  %v1369 = vadd.f32 0.0, %v1368
  %v1370 = vpop.f32.mrf.mxu0
  %1371 = vmatprep.mubr.f32.mxu0 0.0
  %1372 = vmatmul.mubr.f32.gmra.mxu0 %v432
  %v1373 = vpop.f32.mrf.mxu0
  %v1374 = vadd.f32 0.0, %v1373
  %v1375 = vpop.f32.mrf.mxu0
  %1376 = vmatprep.mubr.f32.mxu0 0.0
  %1377 = vmatmul.mubr.f32.gmra.mxu0 %v435
  %v1378 = vpop.f32.mrf.mxu0
  %v1379 = vadd.f32 0.0, %v1378
  %v1380 = vpop.f32.mrf.mxu0
  %1381 = vmatprep.mubr.f32.mxu0 0.0
  %1382 = vmatmul.mubr.f32.gmra.mxu0 %v438
  %v1383 = vpop.f32.mrf.mxu0
  %v1384 = vadd.f32 0.0, %v1383
  %v1385 = vpop.f32.mrf.mxu0
  %1386 = vmatprep.mubr.f32.mxu0 0.0
  %1387 = vmatmul.mubr.f32.gmra.mxu0 %v441
  %v1388 = vpop.f32.mrf.mxu0
  %v1389 = vadd.f32 0.0, %v1388
  %v1390 = vpop.f32.mrf.mxu0
  %1391 = vmatprep.mubr.f32.mxu0 0.0
  %1392 = vmatmul.mubr.f32.gmra.mxu0 %v444
  %v1393 = vpop.f32.mrf.mxu0
  %v1394 = vadd.f32 0.0, %v1393
  %v1395 = vpop.f32.mrf.mxu0
  %1396 = vmatprep.mubr.f32.mxu0 0.0
  %1397 = vmatmul.mubr.f32.gmra.mxu0 %v447
  %v1398 = vpop.f32.mrf.mxu0
  %v1399 = vadd.f32 0.0, %v1398
  %v1400 = vpop.f32.mrf.mxu0
  %1401 = vmatprep.mubr.f32.mxu0 0.0
  %1402 = vmatmul.mubr.f32.gmra.mxu0 %v450
  %v1403 = vpop.f32.mrf.mxu0
  %v1404 = vadd.f32 0.0, %v1403
  %v1405 = vpop.f32.mrf.mxu0
  %1406 = vmatprep.mubr.f32.mxu0 0.0
  %1407 = vmatmul.mubr.f32.gmra.mxu0 %v453
  %v1408 = vpop.f32.mrf.mxu0
  %v1409 = vadd.f32 0.0, %v1408
  %v1410 = vpop.f32.mrf.mxu0
  %1411 = vmatprep.mubr.f32.mxu0 0.0
  %1412 = vmatmul.mubr.f32.gmra.mxu0 %v456
  %v1413 = vpop.f32.mrf.mxu0
  %v1414 = vadd.f32 0.0, %v1413
  %v1415 = vpop.f32.mrf.mxu0
  %1416 = vmatprep.mubr.f32.mxu0 0.0
  %1417 = vmatmul.mubr.f32.gmra.mxu0 %v459
  %v1418 = vpop.f32.mrf.mxu0
  %v1419 = vadd.f32 0.0, %v1418
  %v1420 = vpop.f32.mrf.mxu0
  %1421 = vmatprep.mubr.f32.mxu0 0.0
  %1422 = vmatmul.mubr.f32.gmra.mxu0 %v462
  %v1423 = vpop.f32.mrf.mxu0
  %v1424 = vadd.f32 0.0, %v1423
  %v1425 = vpop.f32.mrf.mxu0
  %1426 = vmatprep.mubr.f32.mxu0 0.0
  %1427 = vmatmul.mubr.f32.gmra.mxu0 %v465
  %v1428 = vpop.f32.mrf.mxu0
  %v1429 = vadd.f32 0.0, %v1428
  %v1430 = vpop.f32.mrf.mxu0
  %1431 = vmatprep.mubr.f32.mxu0 0.0
  %1432 = vmatmul.mubr.f32.gmra.mxu0 %v468
  %v1433 = vpop.f32.mrf.mxu0
  %v1434 = vadd.f32 0.0, %v1433
  %v1435 = vpop.f32.mrf.mxu0
  %1436 = vmatprep.mubr.f32.mxu0 0.0
  %1437 = vmatmul.mubr.f32.gmra.mxu0 %v471
  %v1438 = vpop.f32.mrf.mxu0
  %v1439 = vadd.f32 0.0, %v1438
  %v1440 = vpop.f32.mrf.mxu0
  %1441 = vmatprep.mubr.f32.mxu0 0.0
  %1442 = vmatmul.mubr.f32.gmra.mxu0 %v474
  %v1443 = vpop.f32.mrf.mxu0
  %v1444 = vadd.f32 0.0, %v1443
  %v1445 = vpop.f32.mrf.mxu0
  %1446 = vmatprep.mubr.f32.mxu0 0.0
  %1447 = vmatmul.mubr.f32.gmra.mxu0 %v477
  %v1448 = vpop.f32.mrf.mxu0
  %v1449 = vadd.f32 0.0, %v1448
  %v1450 = vpop.f32.mrf.mxu0
  %1451 = vmatprep.mubr.f32.mxu0 0.0
  %1452 = vmatmul.mubr.f32.gmra.mxu0 %v480
  %v1453 = vpop.f32.mrf.mxu0
  %v1454 = vadd.f32 0.0, %v1453
  %v1455 = vpop.f32.mrf.mxu0
  %1456 = vmatprep.mubr.f32.mxu0 0.0
  %1457 = vmatmul.mubr.f32.gmra.mxu0 %v483
  %v1458 = vpop.f32.mrf.mxu0
  %v1459 = vadd.f32 0.0, %v1458
  %v1460 = vpop.f32.mrf.mxu0
  %1461 = vmatprep.mubr.f32.mxu0 0.0
  %1462 = vmatmul.mubr.f32.gmra.mxu0 %v486
  %v1463 = vpop.f32.mrf.mxu0
  %v1464 = vadd.f32 0.0, %v1463
  %v1465 = vpop.f32.mrf.mxu0
  %1466 = vmatprep.mubr.f32.mxu0 0.0
  %1467 = vmatmul.mubr.f32.gmra.mxu0 %v489
  %v1468 = vpop.f32.mrf.mxu0
  %v1469 = vadd.f32 0.0, %v1468
  %v1470 = vpop.f32.mrf.mxu0
  %1471 = vmatprep.mubr.f32.mxu0 0.0
  %1472 = vmatmul.mubr.f32.gmra.mxu0 %v492
  %v1473 = vpop.f32.mrf.mxu0
  %v1474 = vadd.f32 0.0, %v1473
  %v1475 = vpop.f32.mrf.mxu0
  %1476 = vmatprep.mubr.f32.mxu0 0.0
  %1477 = vmatmul.mubr.f32.gmra.mxu0 %v495
  %v1478 = vpop.f32.mrf.mxu0
  %v1479 = vadd.f32 0.0, %v1478
  %v1480 = vpop.f32.mrf.mxu0
  %1481 = vmatprep.mubr.f32.mxu0 0.0
  %1482 = vmatmul.mubr.f32.gmra.mxu0 %v498
  %v1483 = vpop.f32.mrf.mxu0
  %v1484 = vadd.f32 0.0, %v1483
  %v1485 = vpop.f32.mrf.mxu0
  %1486 = vmatprep.mubr.f32.mxu0 0.0
  %1487 = vmatmul.mubr.f32.gmra.mxu0 %v501
  %v1488 = vpop.f32.mrf.mxu0
  %v1489 = vadd.f32 0.0, %v1488
  %v1490 = vpop.f32.mrf.mxu0
  %1491 = vmatprep.mubr.f32.mxu0 0.0
  %1492 = vmatmul.mubr.f32.gmra.mxu0 %v504
  %v1493 = vpop.f32.mrf.mxu0
  %v1494 = vadd.f32 0.0, %v1493
  %v1495 = vpop.f32.mrf.mxu0
  %1496 = vmatprep.mubr.f32.mxu0 0.0
  %1497 = vmatmul.mubr.f32.gmra.mxu0 %v507
  %v1498 = vpop.f32.mrf.mxu0
  %v1499 = vadd.f32 0.0, %v1498
  %v1500 = vpop.f32.mrf.mxu0
  %1501 = vmatprep.mubr.f32.mxu0 0.0
  %1502 = vmatmul.mubr.f32.gmra.mxu0 %v510
  %v1503 = vpop.f32.mrf.mxu0
  %v1504 = vadd.f32 0.0, %v1503
  %v1505 = vpop.f32.mrf.mxu0
  %1506 = vmatprep.mubr.f32.mxu0 0.0
  %1507 = vmatmul.mubr.f32.gmra.mxu0 %v513
  %v1508 = vpop.f32.mrf.mxu0
  %v1509 = vadd.f32 0.0, %v1508
  %v1510 = vpop.f32.mrf.mxu0
  %1511 = vmatprep.mubr.f32.mxu0 0.0
  %1512 = vmatmul.mubr.f32.gmra.mxu0 %v516
  %v1513 = vpop.f32.mrf.mxu0
  %v1514 = vadd.f32 0.0, %v1513
  %v1515 = vpop.f32.mrf.mxu0
  %1516 = vmatprep.mubr.f32.mxu0 0.0
  %1517 = vmatmul.mubr.f32.gmra.mxu0 %v519
  %v1518 = vpop.f32.mrf.mxu0
  %v1519 = vadd.f32 0.0, %v1518
  %v1520 = vpop.f32.mrf.mxu0
  %1521 = vmatprep.mubr.f32.mxu0 0.0
  %1522 = vmatmul.mubr.f32.gmra.mxu0 %v522
  %v1523 = vpop.f32.mrf.mxu0
  %v1524 = vadd.f32 0.0, %v1523
  %v1525 = vpop.f32.mrf.mxu0
  %1526 = vmatprep.mubr.f32.mxu0 0.0
  %1527 = vmatmul.mubr.f32.gmra.mxu0 %v525
  %v1528 = vpop.f32.mrf.mxu0
  %v1529 = vadd.f32 0.0, %v1528
  %v1530 = vpop.f32.mrf.mxu0
  %1531 = vmatprep.mubr.f32.mxu0 0.0
  %1532 = vmatmul.mubr.f32.gmra.mxu0 %v528
  %v1533 = vpop.f32.mrf.mxu0
  %v1534 = vadd.f32 0.0, %v1533
  %v1535 = vpop.f32.mrf.mxu0
  %1536 = vmatprep.mubr.f32.mxu0 0.0
  %1537 = vmatmul.mubr.f32.gmra.mxu0 %v531
  %v1538 = vpop.f32.mrf.mxu0
  %v1539 = vadd.f32 0.0, %v1538
  %v1540 = vpop.f32.mrf.mxu0
  %1541 = vmatprep.mubr.f32.mxu0 0.0
  %1542 = vmatmul.mubr.f32.gmra.mxu0 %v534
  %v1543 = vpop.f32.mrf.mxu0
  %v1544 = vadd.f32 0.0, %v1543
  %v1545 = vpop.f32.mrf.mxu0
  %1546 = vmatprep.mubr.f32.mxu0 0.0
  %1547 = vmatmul.mubr.f32.gmra.mxu0 %v537
  %v1548 = vpop.f32.mrf.mxu0
  %v1549 = vadd.f32 0.0, %v1548
  %v1550 = vpop.f32.mrf.mxu0
  %1551 = vmatprep.mubr.f32.mxu0 0.0
  %1552 = vmatmul.mubr.f32.gmra.mxu0 %v540
  %v1553 = vpop.f32.mrf.mxu0
  %v1554 = vadd.f32 0.0, %v1553
  %v1555 = vpop.f32.mrf.mxu0
  %1556 = vmatprep.mubr.f32.mxu0 0.0
  %1557 = vmatmul.mubr.f32.gmra.mxu0 %v543
  %v1558 = vpop.f32.mrf.mxu0
  %v1559 = vadd.f32 0.0, %v1558
  %v1560 = vpop.f32.mrf.mxu0
  %1561 = vmatprep.mubr.f32.mxu0 0.0
  %1562 = vmatmul.mubr.f32.gmra.mxu0 %v546
  %v1563 = vpop.f32.mrf.mxu0
  %v1564 = vadd.f32 0.0, %v1563
  %v1565 = vpop.f32.mrf.mxu0
  %1566 = vmatprep.mubr.f32.mxu0 0.0
  %1567 = vmatmul.mubr.f32.gmra.mxu0 %v549
  %v1568 = vpop.f32.mrf.mxu0
  %v1569 = vadd.f32 0.0, %v1568
  %v1570 = vpop.f32.mrf.mxu0
  %1571 = vmatprep.mubr.f32.mxu0 0.0
  %1572 = vmatmul.mubr.f32.gmra.mxu0 %v552
  %v1573 = vpop.f32.mrf.mxu0
  %v1574 = vadd.f32 0.0, %v1573
  %v1575 = vpop.f32.mrf.mxu0
  %1576 = vmatprep.mubr.f32.mxu0 0.0
  %1577 = vmatmul.mubr.f32.gmra.mxu0 %v555
  %v1578 = vpop.f32.mrf.mxu0
  %v1579 = vadd.f32 0.0, %v1578
  %v1580 = vpop.f32.mrf.mxu0
  %1581 = vmatprep.mubr.f32.mxu0 0.0
  %1582 = vmatmul.mubr.f32.gmra.mxu0 %v558
  %v1583 = vpop.f32.mrf.mxu0
  %v1584 = vadd.f32 0.0, %v1583
  %v1585 = vpop.f32.mrf.mxu0
  %1586 = vmatprep.mubr.f32.mxu0 0.0
  %1587 = vmatmul.mubr.f32.gmra.mxu0 %v561
  %v1588 = vpop.f32.mrf.mxu0
  %v1589 = vadd.f32 0.0, %v1588
  %v1590 = vpop.f32.mrf.mxu0
  %1591 = vmatprep.mubr.f32.mxu0 0.0
  %1592 = vmatmul.mubr.f32.gmra.mxu0 %v564
  %v1593 = vpop.f32.mrf.mxu0
  %v1594 = vadd.f32 0.0, %v1593
  %v1595 = vpop.f32.mrf.mxu0
  %1596 = vmatprep.mubr.f32.mxu0 0.0
  %1597 = vmatmul.mubr.f32.gmra.mxu0 %v567
  %v1598 = vpop.f32.mrf.mxu0
  %v1599 = vadd.f32 0.0, %v1598
  %v1600 = vpop.f32.mrf.mxu0
  %1601 = vmatprep.mubr.f32.mxu0 0.0
  %1602 = vmatmul.mubr.f32.gmra.mxu0 %v570
  %v1603 = vpop.f32.mrf.mxu0
  %v1604 = vadd.f32 0.0, %v1603
  %v1605 = vpop.f32.mrf.mxu0
  %1606 = vmatprep.mubr.f32.mxu0 0.0
  %1607 = vmatmul.mubr.f32.gmra.mxu0 %v573
  %v1608 = vpop.f32.mrf.mxu0
  %v1609 = vadd.f32 0.0, %v1608
  %v1610 = vpop.f32.mrf.mxu0
  %1611 = vmatprep.mubr.f32.mxu0 0.0
  %1612 = vmatmul.mubr.f32.gmra.mxu0 %v576
  %v1613 = vpop.f32.mrf.mxu0
  %v1614 = vadd.f32 0.0, %v1613
  %v1615 = vpop.f32.mrf.mxu0
  %1616 = vmatprep.mubr.f32.mxu0 0.0
  %1617 = vmatmul.mubr.f32.gmra.mxu0 %v579
  %v1618 = vpop.f32.mrf.mxu0
  %v1619 = vadd.f32 0.0, %v1618
  %v1620 = vpop.f32.mrf.mxu0
  %1621 = vmatprep.mubr.f32.mxu0 0.0
  %1622 = vmatmul.mubr.f32.gmra.mxu0 %v582
  %v1623 = vpop.f32.mrf.mxu0
  %v1624 = vadd.f32 0.0, %v1623
  %v1625 = vpop.f32.mrf.mxu0
  %1626 = vmatprep.mubr.f32.mxu0 0.0
  %1627 = vmatmul.mubr.f32.gmra.mxu0 %v585
  %v1628 = vpop.f32.mrf.mxu0
  %v1629 = vadd.f32 0.0, %v1628
  %v1630 = vpop.f32.mrf.mxu0
  %1631 = vmatprep.mubr.f32.mxu0 0.0
  %1632 = vmatmul.mubr.f32.gmra.mxu0 %v588
  %v1633 = vpop.f32.mrf.mxu0
  %v1634 = vadd.f32 0.0, %v1633
  %v1635 = vpop.f32.mrf.mxu0
  %1636 = vmatprep.mubr.f32.mxu0 0.0
  %1637 = vmatmul.mubr.f32.gmra.mxu0 %v591
  %v1638 = vpop.f32.mrf.mxu0
  %v1639 = vadd.f32 0.0, %v1638
  %v1640 = vpop.f32.mrf.mxu0
  %1641 = vmatprep.mubr.f32.mxu0 0.0
  %1642 = vmatmul.mubr.f32.gmra.mxu0 %v594
  %v1643 = vpop.f32.mrf.mxu0
  %v1644 = vadd.f32 0.0, %v1643
  %v1645 = vpop.f32.mrf.mxu0
  %1646 = vmatprep.mubr.f32.mxu0 0.0
  %1647 = vmatmul.mubr.f32.gmra.mxu0 %v597
  %v1648 = vpop.f32.mrf.mxu0
  %v1649 = vadd.f32 0.0, %v1648
  %v1650 = vpop.f32.mrf.mxu0
  %1651 = vmatprep.mubr.f32.mxu0 0.0
  %1652 = vmatmul.mubr.f32.gmra.mxu0 %v600
  %v1653 = vpop.f32.mrf.mxu0
  %v1654 = vadd.f32 0.0, %v1653
  %v1655 = vpop.f32.mrf.mxu0
  %1656 = vmatprep.mubr.f32.mxu0 0.0
  %1657 = vmatmul.mubr.f32.gmra.mxu0 %v603
  %v1658 = vpop.f32.mrf.mxu0
  %v1659 = vadd.f32 0.0, %v1658
  %v1660 = vpop.f32.mrf.mxu0
  %1661 = vmatprep.mubr.f32.mxu0 0.0
  %1662 = vmatmul.mubr.f32.gmra.mxu0 %v606
  %v1663 = vpop.f32.mrf.mxu0
  %v1664 = vadd.f32 0.0, %v1663
  %v1665 = vpop.f32.mrf.mxu0
  %1666 = vmatprep.mubr.f32.mxu0 0.0
  %1667 = vmatmul.mubr.f32.gmra.mxu0 %v609
  %v1668 = vpop.f32.mrf.mxu0
  %v1669 = vadd.f32 0.0, %v1668
  %v1670 = vpop.f32.mrf.mxu0
  %1671 = vmatprep.mubr.f32.mxu0 0.0
  %1672 = vmatmul.mubr.f32.gmra.mxu0 %v612
  %v1673 = vpop.f32.mrf.mxu0
  %v1674 = vadd.f32 0.0, %v1673
  %v1675 = vpop.f32.mrf.mxu0
  %1676 = vmatprep.mubr.f32.mxu0 0.0
  %1677 = vmatmul.mubr.f32.gmra.mxu0 %v615
  %v1678 = vpop.f32.mrf.mxu0
  %v1679 = vadd.f32 0.0, %v1678
  %v1680 = vpop.f32.mrf.mxu0
  %1681 = vmatprep.mubr.f32.mxu0 0.0
  %1682 = vmatmul.mubr.f32.gmra.mxu0 %v618
  %v1683 = vpop.f32.mrf.mxu0
  %v1684 = vadd.f32 0.0, %v1683
  %v1685 = vpop.f32.mrf.mxu0
  %1686 = vmatprep.mubr.f32.mxu0 0.0
  %1687 = vmatmul.mubr.f32.gmra.mxu0 %v621
  %v1688 = vpop.f32.mrf.mxu0
  %v1689 = vadd.f32 0.0, %v1688
  %v1690 = vpop.f32.mrf.mxu0
  %1691 = vmatprep.mubr.f32.mxu0 0.0
  %1692 = vmatmul.mubr.f32.gmra.mxu0 %v624
  %v1693 = vpop.f32.mrf.mxu0
  %v1694 = vadd.f32 0.0, %v1693
  %v1695 = vpop.f32.mrf.mxu0
  %1696 = vmatprep.mubr.f32.mxu0 0.0
  %1697 = vmatmul.mubr.f32.gmra.mxu0 %v627
  %v1698 = vpop.f32.mrf.mxu0
  %v1699 = vadd.f32 0.0, %v1698
  %v1700 = vpop.f32.mrf.mxu0
  %1701 = vmatprep.mubr.f32.mxu0 0.0
  %1702 = vmatmul.mubr.f32.gmra.mxu0 %v630
  %v1703 = vpop.f32.mrf.mxu0
  %v1704 = vadd.f32 0.0, %v1703
  %v1705 = vpop.f32.mrf.mxu0
  %1706 = vmatprep.mubr.f32.mxu0 0.0
  %1707 = vmatmul.mubr.f32.gmra.mxu0 %v633
  %v1708 = vpop.f32.mrf.mxu0
  %v1709 = vadd.f32 0.0, %v1708
  %v1710 = vpop.f32.mrf.mxu0
  %1711 = vmatprep.mubr.f32.mxu0 0.0
  %1712 = vmatmul.mubr.f32.gmra.mxu0 %v636
  %v1713 = vpop.f32.mrf.mxu0
  %v1714 = vadd.f32 0.0, %v1713
  %v1715 = vpop.f32.mrf.mxu0
  %1716 = vmatprep.mubr.f32.mxu0 0.0
  %1717 = vmatmul.mubr.f32.gmra.mxu0 %v639
  %v1718 = vpop.f32.mrf.mxu0
  %v1719 = vadd.f32 0.0, %v1718
  %v1720 = vpop.f32.mrf.mxu0
  %1721 = vmatprep.mubr.f32.mxu0 0.0
  %1722 = vmatmul.mubr.f32.gmra.mxu0 %v642
  %v1723 = vpop.f32.mrf.mxu0
  %v1724 = vadd.f32 0.0, %v1723
  %v1725 = vpop.f32.mrf.mxu0
  %1726 = vmatprep.mubr.f32.mxu0 0.0
  %1727 = vmatmul.mubr.f32.gmra.mxu0 %v645
  %v1728 = vpop.f32.mrf.mxu0
  %v1729 = vadd.f32 0.0, %v1728
  %v1730 = vpop.f32.mrf.mxu0
  %1731 = vmatprep.mubr.f32.mxu0 0.0
  %1732 = vmatmul.mubr.f32.gmra.mxu0 %v648
  %v1733 = vpop.f32.mrf.mxu0
  %v1734 = vadd.f32 0.0, %v1733
  %v1735 = vpop.f32.mrf.mxu0
  %1736 = vmatprep.mubr.f32.mxu0 0.0
  %1737 = vmatmul.mubr.f32.gmra.mxu0 %v651
  %v1738 = vpop.f32.mrf.mxu0
  %v1739 = vadd.f32 0.0, %v1738
  %v1740 = vpop.f32.mrf.mxu0
  %1741 = vmatprep.mubr.f32.mxu0 0.0
  %1742 = vmatmul.mubr.f32.gmra.mxu0 %v654
  %v1743 = vpop.f32.mrf.mxu0
  %v1744 = vadd.f32 0.0, %v1743
  %v1745 = vpop.f32.mrf.mxu0
  %1746 = vmatprep.mubr.f32.mxu0 0.0
  %1747 = vmatmul.mubr.f32.gmra.mxu0 %v657
  %v1748 = vpop.f32.mrf.mxu0
  %v1749 = vadd.f32 0.0, %v1748
  %v1750 = vpop.f32.mrf.mxu0
  %1751 = vmatprep.mubr.f32.mxu0 0.0
  %1752 = vmatmul.mubr.f32.gmra.mxu0 %v660
  %v1753 = vpop.f32.mrf.mxu0
  %v1754 = vadd.f32 0.0, %v1753
  %v1755 = vpop.f32.mrf.mxu0
  %1756 = vmatprep.mubr.f32.mxu0 0.0
  %1757 = vmatmul.mubr.f32.gmra.mxu0 %v663
  %v1758 = vpop.f32.mrf.mxu0
  %v1759 = vadd.f32 0.0, %v1758
  %v1760 = vpop.f32.mrf.mxu0
  %1761 = vmatprep.mubr.f32.mxu0 0.0
  %1762 = vmatmul.mubr.f32.gmra.mxu0 %v666
  %v1763 = vpop.f32.mrf.mxu0
  %v1764 = vadd.f32 0.0, %v1763
  %v1765 = vpop.f32.mrf.mxu0
  %1766 = vmatprep.mubr.f32.mxu0 0.0
  %1767 = vmatmul.mubr.f32.gmra.mxu0 %v669
  %v1768 = vpop.f32.mrf.mxu0
  %v1769 = vadd.f32 0.0, %v1768
  %v1770 = vpop.f32.mrf.mxu0
  %1771 = vmatprep.mubr.f32.mxu0 0.0
  %1772 = vmatmul.mubr.f32.gmra.mxu0 %v672
  %v1773 = vpop.f32.mrf.mxu0
  %v1774 = vadd.f32 0.0, %v1773
  %v1775 = vpop.f32.mrf.mxu0
  %1776 = vmatprep.mubr.f32.mxu0 0.0
  %1777 = vmatmul.mubr.f32.gmra.mxu0 %v675
  %v1778 = vpop.f32.mrf.mxu0
  %v1779 = vadd.f32 0.0, %v1778
  %v1780 = vpop.f32.mrf.mxu0
  %1781 = vmatprep.mubr.f32.mxu0 0.0
  %1782 = vmatmul.mubr.f32.gmra.mxu0 %v678
  %v1783 = vpop.f32.mrf.mxu0
  %v1784 = vadd.f32 0.0, %v1783
  %v1785 = vpop.f32.mrf.mxu0
  %1786 = vmatprep.mubr.f32.mxu0 0.0
  %1787 = vmatmul.mubr.f32.gmra.mxu0 %v681
  %v1788 = vpop.f32.mrf.mxu0
  %v1789 = vadd.f32 0.0, %v1788
  %v1790 = vpop.f32.mrf.mxu0
  %1791 = vmatprep.mubr.f32.mxu0 0.0
  %1792 = vmatmul.mubr.f32.gmra.mxu0 %v684
  %v1793 = vpop.f32.mrf.mxu0
  %v1794 = vadd.f32 0.0, %v1793
  %v1795 = vpop.f32.mrf.mxu0
  %1796 = vmatprep.mubr.f32.mxu0 0.0
  %1797 = vmatmul.mubr.f32.gmra.mxu0 %v687
  %v1798 = vpop.f32.mrf.mxu0
  %v1799 = vadd.f32 0.0, %v1798
  %v1800 = vpop.f32.mrf.mxu0
  %1801 = vmatprep.mubr.f32.mxu0 0.0
  %1802 = vmatmul.mubr.f32.gmra.mxu0 %v690
  %v1803 = vpop.f32.mrf.mxu0
  %v1804 = vadd.f32 0.0, %v1803
  %v1805 = vpop.f32.mrf.mxu0
  %1806 = vmatprep.mubr.f32.mxu0 0.0
  %1807 = vmatmul.mubr.f32.gmra.mxu0 %v693
  %v1808 = vpop.f32.mrf.mxu0
  %v1809 = vadd.f32 0.0, %v1808
  %v1810 = vpop.f32.mrf.mxu0
  %1811 = vmatprep.mubr.f32.mxu0 0.0
  %1812 = vmatmul.mubr.f32.gmra.mxu0 %v696
  %v1813 = vpop.f32.mrf.mxu0
  %v1814 = vadd.f32 0.0, %v1813
  %v1815 = vpop.f32.mrf.mxu0
  %1816 = vmatprep.mubr.f32.mxu0 0.0
  %1817 = vmatmul.mubr.f32.gmra.mxu0 %v699
  %v1818 = vpop.f32.mrf.mxu0
  %v1819 = vadd.f32 0.0, %v1818
  %v1820 = vpop.f32.mrf.mxu0
  %1821 = vmatprep.mubr.f32.mxu0 0.0
  %1822 = vmatmul.mubr.f32.gmra.mxu0 %v702
  %v1823 = vpop.f32.mrf.mxu0
  %v1824 = vadd.f32 0.0, %v1823
  %v1825 = vpop.f32.mrf.mxu0
  %1826 = vmatprep.mubr.f32.mxu0 0.0
  %1827 = vmatmul.mubr.f32.gmra.mxu0 %v705
  %v1828 = vpop.f32.mrf.mxu0
  %v1829 = vadd.f32 0.0, %v1828
  %v1830 = vpop.f32.mrf.mxu0
  %1831 = vmatprep.mubr.f32.mxu0 0.0
  %1832 = vmatmul.mubr.f32.gmra.mxu0 %v708
  %v1833 = vpop.f32.mrf.mxu0
  %v1834 = vadd.f32 0.0, %v1833
  %v1835 = vpop.f32.mrf.mxu0
  %1836 = vmatprep.mubr.f32.mxu0 0.0
  %1837 = vmatmul.mubr.f32.gmra.mxu0 %v711
  %v1838 = vpop.f32.mrf.mxu0
  %v1839 = vadd.f32 0.0, %v1838
  %v1840 = vpop.f32.mrf.mxu0
  %1841 = vmatprep.mubr.f32.mxu0 0.0
  %1842 = vmatmul.mubr.f32.gmra.mxu0 %v714
  %v1843 = vpop.f32.mrf.mxu0
  %v1844 = vadd.f32 0.0, %v1843
  %v1845 = vpop.f32.mrf.mxu0
  %1846 = vmatprep.mubr.f32.mxu0 0.0
  %1847 = vmatmul.mubr.f32.gmra.mxu0 %v717
  %v1848 = vpop.f32.mrf.mxu0
  %v1849 = vadd.f32 0.0, %v1848
  %v1850 = vpop.f32.mrf.mxu0
  %1851 = vmatprep.mubr.f32.mxu0 0.0
  %1852 = vmatmul.mubr.f32.gmra.mxu0 %v720
  %v1853 = vpop.f32.mrf.mxu0
  %v1854 = vadd.f32 0.0, %v1853
  %v1855 = vpop.f32.mrf.mxu0
  %1856 = vmatprep.mubr.f32.mxu0 0.0
  %1857 = vmatmul.mubr.f32.gmra.mxu0 %v723
  %v1858 = vpop.f32.mrf.mxu0
  %v1859 = vadd.f32 0.0, %v1858
  %v1860 = vpop.f32.mrf.mxu0
  %1861 = vmatprep.mubr.f32.mxu0 0.0
  %1862 = vmatmul.mubr.f32.gmra.mxu0 %v726
  %v1863 = vpop.f32.mrf.mxu0
  %v1864 = vadd.f32 0.0, %v1863
  %v1865 = vpop.f32.mrf.mxu0
  %1866 = vmatprep.mubr.f32.mxu0 0.0
  %1867 = vmatmul.mubr.f32.gmra.mxu0 %v729
  %v1868 = vpop.f32.mrf.mxu0
  %v1869 = vadd.f32 0.0, %v1868
  %v1870 = vpop.f32.mrf.mxu0
  %1871 = vmatprep.mubr.f32.mxu0 0.0
  %1872 = vmatmul.mubr.f32.gmra.mxu0 %v732
  %v1873 = vpop.f32.mrf.mxu0
  %v1874 = vadd.f32 0.0, %v1873
  %v1875 = vpop.f32.mrf.mxu0
  %1876 = vmatprep.mubr.f32.mxu0 0.0
  %1877 = vmatmul.mubr.f32.gmra.mxu0 %v735
  %v1878 = vpop.f32.mrf.mxu0
  %v1879 = vadd.f32 0.0, %v1878
  %v1880 = vpop.f32.mrf.mxu0
  %1881 = vmatprep.mubr.f32.mxu0 0.0
  %1882 = vmatmul.mubr.f32.gmra.mxu0 %v738
  %v1883 = vpop.f32.mrf.mxu0
  %v1884 = vadd.f32 0.0, %v1883
  %v1885 = vpop.f32.mrf.mxu0
  %1886 = vmatprep.mubr.f32.mxu0 0.0
  %1887 = vmatmul.mubr.f32.gmra.mxu0 %v741
  %v1888 = vpop.f32.mrf.mxu0
  %v1889 = vadd.f32 0.0, %v1888
  %v1890 = vpop.f32.mrf.mxu0
  %1891 = vmatprep.mubr.f32.mxu0 0.0
  %1892 = vmatmul.mubr.f32.gmra.mxu0 %v744
  %v1893 = vpop.f32.mrf.mxu0
  %v1894 = vadd.f32 0.0, %v1893
  %v1895 = vpop.f32.mrf.mxu0
  %1896 = vmatprep.mubr.f32.mxu0 0.0
  %1897 = vmatmul.mubr.f32.gmra.mxu0 %v747
  %v1898 = vpop.f32.mrf.mxu0
  %v1899 = vadd.f32 0.0, %v1898
  %v1900 = vpop.f32.mrf.mxu0
  %1901 = vmatprep.mubr.f32.mxu0 0.0
  %1902 = vmatmul.mubr.f32.gmra.mxu0 %v750
  %v1903 = vpop.f32.mrf.mxu0
  %v1904 = vadd.f32 0.0, %v1903
  %v1905 = vpop.f32.mrf.mxu0
  %1906 = vmatprep.mubr.f32.mxu0 0.0
  %1907 = vmatmul.mubr.f32.gmra.mxu0 %v753
  %v1908 = vpop.f32.mrf.mxu0
  %v1909 = vadd.f32 0.0, %v1908
  %v1910 = vpop.f32.mrf.mxu0
  %1911 = vmatprep.mubr.f32.mxu0 0.0
  %1912 = vmatmul.mubr.f32.gmra.mxu0 %v756
  %v1913 = vpop.f32.mrf.mxu0
  %v1914 = vadd.f32 0.0, %v1913
  %v1915 = vpop.f32.mrf.mxu0
  %1916 = vmatprep.mubr.f32.mxu0 0.0
  %1917 = vmatmul.mubr.f32.gmra.mxu0 %v759
  %v1918 = vpop.f32.mrf.mxu0
  %v1919 = vadd.f32 0.0, %v1918
  %v1920 = vpop.f32.mrf.mxu0
  %1921 = vmatprep.mubr.f32.mxu0 0.0
  %1922 = vmatmul.mubr.f32.gmra.mxu0 %v762
  %v1923 = vpop.f32.mrf.mxu0
  %v1924 = vadd.f32 0.0, %v1923
  %v1925 = vpop.f32.mrf.mxu0
  %1926 = vmatprep.mubr.f32.mxu0 0.0
  %1927 = vmatmul.mubr.f32.gmra.mxu0 %v765
  %v1928 = vpop.f32.mrf.mxu0
  %v1929 = vadd.f32 0.0, %v1928
  %v1930 = vpop.f32.mrf.mxu0
  %1931 = vmatprep.mubr.f32.mxu0 0.0
  %1932 = vmatmul.mubr.f32.gmra.mxu0 %v768
  %v1933 = vpop.f32.mrf.mxu0
  %v1934 = vadd.f32 0.0, %v1933
  %v1935 = vpop.f32.mrf.mxu0
  %1936 = vmatprep.mubr.f32.mxu0 0.0
  %1937 = vmatmul.mubr.f32.gmra.mxu0 %v771
  %v1938 = vpop.f32.mrf.mxu0
  %v1939 = vadd.f32 0.0, %v1938
  %v1940 = vpop.f32.mrf.mxu0
  %1941 = vmatprep.mubr.f32.mxu0 0.0
  %1942 = vmatmul.mubr.f32.gmra.mxu0 %v774
  %v1943 = vpop.f32.mrf.mxu0
  %v1944 = vadd.f32 0.0, %v1943
  %v1945 = vpop.f32.mrf.mxu0
  %1946 = vmatprep.mubr.f32.mxu0 0.0
  %1947 = vmatmul.mubr.f32.gmra.mxu0 %v777
  %v1948 = vpop.f32.mrf.mxu0
  %v1949 = vadd.f32 0.0, %v1948
  %v1950 = vpop.f32.mrf.mxu0
  %1951 = vmatprep.mubr.f32.mxu0 0.0
  %1952 = vmatmul.mubr.f32.gmra.mxu0 %v780
  %v1953 = vpop.f32.mrf.mxu0
  %v1954 = vadd.f32 0.0, %v1953
  %v1955 = vpop.f32.mrf.mxu0
  %1956 = vmatprep.mubr.f32.mxu0 0.0
  %1957 = vmatmul.mubr.f32.gmra.mxu0 %v783
  %v1958 = vpop.f32.mrf.mxu0
  %v1959 = vadd.f32 0.0, %v1958
  %v1960 = vpop.f32.mrf.mxu0
  %1961 = vmatprep.mubr.f32.mxu0 0.0
  %1962 = vmatmul.mubr.f32.gmra.mxu0 %v786
  %v1963 = vpop.f32.mrf.mxu0
  %v1964 = vadd.f32 0.0, %v1963
  %v1965 = vpop.f32.mrf.mxu0
  %1966 = vmatprep.mubr.f32.mxu0 0.0
  %1967 = vmatmul.mubr.f32.gmra.mxu0 %v789
  %v1968 = vpop.f32.mrf.mxu0
  %v1969 = vadd.f32 0.0, %v1968
  %v1970 = vpop.f32.mrf.mxu0
  %1971 = vmatprep.mubr.f32.mxu0 0.0
  %1972 = vmatmul.mubr.f32.gmra.mxu0 %v792
  %v1973 = vpop.f32.mrf.mxu0
  %v1974 = vadd.f32 0.0, %v1973
  %v1975 = vpop.f32.mrf.mxu0
  %1976 = vmatprep.mubr.f32.mxu0 0.0
  %1977 = vmatmul.mubr.f32.gmra.mxu0 %v795
  %v1978 = vpop.f32.mrf.mxu0
  %v1979 = vadd.f32 0.0, %v1978
  %v1980 = vpop.f32.mrf.mxu0
  %1981 = vmatprep.mubr.f32.mxu0 0.0
  %1982 = vmatmul.mubr.f32.gmra.mxu0 %v798
  %v1983 = vpop.f32.mrf.mxu0
  %v1984 = vadd.f32 0.0, %v1983
  %v1985 = vpop.f32.mrf.mxu0
  %1986 = vmatprep.mubr.f32.mxu0 0.0
  %1987 = vmatmul.mubr.f32.gmra.mxu0 %v801
  %v1988 = vpop.f32.mrf.mxu0
  %v1989 = vadd.f32 0.0, %v1988
  %v1990 = vpop.f32.mrf.mxu0
  %1991 = vmatprep.mubr.f32.mxu0 0.0
  %1992 = vmatmul.mubr.f32.gmra.mxu0 %v804
  %v1993 = vpop.f32.mrf.mxu0
  %v1994 = vadd.f32 0.0, %v1993
  %v1995 = vpop.f32.mrf.mxu0
  %1996 = vmatprep.mubr.f32.mxu0 0.0
  %1997 = vmatmul.mubr.f32.gmra.mxu0 %v807
  %v1998 = vpop.f32.mrf.mxu0
  %v1999 = vadd.f32 0.0, %v1998
  %v2000 = vpop.f32.mrf.mxu0
  %2001 = vmatprep.mubr.f32.mxu0 0.0
  %2002 = vmatmul.mubr.f32.gmra.mxu0 %v810
  %v2003 = vpop.f32.mrf.mxu0
  %v2004 = vadd.f32 0.0, %v2003
  %v2005 = vpop.f32.mrf.mxu0
  %2006 = vmatprep.mubr.f32.mxu0 0.0
  %2007 = vmatmul.mubr.f32.gmra.mxu0 %v813
  %v2008 = vpop.f32.mrf.mxu0
  %v2009 = vadd.f32 0.0, %v2008
  %v2010 = vpop.f32.mrf.mxu0
  %2011 = vmatprep.mubr.f32.mxu0 0.0
  %2012 = vmatmul.mubr.f32.gmra.mxu0 %v816
  %v2013 = vpop.f32.mrf.mxu0
  %v2014 = vadd.f32 0.0, %v2013
  %v2015 = vpop.f32.mrf.mxu0
  %2016 = vmatprep.mubr.f32.mxu0 0.0
  %2017 = vmatmul.mubr.f32.gmra.mxu0 %v819
  %v2018 = vpop.f32.mrf.mxu0
  %v2019 = vadd.f32 0.0, %v2018
  %v2020 = vpop.f32.mrf.mxu0
  %2021 = vmatprep.mubr.f32.mxu0 0.0
  %2022 = vmatmul.mubr.f32.gmra.mxu0 %v822
  %v2023 = vpop.f32.mrf.mxu0
  %v2024 = vadd.f32 0.0, %v2023
  %v2025 = vpop.f32.mrf.mxu0
  %2026 = vmatprep.mubr.f32.mxu0 0.0
  %2027 = vmatmul.mubr.f32.gmra.mxu0 %v825
  %v2028 = vpop.f32.mrf.mxu0
  %v2029 = vadd.f32 0.0, %v2028
  %v2030 = vpop.f32.mrf.mxu0
  %2031 = vmatprep.mubr.f32.mxu0 0.0
  %2032 = vmatmul.mubr.f32.gmra.mxu0 %v828
  %v2033 = vpop.f32.mrf.mxu0
  %v2034 = vadd.f32 0.0, %v2033
  %v2035 = vpop.f32.mrf.mxu0
  %2036 = vmatprep.mubr.f32.mxu0 0.0
  %2037 = vmatmul.mubr.f32.gmra.mxu0 %v831
  %v2038 = vpop.f32.mrf.mxu0
  %v2039 = vadd.f32 0.0, %v2038
  %v2040 = vpop.f32.mrf.mxu0
  %2041 = vmatprep.mubr.f32.mxu0 0.0
  %2042 = vmatmul.mubr.f32.gmra.mxu0 %v834
  %v2043 = vpop.f32.mrf.mxu0
  %v2044 = vadd.f32 0.0, %v2043
  %v2045 = vpop.f32.mrf.mxu0
  %2046 = vmatprep.mubr.f32.mxu0 0.0
  %2047 = vmatmul.mubr.f32.gmra.mxu0 %v837
  %v2048 = vpop.f32.mrf.mxu0
  %v2049 = vadd.f32 0.0, %v2048
  %v2050 = vpop.f32.mrf.mxu0
  %2051 = vmatprep.mubr.f32.mxu0 0.0
  %2052 = vmatmul.mubr.f32.gmra.mxu0 %v840
  %v2053 = vpop.f32.mrf.mxu0
  %v2054 = vadd.f32 0.0, %v2053
  %v2055 = vpop.f32.mrf.mxu0
  %2056 = vmatprep.mubr.f32.mxu0 0.0
  %2057 = vmatmul.mubr.f32.gmra.mxu0 %v843
  %v2058 = vpop.f32.mrf.mxu0
  %v2059 = vadd.f32 0.0, %v2058
  %v2060 = vpop.f32.mrf.mxu0
  %2061 = vmatprep.mubr.f32.mxu0 0.0
  %2062 = vmatmul.mubr.f32.gmra.mxu0 %v846
  %v2063 = vpop.f32.mrf.mxu0
  %v2064 = vadd.f32 0.0, %v2063
  %v2065 = vpop.f32.mrf.mxu0
  %2066 = vmatprep.mubr.f32.mxu0 0.0
  %2067 = vmatmul.mubr.f32.gmra.mxu0 %v849
  %v2068 = vpop.f32.mrf.mxu0
  %v2069 = vadd.f32 0.0, %v2068
  %v2070 = vpop.f32.mrf.mxu0
  %2071 = vmatprep.mubr.f32.mxu0 0.0
  %2072 = vmatmul.mubr.f32.gmra.mxu0 %v852
  %v2073 = vpop.f32.mrf.mxu0
  %v2074 = vadd.f32 0.0, %v2073
  %v2075 = vpop.f32.mrf.mxu0
  %2076 = vmatprep.mubr.f32.mxu0 0.0
  %2077 = vmatmul.mubr.f32.gmra.mxu0 %v855
  %v2078 = vpop.f32.mrf.mxu0
  %v2079 = vadd.f32 0.0, %v2078
  %v2080 = vpop.f32.mrf.mxu0
  %2081 = vmatprep.mubr.f32.mxu0 0.0
  %2082 = vmatmul.mubr.f32.gmra.mxu0 %v858
  %v2083 = vpop.f32.mrf.mxu0
  %v2084 = vadd.f32 0.0, %v2083
  %v2085 = vpop.f32.mrf.mxu0
  %2086 = vmatprep.mubr.f32.mxu0 0.0
  %2087 = vmatmul.mubr.f32.gmra.mxu0 %v861
  %v2088 = vpop.f32.mrf.mxu0
  %v2089 = vadd.f32 0.0, %v2088
  %v2090 = vpop.f32.mrf.mxu0
  %2091 = vmatprep.mubr.f32.mxu0 0.0
  %2092 = vmatmul.mubr.f32.gmra.mxu0 %v864
  %v2093 = vpop.f32.mrf.mxu0
  %v2094 = vadd.f32 0.0, %v2093
  %v2095 = vpop.f32.mrf.mxu0
  %2096 = vmatprep.mubr.f32.mxu0 0.0
  %2097 = vmatmul.mubr.f32.gmra.mxu0 %v867
  %v2098 = vpop.f32.mrf.mxu0
  %v2099 = vadd.f32 0.0, %v2098
  %v2100 = vpop.f32.mrf.mxu0
  %2101 = vmatprep.mubr.f32.mxu0 0.0
  %2102 = vmatmul.mubr.f32.gmra.mxu0 %v870
  %v2103 = vpop.f32.mrf.mxu0
  %v2104 = vadd.f32 0.0, %v2103
  %v2105 = vpop.f32.mrf.mxu0
  %2106 = vmatprep.mubr.f32.mxu0 0.0
  %2107 = vmatmul.mubr.f32.gmra.mxu0 %v873
  %v2108 = vpop.f32.mrf.mxu0
  %v2109 = vadd.f32 0.0, %v2108
  %v2110 = vpop.f32.mrf.mxu0
  %2111 = vmatprep.mubr.f32.mxu0 0.0
  %2112 = vmatmul.mubr.f32.gmra.mxu0 %v876
  %v2113 = vpop.f32.mrf.mxu0
  %v2114 = vadd.f32 0.0, %v2113
  %v2115 = vpop.f32.mrf.mxu0
  %2116 = vmatprep.mubr.f32.mxu0 0.0
  %2117 = vmatmul.mubr.f32.gmra.mxu0 %v879
  %v2118 = vpop.f32.mrf.mxu0
  %v2119 = vadd.f32 0.0, %v2118
  %v2120 = vpop.f32.mrf.mxu0
  %2121 = vmatprep.mubr.f32.mxu0 0.0
  %2122 = vmatmul.mubr.f32.gmra.mxu0 %v882
  %v2123 = vpop.f32.mrf.mxu0
  %v2124 = vadd.f32 0.0, %v2123
  %v2125 = vpop.f32.mrf.mxu0
  %2126 = vmatprep.mubr.f32.mxu0 0.0
  %2127 = vmatmul.mubr.f32.gmra.mxu0 %v885
  %v2128 = vpop.f32.mrf.mxu0
  %v2129 = vadd.f32 0.0, %v2128
  %v2130 = vpop.f32.mrf.mxu0
  %2131 = vmatprep.mubr.f32.mxu0 0.0
  %2132 = vmatmul.mubr.f32.gmra.mxu0 %v888
  %v2133 = vpop.f32.mrf.mxu0
  %v2134 = vadd.f32 0.0, %v2133
  %v2135 = vpop.f32.mrf.mxu0
  %2136 = vmatprep.mubr.f32.mxu0 0.0
  %2137 = vmatmul.mubr.f32.gmra.mxu0 %v891
  %v2138 = vpop.f32.mrf.mxu0
  %v2139 = vadd.f32 0.0, %v2138
  %v2140 = vpop.f32.mrf.mxu0
  %2141 = vmatprep.mubr.f32.mxu0 0.0
  %2142 = vmatmul.mubr.f32.gmra.mxu0 %v894
  %v2143 = vpop.f32.mrf.mxu0
  %v2144 = vadd.f32 0.0, %v2143
  %v2145 = vpop.f32.mrf.mxu0
  %2146 = vmatprep.mubr.f32.mxu0 0.0
  %2147 = vmatmul.mubr.f32.gmra.mxu0 %v897
  %v2148 = vpop.f32.mrf.mxu0
  %v2149 = vadd.f32 0.0, %v2148
  %v2150 = vpop.f32.mrf.mxu0
  %2151 = vmatprep.mubr.f32.mxu0 0.0
  %2152 = vmatmul.mubr.f32.gmra.mxu0 %v900
  %v2153 = vpop.f32.mrf.mxu0
  %v2154 = vadd.f32 0.0, %v2153
  %v2155 = vpop.f32.mrf.mxu0
  %2156 = vmatprep.mubr.f32.mxu0 0.0
  %2157 = vmatmul.mubr.f32.gmra.mxu0 %v903
  %v2158 = vpop.f32.mrf.mxu0
  %v2159 = vadd.f32 0.0, %v2158
  %v2160 = vpop.f32.mrf.mxu0
  %2161 = vmatprep.mubr.f32.mxu0 0.0
  %2162 = vmatmul.mubr.f32.gmra.mxu0 %v906
  %v2163 = vpop.f32.mrf.mxu0
  %v2164 = vadd.f32 0.0, %v2163
  %v2165 = vpop.f32.mrf.mxu0
  %2166 = vmatprep.mubr.f32.mxu0 0.0
  %2167 = vmatmul.mubr.f32.gmra.mxu0 %v909
  %v2168 = vpop.f32.mrf.mxu0
  %v2169 = vadd.f32 0.0, %v2168
  %v2170 = vpop.f32.mrf.mxu0
  %2171 = vmatprep.mubr.f32.mxu0 0.0
  %2172 = vmatmul.mubr.f32.gmra.mxu0 %v912
  %v2173 = vpop.f32.mrf.mxu0
  %v2174 = vadd.f32 0.0, %v2173
  %v2175 = vpop.f32.mrf.mxu0
  %2176 = vmatprep.mubr.f32.mxu0 0.0
  %2177 = vmatmul.mubr.f32.gmra.mxu0 %v915
  %v2178 = vpop.f32.mrf.mxu0
  %v2179 = vadd.f32 0.0, %v2178
  %v2180 = vpop.f32.mrf.mxu0
  %2181 = vmatprep.mubr.f32.mxu0 0.0
  %2182 = vmatmul.mubr.f32.gmra.mxu0 %v918
  %v2183 = vpop.f32.mrf.mxu0
  %v2184 = vadd.f32 0.0, %v2183
  %v2185 = vpop.f32.mrf.mxu0
  %2186 = vmatprep.mubr.f32.mxu0 0.0
  %2187 = vmatmul.mubr.f32.gmra.mxu0 %v921
  %v2188 = vpop.f32.mrf.mxu0
  %v2189 = vadd.f32 0.0, %v2188
  %v2190 = vpop.f32.mrf.mxu0
  %2191 = vmatprep.mubr.f32.mxu0 0.0
  %2192 = vmatmul.mubr.f32.gmra.mxu0 %v924
  %v2193 = vpop.f32.mrf.mxu0
  %v2194 = vadd.f32 0.0, %v2193
  %v2195 = vpop.f32.mrf.mxu0
  %2196 = vmatprep.mubr.f32.mxu0 0.0
  %2197 = vmatmul.mubr.f32.gmra.mxu0 %v927
  %v2198 = vpop.f32.mrf.mxu0
  %v2199 = vadd.f32 0.0, %v2198
  %v2200 = vpop.f32.mrf.mxu0
  %2201 = vmatprep.mubr.f32.mxu0 0.0
  %2202 = vmatmul.mubr.f32.gmra.mxu0 %v930
  %v2203 = vpop.f32.mrf.mxu0
  %v2204 = vadd.f32 0.0, %v2203
  %v2205 = vpop.f32.mrf.mxu0
  %2206 = vmatprep.mubr.f32.mxu0 0.0
  %2207 = vmatmul.mubr.f32.gmra.mxu0 %v933
  %v2208 = vpop.f32.mrf.mxu0
  %v2209 = vadd.f32 0.0, %v2208
  %v2210 = vpop.f32.mrf.mxu0
  %2211 = vmatprep.mubr.f32.mxu0 0.0
  %2212 = vmatmul.mubr.f32.gmra.mxu0 %v936
  %v2213 = vpop.f32.mrf.mxu0
  %v2214 = vadd.f32 0.0, %v2213
  %v2215 = vpop.f32.mrf.mxu0
  %2216 = vmatprep.mubr.f32.mxu0 0.0
  %2217 = vmatmul.mubr.f32.gmra.mxu0 %v939
  %v2218 = vpop.f32.mrf.mxu0
  %v2219 = vadd.f32 0.0, %v2218
  %v2220 = vpop.f32.mrf.mxu0
  %2221 = vmatprep.mubr.f32.mxu0 0.0
  %2222 = vmatmul.mubr.f32.gmra.mxu0 %v942
  %v2223 = vpop.f32.mrf.mxu0
  %v2224 = vadd.f32 0.0, %v2223
  %v2225 = vpop.f32.mrf.mxu0
  %2226 = vmatprep.mubr.f32.mxu0 0.0
  %2227 = vmatmul.mubr.f32.gmra.mxu0 %v945
  %v2228 = vpop.f32.mrf.mxu0
  %v2229 = vadd.f32 0.0, %v2228
  %v2230 = vpop.f32.mrf.mxu0
  %2231 = vmatprep.mubr.f32.mxu0 0.0
  %2232 = vmatmul.mubr.f32.gmra.mxu0 %v948
  %v2233 = vpop.f32.mrf.mxu0
  %v2234 = vadd.f32 0.0, %v2233
  %v2235 = vpop.f32.mrf.mxu0
  %2236 = vmatprep.mubr.f32.mxu0 0.0
  %2237 = vmatmul.mubr.f32.gmra.mxu0 %v951
  %v2238 = vpop.f32.mrf.mxu0
  %v2239 = vadd.f32 0.0, %v2238
  %v2240 = vpop.f32.mrf.mxu0
  %2241 = vmatprep.mubr.f32.mxu0 0.0
  %2242 = vmatmul.mubr.f32.gmra.mxu0 %v954
  %v2243 = vpop.f32.mrf.mxu0
  %v2244 = vadd.f32 0.0, %v2243
  %v2245 = vpop.f32.mrf.mxu0
  %2246 = vmatprep.mubr.f32.mxu0 0.0
  %2247 = vmatmul.mubr.f32.gmra.mxu0 %v957
  %v2248 = vpop.f32.mrf.mxu0
  %v2249 = vadd.f32 0.0, %v2248
  %v2250 = vpop.f32.mrf.mxu0
  %2251 = vmatprep.mubr.f32.mxu0 0.0
  %2252 = vmatmul.mubr.f32.gmra.mxu0 %v960
  %v2253 = vpop.f32.mrf.mxu0
  %v2254 = vadd.f32 0.0, %v2253
  %v2255 = vpop.f32.mrf.mxu0
  %2256 = vmatprep.mubr.f32.mxu0 0.0
  %2257 = vmatmul.mubr.f32.gmra.mxu0 %v963
  %v2258 = vpop.f32.mrf.mxu0
  %v2259 = vadd.f32 0.0, %v2258
  %v2260 = vpop.f32.mrf.mxu0
  %2261 = vmatprep.mubr.f32.mxu0 0.0
  %2262 = vmatmul.mubr.f32.gmra.mxu0 %v966
  %v2263 = vpop.f32.mrf.mxu0
  %v2264 = vadd.f32 0.0, %v2263
  %v2265 = vpop.f32.mrf.mxu0
  %2266 = vmatprep.mubr.f32.mxu0 0.0
  %2267 = vmatmul.mubr.f32.gmra.mxu0 %v969
  %v2268 = vpop.f32.mrf.mxu0
  %v2269 = vadd.f32 0.0, %v2268
  %v2270 = vpop.f32.mrf.mxu0
  %2271 = vmatprep.mubr.f32.mxu0 0.0
  %2272 = vmatmul.mubr.f32.gmra.mxu0 %v972
  %v2273 = vpop.f32.mrf.mxu0
  %v2274 = vadd.f32 0.0, %v2273
  %v2275 = vpop.f32.mrf.mxu0
  %2276 = vmatprep.mubr.f32.mxu0 0.0
  %2277 = vmatmul.mubr.f32.gmra.mxu0 %v975
  %v2278 = vpop.f32.mrf.mxu0
  %v2279 = vadd.f32 0.0, %v2278
  %v2280 = vpop.f32.mrf.mxu0
  %2281 = vmatprep.mubr.f32.mxu0 0.0
  %2282 = vmatmul.mubr.f32.gmra.mxu0 %v978
  %v2283 = vpop.f32.mrf.mxu0
  %v2284 = vadd.f32 0.0, %v2283
  %v2285 = vpop.f32.mrf.mxu0
  %2286 = vmatprep.mubr.f32.mxu0 0.0
  %2287 = vmatmul.mubr.f32.gmra.mxu0 %v981
  %v2288 = vpop.f32.mrf.mxu0
  %v2289 = vadd.f32 0.0, %v2288
  %v2290 = vpop.f32.mrf.mxu0
  %2291 = vmatprep.mubr.f32.mxu0 0.0
  %2292 = vmatmul.mubr.f32.gmra.mxu0 %v984
  %v2293 = vpop.f32.mrf.mxu0
  %v2294 = vadd.f32 0.0, %v2293
  %v2295 = vpop.f32.mrf.mxu0
  %2296 = vmatprep.mubr.f32.mxu0 0.0
  %2297 = vmatmul.mubr.f32.gmra.mxu0 %v987
  %v2298 = vpop.f32.mrf.mxu0
  %v2299 = vadd.f32 0.0, %v2298
  %v2300 = vpop.f32.mrf.mxu0
  %2301 = vmatprep.mubr.f32.mxu0 0.0
  %2302 = vmatmul.mubr.f32.gmra.mxu0 %v990
  %v2303 = vpop.f32.mrf.mxu0
  %v2304 = vadd.f32 0.0, %v2303
  %v2305 = vpop.f32.mrf.mxu0
  %2306 = vmatprep.mubr.f32.mxu0 0.0
  %2307 = vmatmul.mubr.f32.gmra.mxu0 %v993
  %v2308 = vpop.f32.mrf.mxu0
  %v2309 = vadd.f32 0.0, %v2308
  %v2310 = vpop.f32.mrf.mxu0
  %2311 = vmatprep.mubr.f32.mxu0 0.0
  %2312 = vmatmul.mubr.f32.gmra.mxu0 %v996
  %v2313 = vpop.f32.mrf.mxu0
  %v2314 = vadd.f32 0.0, %v2313
  %v2315 = vpop.f32.mrf.mxu0
  %2316 = vmatprep.mubr.f32.mxu0 0.0
  %2317 = vmatmul.mubr.f32.gmra.mxu0 %v999
  %v2318 = vpop.f32.mrf.mxu0
  %v2319 = vadd.f32 0.0, %v2318
  %v2320 = vpop.f32.mrf.mxu0
  %2321 = vmatprep.mubr.f32.mxu0 0.0
  %2322 = vmatmul.mubr.f32.gmra.mxu0 %v1002
  %v2323 = vpop.f32.mrf.mxu0
  %v2324 = vadd.f32 0.0, %v2323
  %v2325 = vpop.f32.mrf.mxu0
  %2326 = vmatprep.mubr.f32.mxu0 0.0
  %2327 = vmatmul.mubr.f32.gmra.mxu0 %v1005
  %v2328 = vpop.f32.mrf.mxu0
  %v2329 = vadd.f32 0.0, %v2328
  %v2330 = vpop.f32.mrf.mxu0
  %2331 = vmatprep.mubr.f32.mxu0 0.0
  %2332 = vmatmul.mubr.f32.gmra.mxu0 %v1008
  %v2333 = vpop.f32.mrf.mxu0
  %v2334 = vadd.f32 0.0, %v2333
  %v2335 = vpop.f32.mrf.mxu0
  %2336 = vmatprep.mubr.f32.mxu0 0.0
  %2337 = vmatmul.mubr.f32.gmra.mxu0 %v1011
  %v2338 = vpop.f32.mrf.mxu0
  %v2339 = vadd.f32 0.0, %v2338
  %v2340 = vpop.f32.mrf.mxu0
  %2341 = vmatprep.mubr.f32.mxu0 0.0
  %2342 = vmatmul.mubr.f32.gmra.mxu0 %v1014
  %v2343 = vpop.f32.mrf.mxu0
  %v2344 = vadd.f32 0.0, %v2343
  %v2345 = vpop.f32.mrf.mxu0
  %2346 = vmatprep.mubr.f32.mxu0 0.0
  %2347 = vmatmul.mubr.f32.gmra.mxu0 %v1017
  %v2348 = vpop.f32.mrf.mxu0
  %v2349 = vadd.f32 0.0, %v2348
  %v2350 = vpop.f32.mrf.mxu0
  %2351 = vmatprep.mubr.f32.mxu0 0.0
  %2352 = vmatmul.mubr.f32.gmra.mxu0 %v1020
  %v2353 = vpop.f32.mrf.mxu0
  %v2354 = vadd.f32 0.0, %v2353
  %v2355 = vpop.f32.mrf.mxu0
  %2356 = vmatprep.mubr.f32.mxu0 0.0
  %2357 = vmatmul.mubr.f32.gmra.mxu0 %v1023
  %v2358 = vpop.f32.mrf.mxu0
  %v2359 = vadd.f32 0.0, %v2358
  %v2360 = vpop.f32.mrf.mxu0
  %2361 = vmatprep.mubr.f32.mxu0 0.0
  %2362 = vmatmul.mubr.f32.gmra.mxu0 %v1026
  %v2363 = vpop.f32.mrf.mxu0
  %v2364 = vadd.f32 0.0, %v2363
  %v2365 = vpop.f32.mrf.mxu0
  %2366 = vmatprep.mubr.f32.mxu0 0.0
  %2367 = vmatmul.mubr.f32.gmra.mxu0 %v1029
  %v2368 = vpop.f32.mrf.mxu0
  %v2369 = vadd.f32 0.0, %v2368
  %v2370 = vpop.f32.mrf.mxu0
  %2371 = vmatprep.mubr.f32.mxu0 0.0
  %2372 = vmatmul.mubr.f32.gmra.mxu0 %v1032
  %v2373 = vpop.f32.mrf.mxu0
  %v2374 = vadd.f32 0.0, %v2373
  %v2375 = vpop.f32.mrf.mxu0
  %2376 = vmatprep.mubr.f32.mxu0 0.0
  %2377 = vmatmul.mubr.f32.gmra.mxu0 %v1035
  %v2378 = vpop.f32.mrf.mxu0
  %v2379 = vadd.f32 0.0, %v2378
  %v2380 = vpop.f32.mrf.mxu0
  %2381 = vmatprep.mubr.f32.mxu0 0.0
  %2382 = vmatmul.mubr.f32.gmra.mxu0 %v1038
  %v2383 = vpop.f32.mrf.mxu0
  %v2384 = vadd.f32 0.0, %v2383
  %v2385 = vpop.f32.mrf.mxu0
  %2386 = vmatprep.mubr.f32.mxu0 0.0
  %2387 = vmatmul.mubr.f32.gmra.mxu0 %v1041
  %v2388 = vpop.f32.mrf.mxu0
  %v2389 = vadd.f32 0.0, %v2388
  %v2390 = vpop.f32.mrf.mxu0
  %2391 = vdwg.mxu0
  %v2392 = vld [vmem:[%s2] sm:$0x1]
  %v2394 = vlaneseq
  %v2395 = vshrl.u32 %v2394, 7
  %v2396 = vsub.s32 0, %v2395
  %v2397 = vrot.slane %v2392, %v2396
  %v2399 = vmul.f32 %v1114, %v2397
  %v2400 = vmul.f32 %v1119, %v2397
  %v2401 = vmul.f32 %v1124, %v2397
  %v2402 = vmul.f32 %v1129, %v2397
  %v2403 = vmul.f32 %v1134, %v2397
  %v2404 = vmul.f32 %v1139, %v2397
  %v2405 = vmul.f32 %v1144, %v2397
  %v2406 = vmul.f32 %v1149, %v2397
  %v2407 = vmul.f32 %v1154, %v2397
  %v2408 = vmul.f32 %v1159, %v2397
  %v2409 = vmul.f32 %v1164, %v2397
  %v2410 = vmul.f32 %v1169, %v2397
  %v2411 = vmul.f32 %v1174, %v2397
  %v2412 = vmul.f32 %v1179, %v2397
  %v2413 = vmul.f32 %v1184, %v2397
  %v2414 = vmul.f32 %v1189, %v2397
  %v2415 = vmul.f32 %v1194, %v2397
  %v2416 = vmul.f32 %v1199, %v2397
  %v2417 = vmul.f32 %v1204, %v2397
  %v2418 = vmul.f32 %v1209, %v2397
  %v2419 = vmul.f32 %v1214, %v2397
  %v2420 = vmul.f32 %v1219, %v2397
  %v2421 = vmul.f32 %v1224, %v2397
  %v2422 = vmul.f32 %v1229, %v2397
  %v2423 = vmul.f32 %v1234, %v2397
  %v2424 = vmul.f32 %v1239, %v2397
  %v2425 = vmul.f32 %v1244, %v2397
  %v2426 = vmul.f32 %v1249, %v2397
  %v2427 = vmul.f32 %v1254, %v2397
  %v2428 = vmul.f32 %v1259, %v2397
  %v2429 = vmul.f32 %v1264, %v2397
  %v2430 = vmul.f32 %v1269, %v2397
  %v2431 = vmul.f32 %v1274, %v2397
  %v2432 = vmul.f32 %v1279, %v2397
  %v2433 = vmul.f32 %v1284, %v2397
  %v2434 = vmul.f32 %v1289, %v2397
  %v2435 = vmul.f32 %v1294, %v2397
  %v2436 = vmul.f32 %v1299, %v2397
  %v2437 = vmul.f32 %v1304, %v2397
  %v2438 = vmul.f32 %v1309, %v2397
  %v2439 = vmul.f32 %v1314, %v2397
  %v2440 = vmul.f32 %v1319, %v2397
  %v2441 = vmul.f32 %v1324, %v2397
  %v2442 = vmul.f32 %v1329, %v2397
  %v2443 = vmul.f32 %v1334, %v2397
  %v2444 = vmul.f32 %v1339, %v2397
  %v2445 = vmul.f32 %v1344, %v2397
  %v2446 = vmul.f32 %v1349, %v2397
  %v2447 = vmul.f32 %v1354, %v2397
  %v2448 = vmul.f32 %v1359, %v2397
  %v2449 = vmul.f32 %v1364, %v2397
  %v2450 = vmul.f32 %v1369, %v2397
  %v2451 = vmul.f32 %v1374, %v2397
  %v2452 = vmul.f32 %v1379, %v2397
  %v2453 = vmul.f32 %v1384, %v2397
  %v2454 = vmul.f32 %v1389, %v2397
  %v2455 = vmul.f32 %v1394, %v2397
  %v2456 = vmul.f32 %v1399, %v2397
  %v2457 = vmul.f32 %v1404, %v2397
  %v2458 = vmul.f32 %v1409, %v2397
  %v2459 = vmul.f32 %v1414, %v2397
  %v2460 = vmul.f32 %v1419, %v2397
  %v2461 = vmul.f32 %v1424, %v2397
  %v2462 = vmul.f32 %v1429, %v2397
  %v2463 = vmul.f32 %v1434, %v2397
  %v2464 = vmul.f32 %v1439, %v2397
  %v2465 = vmul.f32 %v1444, %v2397
  %v2466 = vmul.f32 %v1449, %v2397
  %v2467 = vmul.f32 %v1454, %v2397
  %v2468 = vmul.f32 %v1459, %v2397
  %v2469 = vmul.f32 %v1464, %v2397
  %v2470 = vmul.f32 %v1469, %v2397
  %v2471 = vmul.f32 %v1474, %v2397
  %v2472 = vmul.f32 %v1479, %v2397
  %v2473 = vmul.f32 %v1484, %v2397
  %v2474 = vmul.f32 %v1489, %v2397
  %v2475 = vmul.f32 %v1494, %v2397
  %v2476 = vmul.f32 %v1499, %v2397
  %v2477 = vmul.f32 %v1504, %v2397
  %v2478 = vmul.f32 %v1509, %v2397
  %v2479 = vmul.f32 %v1514, %v2397
  %v2480 = vmul.f32 %v1519, %v2397
  %v2481 = vmul.f32 %v1524, %v2397
  %v2482 = vmul.f32 %v1529, %v2397
  %v2483 = vmul.f32 %v1534, %v2397
  %v2484 = vmul.f32 %v1539, %v2397
  %v2485 = vmul.f32 %v1544, %v2397
  %v2486 = vmul.f32 %v1549, %v2397
  %v2487 = vmul.f32 %v1554, %v2397
  %v2488 = vmul.f32 %v1559, %v2397
  %v2489 = vmul.f32 %v1564, %v2397
  %v2490 = vmul.f32 %v1569, %v2397
  %v2491 = vmul.f32 %v1574, %v2397
  %v2492 = vmul.f32 %v1579, %v2397
  %v2493 = vmul.f32 %v1584, %v2397
  %v2494 = vmul.f32 %v1589, %v2397
  %v2495 = vmul.f32 %v1594, %v2397
  %v2496 = vmul.f32 %v1599, %v2397
  %v2497 = vmul.f32 %v1604, %v2397
  %v2498 = vmul.f32 %v1609, %v2397
  %v2499 = vmul.f32 %v1614, %v2397
  %v2500 = vmul.f32 %v1619, %v2397
  %v2501 = vmul.f32 %v1624, %v2397
  %v2502 = vmul.f32 %v1629, %v2397
  %v2503 = vmul.f32 %v1634, %v2397
  %v2504 = vmul.f32 %v1639, %v2397
  %v2505 = vmul.f32 %v1644, %v2397
  %v2506 = vmul.f32 %v1649, %v2397
  %v2507 = vmul.f32 %v1654, %v2397
  %v2508 = vmul.f32 %v1659, %v2397
  %v2509 = vmul.f32 %v1664, %v2397
  %v2510 = vmul.f32 %v1669, %v2397
  %v2511 = vmul.f32 %v1674, %v2397
  %v2512 = vmul.f32 %v1679, %v2397
  %v2513 = vmul.f32 %v1684, %v2397
  %v2514 = vmul.f32 %v1689, %v2397
  %v2515 = vmul.f32 %v1694, %v2397
  %v2516 = vmul.f32 %v1699, %v2397
  %v2517 = vmul.f32 %v1704, %v2397
  %v2518 = vmul.f32 %v1709, %v2397
  %v2519 = vmul.f32 %v1714, %v2397
  %v2520 = vmul.f32 %v1719, %v2397
  %v2521 = vmul.f32 %v1724, %v2397
  %v2522 = vmul.f32 %v1729, %v2397
  %v2523 = vmul.f32 %v1734, %v2397
  %v2524 = vmul.f32 %v1739, %v2397
  %v2525 = vmul.f32 %v1744, %v2397
  %v2526 = vmul.f32 %v1749, %v2397
  %v2527 = vmul.f32 %v1754, %v2397
  %v2528 = vmul.f32 %v1759, %v2397
  %v2529 = vmul.f32 %v1764, %v2397
  %v2530 = vmul.f32 %v1769, %v2397
  %v2531 = vmul.f32 %v1774, %v2397
  %v2532 = vmul.f32 %v1779, %v2397
  %v2533 = vmul.f32 %v1784, %v2397
  %v2534 = vmul.f32 %v1789, %v2397
  %v2535 = vmul.f32 %v1794, %v2397
  %v2536 = vmul.f32 %v1799, %v2397
  %v2537 = vmul.f32 %v1804, %v2397
  %v2538 = vmul.f32 %v1809, %v2397
  %v2539 = vmul.f32 %v1814, %v2397
  %v2540 = vmul.f32 %v1819, %v2397
  %v2541 = vmul.f32 %v1824, %v2397
  %v2542 = vmul.f32 %v1829, %v2397
  %v2543 = vmul.f32 %v1834, %v2397
  %v2544 = vmul.f32 %v1839, %v2397
  %v2545 = vmul.f32 %v1844, %v2397
  %v2546 = vmul.f32 %v1849, %v2397
  %v2547 = vmul.f32 %v1854, %v2397
  %v2548 = vmul.f32 %v1859, %v2397
  %v2549 = vmul.f32 %v1864, %v2397
  %v2550 = vmul.f32 %v1869, %v2397
  %v2551 = vmul.f32 %v1874, %v2397
  %v2552 = vmul.f32 %v1879, %v2397
  %v2553 = vmul.f32 %v1884, %v2397
  %v2554 = vmul.f32 %v1889, %v2397
  %v2555 = vmul.f32 %v1894, %v2397
  %v2556 = vmul.f32 %v1899, %v2397
  %v2557 = vmul.f32 %v1904, %v2397
  %v2558 = vmul.f32 %v1909, %v2397
  %v2559 = vmul.f32 %v1914, %v2397
  %v2560 = vmul.f32 %v1919, %v2397
  %v2561 = vmul.f32 %v1924, %v2397
  %v2562 = vmul.f32 %v1929, %v2397
  %v2563 = vmul.f32 %v1934, %v2397
  %v2564 = vmul.f32 %v1939, %v2397
  %v2565 = vmul.f32 %v1944, %v2397
  %v2566 = vmul.f32 %v1949, %v2397
  %v2567 = vmul.f32 %v1954, %v2397
  %v2568 = vmul.f32 %v1959, %v2397
  %v2569 = vmul.f32 %v1964, %v2397
  %v2570 = vmul.f32 %v1969, %v2397
  %v2571 = vmul.f32 %v1974, %v2397
  %v2572 = vmul.f32 %v1979, %v2397
  %v2573 = vmul.f32 %v1984, %v2397
  %v2574 = vmul.f32 %v1989, %v2397
  %v2575 = vmul.f32 %v1994, %v2397
  %v2576 = vmul.f32 %v1999, %v2397
  %v2577 = vmul.f32 %v2004, %v2397
  %v2578 = vmul.f32 %v2009, %v2397
  %v2579 = vmul.f32 %v2014, %v2397
  %v2580 = vmul.f32 %v2019, %v2397
  %v2581 = vmul.f32 %v2024, %v2397
  %v2582 = vmul.f32 %v2029, %v2397
  %v2583 = vmul.f32 %v2034, %v2397
  %v2584 = vmul.f32 %v2039, %v2397
  %v2585 = vmul.f32 %v2044, %v2397
  %v2586 = vmul.f32 %v2049, %v2397
  %v2587 = vmul.f32 %v2054, %v2397
  %v2588 = vmul.f32 %v2059, %v2397
  %v2589 = vmul.f32 %v2064, %v2397
  %v2590 = vmul.f32 %v2069, %v2397
  %v2591 = vmul.f32 %v2074, %v2397
  %v2592 = vmul.f32 %v2079, %v2397
  %v2593 = vmul.f32 %v2084, %v2397
  %v2594 = vmul.f32 %v2089, %v2397
  %v2595 = vmul.f32 %v2094, %v2397
  %v2596 = vmul.f32 %v2099, %v2397
  %v2597 = vmul.f32 %v2104, %v2397
  %v2598 = vmul.f32 %v2109, %v2397
  %v2599 = vmul.f32 %v2114, %v2397
  %v2600 = vmul.f32 %v2119, %v2397
  %v2601 = vmul.f32 %v2124, %v2397
  %v2602 = vmul.f32 %v2129, %v2397
  %v2603 = vmul.f32 %v2134, %v2397
  %v2604 = vmul.f32 %v2139, %v2397
  %v2605 = vmul.f32 %v2144, %v2397
  %v2606 = vmul.f32 %v2149, %v2397
  %v2607 = vmul.f32 %v2154, %v2397
  %v2608 = vmul.f32 %v2159, %v2397
  %v2609 = vmul.f32 %v2164, %v2397
  %v2610 = vmul.f32 %v2169, %v2397
  %v2611 = vmul.f32 %v2174, %v2397
  %v2612 = vmul.f32 %v2179, %v2397
  %v2613 = vmul.f32 %v2184, %v2397
  %v2614 = vmul.f32 %v2189, %v2397
  %v2615 = vmul.f32 %v2194, %v2397
  %v2616 = vmul.f32 %v2199, %v2397
  %v2617 = vmul.f32 %v2204, %v2397
  %v2618 = vmul.f32 %v2209, %v2397
  %v2619 = vmul.f32 %v2214, %v2397
  %v2620 = vmul.f32 %v2219, %v2397
  %v2621 = vmul.f32 %v2224, %v2397
  %v2622 = vmul.f32 %v2229, %v2397
  %v2623 = vmul.f32 %v2234, %v2397
  %v2624 = vmul.f32 %v2239, %v2397
  %v2625 = vmul.f32 %v2244, %v2397
  %v2626 = vmul.f32 %v2249, %v2397
  %v2627 = vmul.f32 %v2254, %v2397
  %v2628 = vmul.f32 %v2259, %v2397
  %v2629 = vmul.f32 %v2264, %v2397
  %v2630 = vmul.f32 %v2269, %v2397
  %v2631 = vmul.f32 %v2274, %v2397
  %v2632 = vmul.f32 %v2279, %v2397
  %v2633 = vmul.f32 %v2284, %v2397
  %v2634 = vmul.f32 %v2289, %v2397
  %v2635 = vmul.f32 %v2294, %v2397
  %v2636 = vmul.f32 %v2299, %v2397
  %v2637 = vmul.f32 %v2304, %v2397
  %v2638 = vmul.f32 %v2309, %v2397
  %v2639 = vmul.f32 %v2314, %v2397
  %v2640 = vmul.f32 %v2319, %v2397
  %v2641 = vmul.f32 %v2324, %v2397
  %v2642 = vmul.f32 %v2329, %v2397
  %v2643 = vmul.f32 %v2334, %v2397
  %v2644 = vmul.f32 %v2339, %v2397
  %v2645 = vmul.f32 %v2344, %v2397
  %v2646 = vmul.f32 %v2349, %v2397
  %v2647 = vmul.f32 %v2354, %v2397
  %v2648 = vmul.f32 %v2359, %v2397
  %v2649 = vmul.f32 %v2364, %v2397
  %v2650 = vmul.f32 %v2369, %v2397
  %v2651 = vmul.f32 %v2374, %v2397
  %v2652 = vmul.f32 %v2379, %v2397
  %v2653 = vmul.f32 %v2384, %v2397
  %v2654 = vmul.f32 %v2389, %v2397
  %v2655 = vld [vmem:[%s3] sm:$0x1]
  %v2657 = vlaneseq
  %v2658 = vshrl.u32 %v2657, 7
  %v2659 = vsub.s32 0, %v2658
  %v2660 = vrot.slane %v2655, %v2659
  %v2662 = vadd.f32 %v2399, %v2660
  %v2663 = vadd.f32 %v2400, %v2660
  %v2664 = vadd.f32 %v2401, %v2660
  %v2665 = vadd.f32 %v2402, %v2660
  %v2666 = vadd.f32 %v2403, %v2660
  %v2667 = vadd.f32 %v2404, %v2660
  %v2668 = vadd.f32 %v2405, %v2660
  %v2669 = vadd.f32 %v2406, %v2660
  %v2670 = vadd.f32 %v2407, %v2660
  %v2671 = vadd.f32 %v2408, %v2660
  %v2672 = vadd.f32 %v2409, %v2660
  %v2673 = vadd.f32 %v2410, %v2660
  %v2674 = vadd.f32 %v2411, %v2660
  %v2675 = vadd.f32 %v2412, %v2660
  %v2676 = vadd.f32 %v2413, %v2660
  %v2677 = vadd.f32 %v2414, %v2660
  %v2678 = vadd.f32 %v2415, %v2660
  %v2679 = vadd.f32 %v2416, %v2660
  %v2680 = vadd.f32 %v2417, %v2660
  %v2681 = vadd.f32 %v2418, %v2660
  %v2682 = vadd.f32 %v2419, %v2660
  %v2683 = vadd.f32 %v2420, %v2660
  %v2684 = vadd.f32 %v2421, %v2660
  %v2685 = vadd.f32 %v2422, %v2660
  %v2686 = vadd.f32 %v2423, %v2660
  %v2687 = vadd.f32 %v2424, %v2660
  %v2688 = vadd.f32 %v2425, %v2660
  %v2689 = vadd.f32 %v2426, %v2660
  %v2690 = vadd.f32 %v2427, %v2660
  %v2691 = vadd.f32 %v2428, %v2660
  %v2692 = vadd.f32 %v2429, %v2660
  %v2693 = vadd.f32 %v2430, %v2660
  %v2694 = vadd.f32 %v2431, %v2660
  %v2695 = vadd.f32 %v2432, %v2660
  %v2696 = vadd.f32 %v2433, %v2660
  %v2697 = vadd.f32 %v2434, %v2660
  %v2698 = vadd.f32 %v2435, %v2660
  %v2699 = vadd.f32 %v2436, %v2660
  %v2700 = vadd.f32 %v2437, %v2660
  %v2701 = vadd.f32 %v2438, %v2660
  %v2702 = vadd.f32 %v2439, %v2660
  %v2703 = vadd.f32 %v2440, %v2660
  %v2704 = vadd.f32 %v2441, %v2660
  %v2705 = vadd.f32 %v2442, %v2660
  %v2706 = vadd.f32 %v2443, %v2660
  %v2707 = vadd.f32 %v2444, %v2660
  %v2708 = vadd.f32 %v2445, %v2660
  %v2709 = vadd.f32 %v2446, %v2660
  %v2710 = vadd.f32 %v2447, %v2660
  %v2711 = vadd.f32 %v2448, %v2660
  %v2712 = vadd.f32 %v2449, %v2660
  %v2713 = vadd.f32 %v2450, %v2660
  %v2714 = vadd.f32 %v2451, %v2660
  %v2715 = vadd.f32 %v2452, %v2660
  %v2716 = vadd.f32 %v2453, %v2660
  %v2717 = vadd.f32 %v2454, %v2660
  %v2718 = vadd.f32 %v2455, %v2660
  %v2719 = vadd.f32 %v2456, %v2660
  %v2720 = vadd.f32 %v2457, %v2660
  %v2721 = vadd.f32 %v2458, %v2660
  %v2722 = vadd.f32 %v2459, %v2660
  %v2723 = vadd.f32 %v2460, %v2660
  %v2724 = vadd.f32 %v2461, %v2660
  %v2725 = vadd.f32 %v2462, %v2660
  %v2726 = vadd.f32 %v2463, %v2660
  %v2727 = vadd.f32 %v2464, %v2660
  %v2728 = vadd.f32 %v2465, %v2660
  %v2729 = vadd.f32 %v2466, %v2660
  %v2730 = vadd.f32 %v2467, %v2660
  %v2731 = vadd.f32 %v2468, %v2660
  %v2732 = vadd.f32 %v2469, %v2660
  %v2733 = vadd.f32 %v2470, %v2660
  %v2734 = vadd.f32 %v2471, %v2660
  %v2735 = vadd.f32 %v2472, %v2660
  %v2736 = vadd.f32 %v2473, %v2660
  %v2737 = vadd.f32 %v2474, %v2660
  %v2738 = vadd.f32 %v2475, %v2660
  %v2739 = vadd.f32 %v2476, %v2660
  %v2740 = vadd.f32 %v2477, %v2660
  %v2741 = vadd.f32 %v2478, %v2660
  %v2742 = vadd.f32 %v2479, %v2660
  %v2743 = vadd.f32 %v2480, %v2660
  %v2744 = vadd.f32 %v2481, %v2660
  %v2745 = vadd.f32 %v2482, %v2660
  %v2746 = vadd.f32 %v2483, %v2660
  %v2747 = vadd.f32 %v2484, %v2660
  %v2748 = vadd.f32 %v2485, %v2660
  %v2749 = vadd.f32 %v2486, %v2660
  %v2750 = vadd.f32 %v2487, %v2660
  %v2751 = vadd.f32 %v2488, %v2660
  %v2752 = vadd.f32 %v2489, %v2660
  %v2753 = vadd.f32 %v2490, %v2660
  %v2754 = vadd.f32 %v2491, %v2660
  %v2755 = vadd.f32 %v2492, %v2660
  %v2756 = vadd.f32 %v2493, %v2660
  %v2757 = vadd.f32 %v2494, %v2660
  %v2758 = vadd.f32 %v2495, %v2660
  %v2759 = vadd.f32 %v2496, %v2660
  %v2760 = vadd.f32 %v2497, %v2660
  %v2761 = vadd.f32 %v2498, %v2660
  %v2762 = vadd.f32 %v2499, %v2660
  %v2763 = vadd.f32 %v2500, %v2660
  %v2764 = vadd.f32 %v2501, %v2660
  %v2765 = vadd.f32 %v2502, %v2660
  %v2766 = vadd.f32 %v2503, %v2660
  %v2767 = vadd.f32 %v2504, %v2660
  %v2768 = vadd.f32 %v2505, %v2660
  %v2769 = vadd.f32 %v2506, %v2660
  %v2770 = vadd.f32 %v2507, %v2660
  %v2771 = vadd.f32 %v2508, %v2660
  %v2772 = vadd.f32 %v2509, %v2660
  %v2773 = vadd.f32 %v2510, %v2660
  %v2774 = vadd.f32 %v2511, %v2660
  %v2775 = vadd.f32 %v2512, %v2660
  %v2776 = vadd.f32 %v2513, %v2660
  %v2777 = vadd.f32 %v2514, %v2660
  %v2778 = vadd.f32 %v2515, %v2660
  %v2779 = vadd.f32 %v2516, %v2660
  %v2780 = vadd.f32 %v2517, %v2660
  %v2781 = vadd.f32 %v2518, %v2660
  %v2782 = vadd.f32 %v2519, %v2660
  %v2783 = vadd.f32 %v2520, %v2660
  %v2784 = vadd.f32 %v2521, %v2660
  %v2785 = vadd.f32 %v2522, %v2660
  %v2786 = vadd.f32 %v2523, %v2660
  %v2787 = vadd.f32 %v2524, %v2660
  %v2788 = vadd.f32 %v2525, %v2660
  %v2789 = vadd.f32 %v2526, %v2660
  %v2790 = vadd.f32 %v2527, %v2660
  %v2791 = vadd.f32 %v2528, %v2660
  %v2792 = vadd.f32 %v2529, %v2660
  %v2793 = vadd.f32 %v2530, %v2660
  %v2794 = vadd.f32 %v2531, %v2660
  %v2795 = vadd.f32 %v2532, %v2660
  %v2796 = vadd.f32 %v2533, %v2660
  %v2797 = vadd.f32 %v2534, %v2660
  %v2798 = vadd.f32 %v2535, %v2660
  %v2799 = vadd.f32 %v2536, %v2660
  %v2800 = vadd.f32 %v2537, %v2660
  %v2801 = vadd.f32 %v2538, %v2660
  %v2802 = vadd.f32 %v2539, %v2660
  %v2803 = vadd.f32 %v2540, %v2660
  %v2804 = vadd.f32 %v2541, %v2660
  %v2805 = vadd.f32 %v2542, %v2660
  %v2806 = vadd.f32 %v2543, %v2660
  %v2807 = vadd.f32 %v2544, %v2660
  %v2808 = vadd.f32 %v2545, %v2660
  %v2809 = vadd.f32 %v2546, %v2660
  %v2810 = vadd.f32 %v2547, %v2660
  %v2811 = vadd.f32 %v2548, %v2660
  %v2812 = vadd.f32 %v2549, %v2660
  %v2813 = vadd.f32 %v2550, %v2660
  %v2814 = vadd.f32 %v2551, %v2660
  %v2815 = vadd.f32 %v2552, %v2660
  %v2816 = vadd.f32 %v2553, %v2660
  %v2817 = vadd.f32 %v2554, %v2660
  %v2818 = vadd.f32 %v2555, %v2660
  %v2819 = vadd.f32 %v2556, %v2660
  %v2820 = vadd.f32 %v2557, %v2660
  %v2821 = vadd.f32 %v2558, %v2660
  %v2822 = vadd.f32 %v2559, %v2660
  %v2823 = vadd.f32 %v2560, %v2660
  %v2824 = vadd.f32 %v2561, %v2660
  %v2825 = vadd.f32 %v2562, %v2660
  %v2826 = vadd.f32 %v2563, %v2660
  %v2827 = vadd.f32 %v2564, %v2660
  %v2828 = vadd.f32 %v2565, %v2660
  %v2829 = vadd.f32 %v2566, %v2660
  %v2830 = vadd.f32 %v2567, %v2660
  %v2831 = vadd.f32 %v2568, %v2660
  %v2832 = vadd.f32 %v2569, %v2660
  %v2833 = vadd.f32 %v2570, %v2660
  %v2834 = vadd.f32 %v2571, %v2660
  %v2835 = vadd.f32 %v2572, %v2660
  %v2836 = vadd.f32 %v2573, %v2660
  %v2837 = vadd.f32 %v2574, %v2660
  %v2838 = vadd.f32 %v2575, %v2660
  %v2839 = vadd.f32 %v2576, %v2660
  %v2840 = vadd.f32 %v2577, %v2660
  %v2841 = vadd.f32 %v2578, %v2660
  %v2842 = vadd.f32 %v2579, %v2660
  %v2843 = vadd.f32 %v2580, %v2660
  %v2844 = vadd.f32 %v2581, %v2660
  %v2845 = vadd.f32 %v2582, %v2660
  %v2846 = vadd.f32 %v2583, %v2660
  %v2847 = vadd.f32 %v2584, %v2660
  %v2848 = vadd.f32 %v2585, %v2660
  %v2849 = vadd.f32 %v2586, %v2660
  %v2850 = vadd.f32 %v2587, %v2660
  %v2851 = vadd.f32 %v2588, %v2660
  %v2852 = vadd.f32 %v2589, %v2660
  %v2853 = vadd.f32 %v2590, %v2660
  %v2854 = vadd.f32 %v2591, %v2660
  %v2855 = vadd.f32 %v2592, %v2660
  %v2856 = vadd.f32 %v2593, %v2660
  %v2857 = vadd.f32 %v2594, %v2660
  %v2858 = vadd.f32 %v2595, %v2660
  %v2859 = vadd.f32 %v2596, %v2660
  %v2860 = vadd.f32 %v2597, %v2660
  %v2861 = vadd.f32 %v2598, %v2660
  %v2862 = vadd.f32 %v2599, %v2660
  %v2863 = vadd.f32 %v2600, %v2660
  %v2864 = vadd.f32 %v2601, %v2660
  %v2865 = vadd.f32 %v2602, %v2660
  %v2866 = vadd.f32 %v2603, %v2660
  %v2867 = vadd.f32 %v2604, %v2660
  %v2868 = vadd.f32 %v2605, %v2660
  %v2869 = vadd.f32 %v2606, %v2660
  %v2870 = vadd.f32 %v2607, %v2660
  %v2871 = vadd.f32 %v2608, %v2660
  %v2872 = vadd.f32 %v2609, %v2660
  %v2873 = vadd.f32 %v2610, %v2660
  %v2874 = vadd.f32 %v2611, %v2660
  %v2875 = vadd.f32 %v2612, %v2660
  %v2876 = vadd.f32 %v2613, %v2660
  %v2877 = vadd.f32 %v2614, %v2660
  %v2878 = vadd.f32 %v2615, %v2660
  %v2879 = vadd.f32 %v2616, %v2660
  %v2880 = vadd.f32 %v2617, %v2660
  %v2881 = vadd.f32 %v2618, %v2660
  %v2882 = vadd.f32 %v2619, %v2660
  %v2883 = vadd.f32 %v2620, %v2660
  %v2884 = vadd.f32 %v2621, %v2660
  %v2885 = vadd.f32 %v2622, %v2660
  %v2886 = vadd.f32 %v2623, %v2660
  %v2887 = vadd.f32 %v2624, %v2660
  %v2888 = vadd.f32 %v2625, %v2660
  %v2889 = vadd.f32 %v2626, %v2660
  %v2890 = vadd.f32 %v2627, %v2660
  %v2891 = vadd.f32 %v2628, %v2660
  %v2892 = vadd.f32 %v2629, %v2660
  %v2893 = vadd.f32 %v2630, %v2660
  %v2894 = vadd.f32 %v2631, %v2660
  %v2895 = vadd.f32 %v2632, %v2660
  %v2896 = vadd.f32 %v2633, %v2660
  %v2897 = vadd.f32 %v2634, %v2660
  %v2898 = vadd.f32 %v2635, %v2660
  %v2899 = vadd.f32 %v2636, %v2660
  %v2900 = vadd.f32 %v2637, %v2660
  %v2901 = vadd.f32 %v2638, %v2660
  %v2902 = vadd.f32 %v2639, %v2660
  %v2903 = vadd.f32 %v2640, %v2660
  %v2904 = vadd.f32 %v2641, %v2660
  %v2905 = vadd.f32 %v2642, %v2660
  %v2906 = vadd.f32 %v2643, %v2660
  %v2907 = vadd.f32 %v2644, %v2660
  %v2908 = vadd.f32 %v2645, %v2660
  %v2909 = vadd.f32 %v2646, %v2660
  %v2910 = vadd.f32 %v2647, %v2660
  %v2911 = vadd.f32 %v2648, %v2660
  %v2912 = vadd.f32 %v2649, %v2660
  %v2913 = vadd.f32 %v2650, %v2660
  %v2914 = vadd.f32 %v2651, %v2660
  %v2915 = vadd.f32 %v2652, %v2660
  %v2916 = vadd.f32 %v2653, %v2660
  %v2917 = vadd.f32 %v2654, %v2660
  %v2918 = vmax.f32 %v2662, 0.0
  %v2919 = vmax.f32 %v2663, 0.0
  %v2920 = vmax.f32 %v2664, 0.0
  %v2921 = vmax.f32 %v2665, 0.0
  %v2922 = vmax.f32 %v2666, 0.0
  %v2923 = vmax.f32 %v2667, 0.0
  %v2924 = vmax.f32 %v2668, 0.0
  %v2925 = vmax.f32 %v2669, 0.0
  %v2926 = vmax.f32 %v2670, 0.0
  %v2927 = vmax.f32 %v2671, 0.0
  %v2928 = vmax.f32 %v2672, 0.0
  %v2929 = vmax.f32 %v2673, 0.0
  %v2930 = vmax.f32 %v2674, 0.0
  %v2931 = vmax.f32 %v2675, 0.0
  %v2932 = vmax.f32 %v2676, 0.0
  %v2933 = vmax.f32 %v2677, 0.0
  %v2934 = vmax.f32 %v2678, 0.0
  %v2935 = vmax.f32 %v2679, 0.0
  %v2936 = vmax.f32 %v2680, 0.0
  %v2937 = vmax.f32 %v2681, 0.0
  %v2938 = vmax.f32 %v2682, 0.0
  %v2939 = vmax.f32 %v2683, 0.0
  %v2940 = vmax.f32 %v2684, 0.0
  %v2941 = vmax.f32 %v2685, 0.0
  %v2942 = vmax.f32 %v2686, 0.0
  %v2943 = vmax.f32 %v2687, 0.0
  %v2944 = vmax.f32 %v2688, 0.0
  %v2945 = vmax.f32 %v2689, 0.0
  %v2946 = vmax.f32 %v2690, 0.0
  %v2947 = vmax.f32 %v2691, 0.0
  %v2948 = vmax.f32 %v2692, 0.0
  %v2949 = vmax.f32 %v2693, 0.0
  %v2950 = vmax.f32 %v2694, 0.0
  %v2951 = vmax.f32 %v2695, 0.0
  %v2952 = vmax.f32 %v2696, 0.0
  %v2953 = vmax.f32 %v2697, 0.0
  %v2954 = vmax.f32 %v2698, 0.0
  %v2955 = vmax.f32 %v2699, 0.0
  %v2956 = vmax.f32 %v2700, 0.0
  %v2957 = vmax.f32 %v2701, 0.0
  %v2958 = vmax.f32 %v2702, 0.0
  %v2959 = vmax.f32 %v2703, 0.0
  %v2960 = vmax.f32 %v2704, 0.0
  %v2961 = vmax.f32 %v2705, 0.0
  %v2962 = vmax.f32 %v2706, 0.0
  %v2963 = vmax.f32 %v2707, 0.0
  %v2964 = vmax.f32 %v2708, 0.0
  %v2965 = vmax.f32 %v2709, 0.0
  %v2966 = vmax.f32 %v2710, 0.0
  %v2967 = vmax.f32 %v2711, 0.0
  %v2968 = vmax.f32 %v2712, 0.0
  %v2969 = vmax.f32 %v2713, 0.0
  %v2970 = vmax.f32 %v2714, 0.0
  %v2971 = vmax.f32 %v2715, 0.0
  %v2972 = vmax.f32 %v2716, 0.0
  %v2973 = vmax.f32 %v2717, 0.0
  %v2974 = vmax.f32 %v2718, 0.0
  %v2975 = vmax.f32 %v2719, 0.0
  %v2976 = vmax.f32 %v2720, 0.0
  %v2977 = vmax.f32 %v2721, 0.0
  %v2978 = vmax.f32 %v2722, 0.0
  %v2979 = vmax.f32 %v2723, 0.0
  %v2980 = vmax.f32 %v2724, 0.0
  %v2981 = vmax.f32 %v2725, 0.0
  %v2982 = vmax.f32 %v2726, 0.0
  %v2983 = vmax.f32 %v2727, 0.0
  %v2984 = vmax.f32 %v2728, 0.0
  %v2985 = vmax.f32 %v2729, 0.0
  %v2986 = vmax.f32 %v2730, 0.0
  %v2987 = vmax.f32 %v2731, 0.0
  %v2988 = vmax.f32 %v2732, 0.0
  %v2989 = vmax.f32 %v2733, 0.0
  %v2990 = vmax.f32 %v2734, 0.0
  %v2991 = vmax.f32 %v2735, 0.0
  %v2992 = vmax.f32 %v2736, 0.0
  %v2993 = vmax.f32 %v2737, 0.0
  %v2994 = vmax.f32 %v2738, 0.0
  %v2995 = vmax.f32 %v2739, 0.0
  %v2996 = vmax.f32 %v2740, 0.0
  %v2997 = vmax.f32 %v2741, 0.0
  %v2998 = vmax.f32 %v2742, 0.0
  %v2999 = vmax.f32 %v2743, 0.0
  %v3000 = vmax.f32 %v2744, 0.0
  %v3001 = vmax.f32 %v2745, 0.0
  %v3002 = vmax.f32 %v2746, 0.0
  %v3003 = vmax.f32 %v2747, 0.0
  %v3004 = vmax.f32 %v2748, 0.0
  %v3005 = vmax.f32 %v2749, 0.0
  %v3006 = vmax.f32 %v2750, 0.0
  %v3007 = vmax.f32 %v2751, 0.0
  %v3008 = vmax.f32 %v2752, 0.0
  %v3009 = vmax.f32 %v2753, 0.0
  %v3010 = vmax.f32 %v2754, 0.0
  %v3011 = vmax.f32 %v2755, 0.0
  %v3012 = vmax.f32 %v2756, 0.0
  %v3013 = vmax.f32 %v2757, 0.0
  %v3014 = vmax.f32 %v2758, 0.0
  %v3015 = vmax.f32 %v2759, 0.0
  %v3016 = vmax.f32 %v2760, 0.0
  %v3017 = vmax.f32 %v2761, 0.0
  %v3018 = vmax.f32 %v2762, 0.0
  %v3019 = vmax.f32 %v2763, 0.0
  %v3020 = vmax.f32 %v2764, 0.0
  %v3021 = vmax.f32 %v2765, 0.0
  %v3022 = vmax.f32 %v2766, 0.0
  %v3023 = vmax.f32 %v2767, 0.0
  %v3024 = vmax.f32 %v2768, 0.0
  %v3025 = vmax.f32 %v2769, 0.0
  %v3026 = vmax.f32 %v2770, 0.0
  %v3027 = vmax.f32 %v2771, 0.0
  %v3028 = vmax.f32 %v2772, 0.0
  %v3029 = vmax.f32 %v2773, 0.0
  %v3030 = vmax.f32 %v2774, 0.0
  %v3031 = vmax.f32 %v2775, 0.0
  %v3032 = vmax.f32 %v2776, 0.0
  %v3033 = vmax.f32 %v2777, 0.0
  %v3034 = vmax.f32 %v2778, 0.0
  %v3035 = vmax.f32 %v2779, 0.0
  %v3036 = vmax.f32 %v2780, 0.0
  %v3037 = vmax.f32 %v2781, 0.0
  %v3038 = vmax.f32 %v2782, 0.0
  %v3039 = vmax.f32 %v2783, 0.0
  %v3040 = vmax.f32 %v2784, 0.0
  %v3041 = vmax.f32 %v2785, 0.0
  %v3042 = vmax.f32 %v2786, 0.0
  %v3043 = vmax.f32 %v2787, 0.0
  %v3044 = vmax.f32 %v2788, 0.0
  %v3045 = vmax.f32 %v2789, 0.0
  %v3046 = vmax.f32 %v2790, 0.0
  %v3047 = vmax.f32 %v2791, 0.0
  %v3048 = vmax.f32 %v2792, 0.0
  %v3049 = vmax.f32 %v2793, 0.0
  %v3050 = vmax.f32 %v2794, 0.0
  %v3051 = vmax.f32 %v2795, 0.0
  %v3052 = vmax.f32 %v2796, 0.0
  %v3053 = vmax.f32 %v2797, 0.0
  %v3054 = vmax.f32 %v2798, 0.0
  %v3055 = vmax.f32 %v2799, 0.0
  %v3056 = vmax.f32 %v2800, 0.0
  %v3057 = vmax.f32 %v2801, 0.0
  %v3058 = vmax.f32 %v2802, 0.0
  %v3059 = vmax.f32 %v2803, 0.0
  %v3060 = vmax.f32 %v2804, 0.0
  %v3061 = vmax.f32 %v2805, 0.0
  %v3062 = vmax.f32 %v2806, 0.0
  %v3063 = vmax.f32 %v2807, 0.0
  %v3064 = vmax.f32 %v2808, 0.0
  %v3065 = vmax.f32 %v2809, 0.0
  %v3066 = vmax.f32 %v2810, 0.0
  %v3067 = vmax.f32 %v2811, 0.0
  %v3068 = vmax.f32 %v2812, 0.0
  %v3069 = vmax.f32 %v2813, 0.0
  %v3070 = vmax.f32 %v2814, 0.0
  %v3071 = vmax.f32 %v2815, 0.0
  %v3072 = vmax.f32 %v2816, 0.0
  %v3073 = vmax.f32 %v2817, 0.0
  %v3074 = vmax.f32 %v2818, 0.0
  %v3075 = vmax.f32 %v2819, 0.0
  %v3076 = vmax.f32 %v2820, 0.0
  %v3077 = vmax.f32 %v2821, 0.0
  %v3078 = vmax.f32 %v2822, 0.0
  %v3079 = vmax.f32 %v2823, 0.0
  %v3080 = vmax.f32 %v2824, 0.0
  %v3081 = vmax.f32 %v2825, 0.0
  %v3082 = vmax.f32 %v2826, 0.0
  %v3083 = vmax.f32 %v2827, 0.0
  %v3084 = vmax.f32 %v2828, 0.0
  %v3085 = vmax.f32 %v2829, 0.0
  %v3086 = vmax.f32 %v2830, 0.0
  %v3087 = vmax.f32 %v2831, 0.0
  %v3088 = vmax.f32 %v2832, 0.0
  %v3089 = vmax.f32 %v2833, 0.0
  %v3090 = vmax.f32 %v2834, 0.0
  %v3091 = vmax.f32 %v2835, 0.0
  %v3092 = vmax.f32 %v2836, 0.0
  %v3093 = vmax.f32 %v2837, 0.0
  %v3094 = vmax.f32 %v2838, 0.0
  %v3095 = vmax.f32 %v2839, 0.0
  %v3096 = vmax.f32 %v2840, 0.0
  %v3097 = vmax.f32 %v2841, 0.0
  %v3098 = vmax.f32 %v2842, 0.0
  %v3099 = vmax.f32 %v2843, 0.0
  %v3100 = vmax.f32 %v2844, 0.0
  %v3101 = vmax.f32 %v2845, 0.0
  %v3102 = vmax.f32 %v2846, 0.0
  %v3103 = vmax.f32 %v2847, 0.0
  %v3104 = vmax.f32 %v2848, 0.0
  %v3105 = vmax.f32 %v2849, 0.0
  %v3106 = vmax.f32 %v2850, 0.0
  %v3107 = vmax.f32 %v2851, 0.0
  %v3108 = vmax.f32 %v2852, 0.0
  %v3109 = vmax.f32 %v2853, 0.0
  %v3110 = vmax.f32 %v2854, 0.0
  %v3111 = vmax.f32 %v2855, 0.0
  %v3112 = vmax.f32 %v2856, 0.0
  %v3113 = vmax.f32 %v2857, 0.0
  %v3114 = vmax.f32 %v2858, 0.0
  %v3115 = vmax.f32 %v2859, 0.0
  %v3116 = vmax.f32 %v2860, 0.0
  %v3117 = vmax.f32 %v2861, 0.0
  %v3118 = vmax.f32 %v2862, 0.0
  %v3119 = vmax.f32 %v2863, 0.0
  %v3120 = vmax.f32 %v2864, 0.0
  %v3121 = vmax.f32 %v2865, 0.0
  %v3122 = vmax.f32 %v2866, 0.0
  %v3123 = vmax.f32 %v2867, 0.0
  %v3124 = vmax.f32 %v2868, 0.0
  %v3125 = vmax.f32 %v2869, 0.0
  %v3126 = vmax.f32 %v2870, 0.0
  %v3127 = vmax.f32 %v2871, 0.0
  %v3128 = vmax.f32 %v2872, 0.0
  %v3129 = vmax.f32 %v2873, 0.0
  %v3130 = vmax.f32 %v2874, 0.0
  %v3131 = vmax.f32 %v2875, 0.0
  %v3132 = vmax.f32 %v2876, 0.0
  %v3133 = vmax.f32 %v2877, 0.0
  %v3134 = vmax.f32 %v2878, 0.0
  %v3135 = vmax.f32 %v2879, 0.0
  %v3136 = vmax.f32 %v2880, 0.0
  %v3137 = vmax.f32 %v2881, 0.0
  %v3138 = vmax.f32 %v2882, 0.0
  %v3139 = vmax.f32 %v2883, 0.0
  %v3140 = vmax.f32 %v2884, 0.0
  %v3141 = vmax.f32 %v2885, 0.0
  %v3142 = vmax.f32 %v2886, 0.0
  %v3143 = vmax.f32 %v2887, 0.0
  %v3144 = vmax.f32 %v2888, 0.0
  %v3145 = vmax.f32 %v2889, 0.0
  %v3146 = vmax.f32 %v2890, 0.0
  %v3147 = vmax.f32 %v2891, 0.0
  %v3148 = vmax.f32 %v2892, 0.0
  %v3149 = vmax.f32 %v2893, 0.0
  %v3150 = vmax.f32 %v2894, 0.0
  %v3151 = vmax.f32 %v2895, 0.0
  %v3152 = vmax.f32 %v2896, 0.0
  %v3153 = vmax.f32 %v2897, 0.0
  %v3154 = vmax.f32 %v2898, 0.0
  %v3155 = vmax.f32 %v2899, 0.0
  %v3156 = vmax.f32 %v2900, 0.0
  %v3157 = vmax.f32 %v2901, 0.0
  %v3158 = vmax.f32 %v2902, 0.0
  %v3159 = vmax.f32 %v2903, 0.0
  %v3160 = vmax.f32 %v2904, 0.0
  %v3161 = vmax.f32 %v2905, 0.0
  %v3162 = vmax.f32 %v2906, 0.0
  %v3163 = vmax.f32 %v2907, 0.0
  %v3164 = vmax.f32 %v2908, 0.0
  %v3165 = vmax.f32 %v2909, 0.0
  %v3166 = vmax.f32 %v2910, 0.0
  %v3167 = vmax.f32 %v2911, 0.0
  %v3168 = vmax.f32 %v2912, 0.0
  %v3169 = vmax.f32 %v2913, 0.0
  %v3170 = vmax.f32 %v2914, 0.0
  %v3171 = vmax.f32 %v2915, 0.0
  %v3172 = vmax.f32 %v2916, 0.0
  %v3173 = vmax.f32 %v2917, 0.0
  %vm3174 = vcmask 195584
  %3175 = vst.msk [vmem:[%s4] sm:$0xff] %vm3174, %v2918
  %3176 = vst.msk [vmem:[%s4 + $0x8] sm:$0xff] %vm3174, %v2919
  %3177 = vst.msk [vmem:[%s4 + $0x10] sm:$0xff] %vm3174, %v2920
  %3178 = vst.msk [vmem:[%s4 + $0x18] sm:$0xff] %vm3174, %v2921
  %3179 = vst.msk [vmem:[%s4 + $0x20] sm:$0xff] %vm3174, %v2922
  %3180 = vst.msk [vmem:[%s4 + $0x28] sm:$0xff] %vm3174, %v2923
  %3181 = vst.msk [vmem:[%s4 + $0x30] sm:$0xff] %vm3174, %v2924
  %3182 = vst.msk [vmem:[%s4 + $0x38] sm:$0xff] %vm3174, %v2925
  %3183 = vst.msk [vmem:[%s4 + $0x40] sm:$0xff] %vm3174, %v2926
  %3184 = vst.msk [vmem:[%s4 + $0x48] sm:$0xff] %vm3174, %v2927
  %3185 = vst.msk [vmem:[%s4 + $0x50] sm:$0xff] %vm3174, %v2928
  %3186 = vst.msk [vmem:[%s4 + $0x58] sm:$0xff] %vm3174, %v2929
  %3187 = vst.msk [vmem:[%s4 + $0x60] sm:$0xff] %vm3174, %v2930
  %3188 = vst.msk [vmem:[%s4 + $0x68] sm:$0xff] %vm3174, %v2931
  %3189 = vst.msk [vmem:[%s4 + $0x70] sm:$0xff] %vm3174, %v2932
  %3190 = vst.msk [vmem:[%s4 + $0x78] sm:$0xff] %vm3174, %v2933
  %3191 = vst.msk [vmem:[%s4 + $0x80] sm:$0xff] %vm3174, %v2934
  %3192 = vst.msk [vmem:[%s4 + $0x88] sm:$0xff] %vm3174, %v2935
  %3193 = vst.msk [vmem:[%s4 + $0x90] sm:$0xff] %vm3174, %v2936
  %3194 = vst.msk [vmem:[%s4 + $0x98] sm:$0xff] %vm3174, %v2937
  %3195 = vst.msk [vmem:[%s4 + $0xa0] sm:$0xff] %vm3174, %v2938
  %3196 = vst.msk [vmem:[%s4 + $0xa8] sm:$0xff] %vm3174, %v2939
  %3197 = vst.msk [vmem:[%s4 + $0xb0] sm:$0xff] %vm3174, %v2940
  %3198 = vst.msk [vmem:[%s4 + $0xb8] sm:$0xff] %vm3174, %v2941
  %3199 = vst.msk [vmem:[%s4 + $0xc0] sm:$0xff] %vm3174, %v2942
  %3200 = vst.msk [vmem:[%s4 + $0xc8] sm:$0xff] %vm3174, %v2943
  %3201 = vst.msk [vmem:[%s4 + $0xd0] sm:$0xff] %vm3174, %v2944
  %3202 = vst.msk [vmem:[%s4 + $0xd8] sm:$0xff] %vm3174, %v2945
  %3203 = vst.msk [vmem:[%s4 + $0xe0] sm:$0xff] %vm3174, %v2946
  %3204 = vst.msk [vmem:[%s4 + $0xe8] sm:$0xff] %vm3174, %v2947
  %3205 = vst.msk [vmem:[%s4 + $0xf0] sm:$0xff] %vm3174, %v2948
  %3206 = vst.msk [vmem:[%s4 + $0xf8] sm:$0xff] %vm3174, %v2949
  %3207 = vst.msk [vmem:[%s4 + $0x100] sm:$0xff] %vm3174, %v2950
  %3208 = vst.msk [vmem:[%s4 + $0x108] sm:$0xff] %vm3174, %v2951
  %3209 = vst.msk [vmem:[%s4 + $0x110] sm:$0xff] %vm3174, %v2952
  %3210 = vst.msk [vmem:[%s4 + $0x118] sm:$0xff] %vm3174, %v2953
  %3211 = vst.msk [vmem:[%s4 + $0x120] sm:$0xff] %vm3174, %v2954
  %3212 = vst.msk [vmem:[%s4 + $0x128] sm:$0xff] %vm3174, %v2955
  %3213 = vst.msk [vmem:[%s4 + $0x130] sm:$0xff] %vm3174, %v2956
  %3214 = vst.msk [vmem:[%s4 + $0x138] sm:$0xff] %vm3174, %v2957
  %3215 = vst.msk [vmem:[%s4 + $0x140] sm:$0xff] %vm3174, %v2958
  %3216 = vst.msk [vmem:[%s4 + $0x148] sm:$0xff] %vm3174, %v2959
  %3217 = vst.msk [vmem:[%s4 + $0x150] sm:$0xff] %vm3174, %v2960
  %3218 = vst.msk [vmem:[%s4 + $0x158] sm:$0xff] %vm3174, %v2961
  %3219 = vst.msk [vmem:[%s4 + $0x160] sm:$0xff] %vm3174, %v2962
  %3220 = vst.msk [vmem:[%s4 + $0x168] sm:$0xff] %vm3174, %v2963
  %3221 = vst.msk [vmem:[%s4 + $0x170] sm:$0xff] %vm3174, %v2964
  %3222 = vst.msk [vmem:[%s4 + $0x178] sm:$0xff] %vm3174, %v2965
  %3223 = vst.msk [vmem:[%s4 + $0x180] sm:$0xff] %vm3174, %v2966
  %3224 = vst.msk [vmem:[%s4 + $0x188] sm:$0xff] %vm3174, %v2967
  %3225 = vst.msk [vmem:[%s4 + $0x190] sm:$0xff] %vm3174, %v2968
  %3226 = vst.msk [vmem:[%s4 + $0x198] sm:$0xff] %vm3174, %v2969
  %3227 = vst.msk [vmem:[%s4 + $0x1a0] sm:$0xff] %vm3174, %v2970
  %3228 = vst.msk [vmem:[%s4 + $0x1a8] sm:$0xff] %vm3174, %v2971
  %3229 = vst.msk [vmem:[%s4 + $0x1b0] sm:$0xff] %vm3174, %v2972
  %3230 = vst.msk [vmem:[%s4 + $0x1b8] sm:$0xff] %vm3174, %v2973
  %3231 = vst.msk [vmem:[%s4 + $0x1c0] sm:$0xff] %vm3174, %v2974
  %3232 = vst.msk [vmem:[%s4 + $0x1c8] sm:$0xff] %vm3174, %v2975
  %3233 = vst.msk [vmem:[%s4 + $0x1d0] sm:$0xff] %vm3174, %v2976
  %3234 = vst.msk [vmem:[%s4 + $0x1d8] sm:$0xff] %vm3174, %v2977
  %3235 = vst.msk [vmem:[%s4 + $0x1e0] sm:$0xff] %vm3174, %v2978
  %3236 = vst.msk [vmem:[%s4 + $0x1e8] sm:$0xff] %vm3174, %v2979
  %3237 = vst.msk [vmem:[%s4 + $0x1f0] sm:$0xff] %vm3174, %v2980
  %3238 = vst.msk [vmem:[%s4 + $0x1f8] sm:$0xff] %vm3174, %v2981
  %3239 = vst.msk [vmem:[%s4 + $0x200] sm:$0xff] %vm3174, %v2982
  %3240 = vst.msk [vmem:[%s4 + $0x208] sm:$0xff] %vm3174, %v2983
  %3241 = vst.msk [vmem:[%s4 + $0x210] sm:$0xff] %vm3174, %v2984
  %3242 = vst.msk [vmem:[%s4 + $0x218] sm:$0xff] %vm3174, %v2985
  %3243 = vst.msk [vmem:[%s4 + $0x220] sm:$0xff] %vm3174, %v2986
  %3244 = vst.msk [vmem:[%s4 + $0x228] sm:$0xff] %vm3174, %v2987
  %3245 = vst.msk [vmem:[%s4 + $0x230] sm:$0xff] %vm3174, %v2988
  %3246 = vst.msk [vmem:[%s4 + $0x238] sm:$0xff] %vm3174, %v2989
  %3247 = vst.msk [vmem:[%s4 + $0x240] sm:$0xff] %vm3174, %v2990
  %3248 = vst.msk [vmem:[%s4 + $0x248] sm:$0xff] %vm3174, %v2991
  %3249 = vst.msk [vmem:[%s4 + $0x250] sm:$0xff] %vm3174, %v2992
  %3250 = vst.msk [vmem:[%s4 + $0x258] sm:$0xff] %vm3174, %v2993
  %3251 = vst.msk [vmem:[%s4 + $0x260] sm:$0xff] %vm3174, %v2994
  %3252 = vst.msk [vmem:[%s4 + $0x268] sm:$0xff] %vm3174, %v2995
  %3253 = vst.msk [vmem:[%s4 + $0x270] sm:$0xff] %vm3174, %v2996
  %3254 = vst.msk [vmem:[%s4 + $0x278] sm:$0xff] %vm3174, %v2997
  %3255 = vst.msk [vmem:[%s4 + $0x280] sm:$0xff] %vm3174, %v2998
  %3256 = vst.msk [vmem:[%s4 + $0x288] sm:$0xff] %vm3174, %v2999
  %3257 = vst.msk [vmem:[%s4 + $0x290] sm:$0xff] %vm3174, %v3000
  %3258 = vst.msk [vmem:[%s4 + $0x298] sm:$0xff] %vm3174, %v3001
  %3259 = vst.msk [vmem:[%s4 + $0x2a0] sm:$0xff] %vm3174, %v3002
  %3260 = vst.msk [vmem:[%s4 + $0x2a8] sm:$0xff] %vm3174, %v3003
  %3261 = vst.msk [vmem:[%s4 + $0x2b0] sm:$0xff] %vm3174, %v3004
  %3262 = vst.msk [vmem:[%s4 + $0x2b8] sm:$0xff] %vm3174, %v3005
  %3263 = vst.msk [vmem:[%s4 + $0x2c0] sm:$0xff] %vm3174, %v3006
  %3264 = vst.msk [vmem:[%s4 + $0x2c8] sm:$0xff] %vm3174, %v3007
  %3265 = vst.msk [vmem:[%s4 + $0x2d0] sm:$0xff] %vm3174, %v3008
  %3266 = vst.msk [vmem:[%s4 + $0x2d8] sm:$0xff] %vm3174, %v3009
  %3267 = vst.msk [vmem:[%s4 + $0x2e0] sm:$0xff] %vm3174, %v3010
  %3268 = vst.msk [vmem:[%s4 + $0x2e8] sm:$0xff] %vm3174, %v3011
  %3269 = vst.msk [vmem:[%s4 + $0x2f0] sm:$0xff] %vm3174, %v3012
  %3270 = vst.msk [vmem:[%s4 + $0x2f8] sm:$0xff] %vm3174, %v3013
  %3271 = vst.msk [vmem:[%s4 + $0x300] sm:$0xff] %vm3174, %v3014
  %3272 = vst.msk [vmem:[%s4 + $0x308] sm:$0xff] %vm3174, %v3015
  %3273 = vst.msk [vmem:[%s4 + $0x310] sm:$0xff] %vm3174, %v3016
  %3274 = vst.msk [vmem:[%s4 + $0x318] sm:$0xff] %vm3174, %v3017
  %3275 = vst.msk [vmem:[%s4 + $0x320] sm:$0xff] %vm3174, %v3018
  %3276 = vst.msk [vmem:[%s4 + $0x328] sm:$0xff] %vm3174, %v3019
  %3277 = vst.msk [vmem:[%s4 + $0x330] sm:$0xff] %vm3174, %v3020
  %3278 = vst.msk [vmem:[%s4 + $0x338] sm:$0xff] %vm3174, %v3021
  %3279 = vst.msk [vmem:[%s4 + $0x340] sm:$0xff] %vm3174, %v3022
  %3280 = vst.msk [vmem:[%s4 + $0x348] sm:$0xff] %vm3174, %v3023
  %3281 = vst.msk [vmem:[%s4 + $0x350] sm:$0xff] %vm3174, %v3024
  %3282 = vst.msk [vmem:[%s4 + $0x358] sm:$0xff] %vm3174, %v3025
  %3283 = vst.msk [vmem:[%s4 + $0x360] sm:$0xff] %vm3174, %v3026
  %3284 = vst.msk [vmem:[%s4 + $0x368] sm:$0xff] %vm3174, %v3027
  %3285 = vst.msk [vmem:[%s4 + $0x370] sm:$0xff] %vm3174, %v3028
  %3286 = vst.msk [vmem:[%s4 + $0x378] sm:$0xff] %vm3174, %v3029
  %3287 = vst.msk [vmem:[%s4 + $0x380] sm:$0xff] %vm3174, %v3030
  %3288 = vst.msk [vmem:[%s4 + $0x388] sm:$0xff] %vm3174, %v3031
  %3289 = vst.msk [vmem:[%s4 + $0x390] sm:$0xff] %vm3174, %v3032
  %3290 = vst.msk [vmem:[%s4 + $0x398] sm:$0xff] %vm3174, %v3033
  %3291 = vst.msk [vmem:[%s4 + $0x3a0] sm:$0xff] %vm3174, %v3034
  %3292 = vst.msk [vmem:[%s4 + $0x3a8] sm:$0xff] %vm3174, %v3035
  %3293 = vst.msk [vmem:[%s4 + $0x3b0] sm:$0xff] %vm3174, %v3036
  %3294 = vst.msk [vmem:[%s4 + $0x3b8] sm:$0xff] %vm3174, %v3037
  %3295 = vst.msk [vmem:[%s4 + $0x3c0] sm:$0xff] %vm3174, %v3038
  %3296 = vst.msk [vmem:[%s4 + $0x3c8] sm:$0xff] %vm3174, %v3039
  %3297 = vst.msk [vmem:[%s4 + $0x3d0] sm:$0xff] %vm3174, %v3040
  %3298 = vst.msk [vmem:[%s4 + $0x3d8] sm:$0xff] %vm3174, %v3041
  %3299 = vst.msk [vmem:[%s4 + $0x3e0] sm:$0xff] %vm3174, %v3042
  %3300 = vst.msk [vmem:[%s4 + $0x3e8] sm:$0xff] %vm3174, %v3043
  %3301 = vst.msk [vmem:[%s4 + $0x3f0] sm:$0xff] %vm3174, %v3044
  %3302 = vst.msk [vmem:[%s4 + $0x3f8] sm:$0xff] %vm3174, %v3045
  %3303 = vst.msk [vmem:[%s4 + $0x400] sm:$0xff] %vm3174, %v3046
  %3304 = vst.msk [vmem:[%s4 + $0x408] sm:$0xff] %vm3174, %v3047
  %3305 = vst.msk [vmem:[%s4 + $0x410] sm:$0xff] %vm3174, %v3048
  %3306 = vst.msk [vmem:[%s4 + $0x418] sm:$0xff] %vm3174, %v3049
  %3307 = vst.msk [vmem:[%s4 + $0x420] sm:$0xff] %vm3174, %v3050
  %3308 = vst.msk [vmem:[%s4 + $0x428] sm:$0xff] %vm3174, %v3051
  %3309 = vst.msk [vmem:[%s4 + $0x430] sm:$0xff] %vm3174, %v3052
  %3310 = vst.msk [vmem:[%s4 + $0x438] sm:$0xff] %vm3174, %v3053
  %3311 = vst.msk [vmem:[%s4 + $0x440] sm:$0xff] %vm3174, %v3054
  %3312 = vst.msk [vmem:[%s4 + $0x448] sm:$0xff] %vm3174, %v3055
  %3313 = vst.msk [vmem:[%s4 + $0x450] sm:$0xff] %vm3174, %v3056
  %3314 = vst.msk [vmem:[%s4 + $0x458] sm:$0xff] %vm3174, %v3057
  %3315 = vst.msk [vmem:[%s4 + $0x460] sm:$0xff] %vm3174, %v3058
  %3316 = vst.msk [vmem:[%s4 + $0x468] sm:$0xff] %vm3174, %v3059
  %3317 = vst.msk [vmem:[%s4 + $0x470] sm:$0xff] %vm3174, %v3060
  %3318 = vst.msk [vmem:[%s4 + $0x478] sm:$0xff] %vm3174, %v3061
  %3319 = vst.msk [vmem:[%s4 + $0x480] sm:$0xff] %vm3174, %v3062
  %3320 = vst.msk [vmem:[%s4 + $0x488] sm:$0xff] %vm3174, %v3063
  %3321 = vst.msk [vmem:[%s4 + $0x490] sm:$0xff] %vm3174, %v3064
  %3322 = vst.msk [vmem:[%s4 + $0x498] sm:$0xff] %vm3174, %v3065
  %3323 = vst.msk [vmem:[%s4 + $0x4a0] sm:$0xff] %vm3174, %v3066
  %3324 = vst.msk [vmem:[%s4 + $0x4a8] sm:$0xff] %vm3174, %v3067
  %3325 = vst.msk [vmem:[%s4 + $0x4b0] sm:$0xff] %vm3174, %v3068
  %3326 = vst.msk [vmem:[%s4 + $0x4b8] sm:$0xff] %vm3174, %v3069
  %3327 = vst.msk [vmem:[%s4 + $0x4c0] sm:$0xff] %vm3174, %v3070
  %3328 = vst.msk [vmem:[%s4 + $0x4c8] sm:$0xff] %vm3174, %v3071
  %3329 = vst.msk [vmem:[%s4 + $0x4d0] sm:$0xff] %vm3174, %v3072
  %3330 = vst.msk [vmem:[%s4 + $0x4d8] sm:$0xff] %vm3174, %v3073
  %3331 = vst.msk [vmem:[%s4 + $0x4e0] sm:$0xff] %vm3174, %v3074
  %3332 = vst.msk [vmem:[%s4 + $0x4e8] sm:$0xff] %vm3174, %v3075
  %3333 = vst.msk [vmem:[%s4 + $0x4f0] sm:$0xff] %vm3174, %v3076
  %3334 = vst.msk [vmem:[%s4 + $0x4f8] sm:$0xff] %vm3174, %v3077
  %3335 = vst.msk [vmem:[%s4 + $0x500] sm:$0xff] %vm3174, %v3078
  %3336 = vst.msk [vmem:[%s4 + $0x508] sm:$0xff] %vm3174, %v3079
  %3337 = vst.msk [vmem:[%s4 + $0x510] sm:$0xff] %vm3174, %v3080
  %3338 = vst.msk [vmem:[%s4 + $0x518] sm:$0xff] %vm3174, %v3081
  %3339 = vst.msk [vmem:[%s4 + $0x520] sm:$0xff] %vm3174, %v3082
  %3340 = vst.msk [vmem:[%s4 + $0x528] sm:$0xff] %vm3174, %v3083
  %3341 = vst.msk [vmem:[%s4 + $0x530] sm:$0xff] %vm3174, %v3084
  %3342 = vst.msk [vmem:[%s4 + $0x538] sm:$0xff] %vm3174, %v3085
  %3343 = vst.msk [vmem:[%s4 + $0x540] sm:$0xff] %vm3174, %v3086
  %3344 = vst.msk [vmem:[%s4 + $0x548] sm:$0xff] %vm3174, %v3087
  %3345 = vst.msk [vmem:[%s4 + $0x550] sm:$0xff] %vm3174, %v3088
  %3346 = vst.msk [vmem:[%s4 + $0x558] sm:$0xff] %vm3174, %v3089
  %3347 = vst.msk [vmem:[%s4 + $0x560] sm:$0xff] %vm3174, %v3090
  %3348 = vst.msk [vmem:[%s4 + $0x568] sm:$0xff] %vm3174, %v3091
  %3349 = vst.msk [vmem:[%s4 + $0x570] sm:$0xff] %vm3174, %v3092
  %3350 = vst.msk [vmem:[%s4 + $0x578] sm:$0xff] %vm3174, %v3093
  %3351 = vst.msk [vmem:[%s4 + $0x580] sm:$0xff] %vm3174, %v3094
  %3352 = vst.msk [vmem:[%s4 + $0x588] sm:$0xff] %vm3174, %v3095
  %3353 = vst.msk [vmem:[%s4 + $0x590] sm:$0xff] %vm3174, %v3096
  %3354 = vst.msk [vmem:[%s4 + $0x598] sm:$0xff] %vm3174, %v3097
  %3355 = vst.msk [vmem:[%s4 + $0x5a0] sm:$0xff] %vm3174, %v3098
  %3356 = vst.msk [vmem:[%s4 + $0x5a8] sm:$0xff] %vm3174, %v3099
  %3357 = vst.msk [vmem:[%s4 + $0x5b0] sm:$0xff] %vm3174, %v3100
  %3358 = vst.msk [vmem:[%s4 + $0x5b8] sm:$0xff] %vm3174, %v3101
  %3359 = vst.msk [vmem:[%s4 + $0x5c0] sm:$0xff] %vm3174, %v3102
  %3360 = vst.msk [vmem:[%s4 + $0x5c8] sm:$0xff] %vm3174, %v3103
  %3361 = vst.msk [vmem:[%s4 + $0x5d0] sm:$0xff] %vm3174, %v3104
  %3362 = vst.msk [vmem:[%s4 + $0x5d8] sm:$0xff] %vm3174, %v3105
  %3363 = vst.msk [vmem:[%s4 + $0x5e0] sm:$0xff] %vm3174, %v3106
  %3364 = vst.msk [vmem:[%s4 + $0x5e8] sm:$0xff] %vm3174, %v3107
  %3365 = vst.msk [vmem:[%s4 + $0x5f0] sm:$0xff] %vm3174, %v3108
  %3366 = vst.msk [vmem:[%s4 + $0x5f8] sm:$0xff] %vm3174, %v3109
  %3367 = vst.msk [vmem:[%s4 + $0x600] sm:$0xff] %vm3174, %v3110
  %3368 = vst.msk [vmem:[%s4 + $0x608] sm:$0xff] %vm3174, %v3111
  %3369 = vst.msk [vmem:[%s4 + $0x610] sm:$0xff] %vm3174, %v3112
  %3370 = vst.msk [vmem:[%s4 + $0x618] sm:$0xff] %vm3174, %v3113
  %3371 = vst.msk [vmem:[%s4 + $0x620] sm:$0xff] %vm3174, %v3114
  %3372 = vst.msk [vmem:[%s4 + $0x628] sm:$0xff] %vm3174, %v3115
  %3373 = vst.msk [vmem:[%s4 + $0x630] sm:$0xff] %vm3174, %v3116
  %3374 = vst.msk [vmem:[%s4 + $0x638] sm:$0xff] %vm3174, %v3117
  %3375 = vst.msk [vmem:[%s4 + $0x640] sm:$0xff] %vm3174, %v3118
  %3376 = vst.msk [vmem:[%s4 + $0x648] sm:$0xff] %vm3174, %v3119
  %3377 = vst.msk [vmem:[%s4 + $0x650] sm:$0xff] %vm3174, %v3120
  %3378 = vst.msk [vmem:[%s4 + $0x658] sm:$0xff] %vm3174, %v3121
  %3379 = vst.msk [vmem:[%s4 + $0x660] sm:$0xff] %vm3174, %v3122
  %3380 = vst.msk [vmem:[%s4 + $0x668] sm:$0xff] %vm3174, %v3123
  %3381 = vst.msk [vmem:[%s4 + $0x670] sm:$0xff] %vm3174, %v3124
  %3382 = vst.msk [vmem:[%s4 + $0x678] sm:$0xff] %vm3174, %v3125
  %3383 = vst.msk [vmem:[%s4 + $0x680] sm:$0xff] %vm3174, %v3126
  %3384 = vst.msk [vmem:[%s4 + $0x688] sm:$0xff] %vm3174, %v3127
  %3385 = vst.msk [vmem:[%s4 + $0x690] sm:$0xff] %vm3174, %v3128
  %3386 = vst.msk [vmem:[%s4 + $0x698] sm:$0xff] %vm3174, %v3129
  %3387 = vst.msk [vmem:[%s4 + $0x6a0] sm:$0xff] %vm3174, %v3130
  %3388 = vst.msk [vmem:[%s4 + $0x6a8] sm:$0xff] %vm3174, %v3131
  %3389 = vst.msk [vmem:[%s4 + $0x6b0] sm:$0xff] %vm3174, %v3132
  %3390 = vst.msk [vmem:[%s4 + $0x6b8] sm:$0xff] %vm3174, %v3133
  %3391 = vst.msk [vmem:[%s4 + $0x6c0] sm:$0xff] %vm3174, %v3134
  %3392 = vst.msk [vmem:[%s4 + $0x6c8] sm:$0xff] %vm3174, %v3135
  %3393 = vst.msk [vmem:[%s4 + $0x6d0] sm:$0xff] %vm3174, %v3136
  %3394 = vst.msk [vmem:[%s4 + $0x6d8] sm:$0xff] %vm3174, %v3137
  %3395 = vst.msk [vmem:[%s4 + $0x6e0] sm:$0xff] %vm3174, %v3138
  %3396 = vst.msk [vmem:[%s4 + $0x6e8] sm:$0xff] %vm3174, %v3139
  %3397 = vst.msk [vmem:[%s4 + $0x6f0] sm:$0xff] %vm3174, %v3140
  %3398 = vst.msk [vmem:[%s4 + $0x6f8] sm:$0xff] %vm3174, %v3141
  %3399 = vst.msk [vmem:[%s4 + $0x700] sm:$0xff] %vm3174, %v3142
  %3400 = vst.msk [vmem:[%s4 + $0x708] sm:$0xff] %vm3174, %v3143
  %3401 = vst.msk [vmem:[%s4 + $0x710] sm:$0xff] %vm3174, %v3144
  %3402 = vst.msk [vmem:[%s4 + $0x718] sm:$0xff] %vm3174, %v3145
  %3403 = vst.msk [vmem:[%s4 + $0x720] sm:$0xff] %vm3174, %v3146
  %3404 = vst.msk [vmem:[%s4 + $0x728] sm:$0xff] %vm3174, %v3147
  %3405 = vst.msk [vmem:[%s4 + $0x730] sm:$0xff] %vm3174, %v3148
  %3406 = vst.msk [vmem:[%s4 + $0x738] sm:$0xff] %vm3174, %v3149
  %3407 = vst.msk [vmem:[%s4 + $0x740] sm:$0xff] %vm3174, %v3150
  %3408 = vst.msk [vmem:[%s4 + $0x748] sm:$0xff] %vm3174, %v3151
  %3409 = vst.msk [vmem:[%s4 + $0x750] sm:$0xff] %vm3174, %v3152
  %3410 = vst.msk [vmem:[%s4 + $0x758] sm:$0xff] %vm3174, %v3153
  %3411 = vst.msk [vmem:[%s4 + $0x760] sm:$0xff] %vm3174, %v3154
  %3412 = vst.msk [vmem:[%s4 + $0x768] sm:$0xff] %vm3174, %v3155
  %3413 = vst.msk [vmem:[%s4 + $0x770] sm:$0xff] %vm3174, %v3156
  %3414 = vst.msk [vmem:[%s4 + $0x778] sm:$0xff] %vm3174, %v3157
  %3415 = vst.msk [vmem:[%s4 + $0x780] sm:$0xff] %vm3174, %v3158
  %3416 = vst.msk [vmem:[%s4 + $0x788] sm:$0xff] %vm3174, %v3159
  %3417 = vst.msk [vmem:[%s4 + $0x790] sm:$0xff] %vm3174, %v3160
  %3418 = vst.msk [vmem:[%s4 + $0x798] sm:$0xff] %vm3174, %v3161
  %3419 = vst.msk [vmem:[%s4 + $0x7a0] sm:$0xff] %vm3174, %v3162
  %3420 = vst.msk [vmem:[%s4 + $0x7a8] sm:$0xff] %vm3174, %v3163
  %3421 = vst.msk [vmem:[%s4 + $0x7b0] sm:$0xff] %vm3174, %v3164
  %3422 = vst.msk [vmem:[%s4 + $0x7b8] sm:$0xff] %vm3174, %v3165
  %3423 = vst.msk [vmem:[%s4 + $0x7c0] sm:$0xff] %vm3174, %v3166
  %3424 = vst.msk [vmem:[%s4 + $0x7c8] sm:$0xff] %vm3174, %v3167
  %3425 = vst.msk [vmem:[%s4 + $0x7d0] sm:$0xff] %vm3174, %v3168
  %3426 = vst.msk [vmem:[%s4 + $0x7d8] sm:$0xff] %vm3174, %v3169
  %3427 = vst.msk [vmem:[%s4 + $0x7e0] sm:$0xff] %vm3174, %v3170
  %3428 = vst.msk [vmem:[%s4 + $0x7e8] sm:$0xff] %vm3174, %v3171
  %3429 = vst.msk [vmem:[%s4 + $0x7f0] sm:$0xff] %vm3174, %v3172
  %3430 = vst.msk [vmem:[%s4 + $0x7f8] sm:$0xff] %vm3174, %v3173
  // Predicated region
  $region18: #{tpu_custom_call.1} parent=0 // pred_check
    _
  $region19: #{tpu_custom_call.1} parent=0 // pred_check_branch
    %3432 = sbr.rel (0) target = $region21
  $region20: #{tpu_custom_call.1} parent=0 // pred_region
    _
  $region21: #{tpu_custom_call.1} parent=0 // pred_fallthru
    _
  // Predicated region
  $region22: #{tpu_custom_call.1} parent=0 // pred_check
    _
  $region23: #{tpu_custom_call.1} parent=0 // pred_check_branch
    %3434 = sbr.rel (0) target = $region25
  $region24: #{tpu_custom_call.1} parent=0 // pred_region
    _
  $region25: #{tpu_custom_call.1} parent=0 // pred_fallthru
    _

</llo_original>
